<compile_context>
chip_gen: v7x
topology: tpu7x:2x2x1
jax: 0.10.0
libtpu: 0.0.40
codegen_flags: <defaults>
</compile_context>

<pallas_src>
import functools

import jax
import jax.numpy as jnp
from jax.experimental import pallas as pl
from jax.experimental.pallas import tpu as pltpu

RESIDUAL_NUM = 16
ACTION_SIZE = 9
BN_EPS = 1e-5
OUT_W = 128  # lane-dense merged output width: [policy (A) | value (1) | zero pad]


def _batchnorm(h, gamma, beta):
    """Training-mode BatchNorm2d over (N, C, 1, 1) == per-channel batch stats.

    Sum and sum-of-squares share a single sublane (XLU) reduction by placing
    [h | h*h] side-by-side in lanes (valid while 2C <= 128); the gamma/rsqrt
    affine is folded into a single scale/shift.
    """
    n, c = h.shape
    inv_n = 1.0 / n                                  # static python float
    if 2 * c <= 128:
        both = jnp.concatenate([h, h * h], axis=-1)  # (N, 2C), still one vreg wide
        red = jnp.sum(both, axis=0, keepdims=True)   # one reduction for both stats
        s, sq = red[:, :c], red[:, c:]
    else:
        s = jnp.sum(h, axis=0, keepdims=True)
        sq = jnp.sum(h * h, axis=0, keepdims=True)
    mu = s * inv_n
    var = jnp.maximum(sq * inv_n - mu * mu, 0.0)     # guard tiny negative roundoff
    scale = gamma * jax.lax.rsqrt(var + BN_EPS)
    shift = beta - mu * scale
    return h * scale + shift


def net_kernel(x_ref, slab_ref, wr_ref, out_ref, *, action_size):
    """x_ref (B,1), slab_ref (12,W) packed params, wr_ref (C,C), out_ref (B,OUT_W)."""
    A = action_size
    B = x_ref.shape[0]
    C = wr_ref.shape[0]

    x = x_ref[...]                                   # (B, 1)
    slab = slab_ref[...]                             # (12, W), W >= max(C, A)

    w0 = slab[0:1, :C]                               # stem conv center taps
    g0 = slab[1:2, :C]                               # bn0 gamma
    b0 = slab[2:3, :C]                               # bn0 beta
    gr = slab[3:4, :C]                               # residual bn gamma
    br = slab[4:5, :C]                               # residual bn beta
    wh = slab[5:8, :C]                               # (3, C): [policy ch0; policy ch1; value]
    bp = slab[8:9, 0:2]                              # policy conv bias
    bv = slab[8:9, 2:3]                              # value conv bias
    wvl = slab[8:9, 3:4]                             # value Linear weight
    bvl = slab[8:9, 4:5]                             # value Linear bias
    bpl = slab[9:10, 0:A]                            # policy Linear bias
    wpl0 = slab[10:11, 0:A]                          # policy Linear weight col 0
    wpl1 = slab[11:12, 0:A]                          # policy Linear weight col 1

    # ---- stem: conv(1->C, 3x3, pad=1) on 1x1 spatial == x * center taps ----
    h = x * w0                                       # (B, C)
    h = jnp.maximum(_batchnorm(h, g0, b0), 0.0)
    # MaxPool2d(3,3, stride=1, pad=1) with -inf padding on 1x1 spatial: identity.

    # ---- 16 applications of the (weight-shared) residual block, unrolled ----
    wr = wr_ref[...]                                 # (C_in, C_out)

    def res_body(_, h):
        sc = h
        y = jnp.dot(h, wr, preferred_element_type=jnp.float32)
        y = jnp.maximum(_batchnorm(y, gr, br), 0.0)
        y = jnp.dot(y, wr, preferred_element_type=jnp.float32)
        y = _batchnorm(y, gr, br) + sc
        return jnp.maximum(y, 0.0)

    h = jax.lax.fori_loop(0, RESIDUAL_NUM, res_body, h, unroll=True)
    # second MaxPool2d: identity (see above).

    # ---- fused heads: one (B,C)x(C,3) contraction (no transpose needed) ----
    pv = jax.lax.dot_general(h, wh, (((1,), (1,)), ((), ())),
                             preferred_element_type=jnp.float32)   # (B, 3)
    p = jnp.maximum(pv[:, 0:2] + bp, 0.0)            # policy 1x1 conv + ReLU
    v = jnp.maximum(pv[:, 2:3] + bv, 0.0)            # value  1x1 conv + ReLU

    # policy Linear(2 -> A) as two broadcast FMAs on the VPU (no MXU round trip)
    logits = p[:, 0:1] * wpl0 + p[:, 1:2] * wpl1 + bpl              # (B, A)
    m = jnp.max(logits, axis=-1, keepdims=True)
    e = jnp.exp(logits - m)
    probs = e / jnp.sum(e, axis=-1, keepdims=True)   # exact softmax normalization

    # value Linear(1 -> 1) + Tanh
    value = jnp.tanh(v * wvl + bvl)                  # (B, 1)

    # Single lane-dense store: [policy | value | zero pad] -> (B, OUT_W)
    pad = jnp.zeros((B, out_ref.shape[-1] - A - 1), jnp.float32)
    out_ref[...] = jnp.concatenate([probs, value, pad], axis=-1)


def init_params(key, conv_units, action_size):
    C = conv_units
    ks = jax.random.split(key, 12)
    n = lambda k, shp, s=0.1: (s * jax.random.normal(k, shp)).astype(jnp.float32)
    return dict(
        conv0_w=n(ks[0], (C, 1, 3, 3)),                 # Conv2d(1, C, 3, bias=False)
        bn0_gamma=1.0 + n(ks[1], (C,)),                 # BatchNorm2d(C)
        bn0_beta=n(ks[2], (C,), 0.05),
        convr_w=n(ks[3], (C, C, 3, 3)),                 # shared residual Conv2d(C, C, 3)
        bnr_gamma=1.0 + n(ks[4], (C,)),
        bnr_beta=n(ks[5], (C,), 0.05),
        pconv_w=n(ks[6], (2, C, 1, 1)),                 # policy Conv2d(C, 2, 1)
        pconv_b=n(ks[7], (2,)),
        plin_w=n(ks[8], (action_size, 2)),              # policy Linear(2, action_size)
        plin_b=n(ks[9], (action_size,)),
        vconv_w=n(ks[10], (1, C, 1, 1)),                # value Conv2d(C, 1, 1)
        vconv_b=n(ks[11], (1,)),
        vlin_w=jnp.full((1, 1), 0.3, jnp.float32),      # value Linear(1, 1)
        vlin_b=jnp.full((1,), 0.1, jnp.float32),
    )


def pack_params(params, action_size=ACTION_SIZE):
    """One-time parameter packing (hoisted out of the per-call hot path).

    For zero-padded 3x3 convs applied to 1x1 spatial input only the center taps
    contribute.  Returns:
      slab (12, W) f32, W = max(C, action_size):
        rows 0-4 : stem center taps, bn0 gamma/beta, residual bn gamma/beta
        rows 5-7 : head 1x1 convs [policy ch0; policy ch1; value] (each length C)
        row  8   : [policy conv bias(2), value conv bias, value lin w, value lin b]
        rows 9-11: policy Linear bias, weight column 0, weight column 1 (length A)
      wr (C, C) f32: residual conv center taps laid out (C_in, C_out).
    """
    C = params["conv0_w"].shape[0]
    A = action_size
    W = max(C, A)

    slab = jnp.zeros((12, W), jnp.float32)
    slab = slab.at[0, :C].set(params["conv0_w"][:, 0, 1, 1])
    slab = slab.at[1, :C].set(params["bn0_gamma"])
    slab = slab.at[2, :C].set(params["bn0_beta"])
    slab = slab.at[3, :C].set(params["bnr_gamma"])
    slab = slab.at[4, :C].set(params["bnr_beta"])
    slab = slab.at[5:7, :C].set(params["pconv_w"][:, :, 0, 0])
    slab = slab.at[7, :C].set(params["vconv_w"][0, :, 0, 0])
    slab = slab.at[8, 0:2].set(params["pconv_b"])
    slab = slab.at[8, 2].set(params["vconv_b"][0])
    slab = slab.at[8, 3].set(params["vlin_w"][0, 0])
    slab = slab.at[8, 4].set(params["vlin_b"][0])
    slab = slab.at[9, :A].set(params["plin_b"])
    slab = slab.at[10, :A].set(params["plin_w"][:, 0])
    slab = slab.at[11, :A].set(params["plin_w"][:, 1])

    wr = params["convr_w"][:, :, 1, 1].T.astype(jnp.float32)        # (C_in, C_out)
    return slab, wr


@functools.partial(jax.jit, static_argnames=("action_size",))
def net_forward(x_nchw, slab, wr, action_size=ACTION_SIZE):
    B, Cin, H, Wsp = x_nchw.shape
    assert Cin == 1 and H == 1 and Wsp == 1, "heads require 1x1 spatial input"
    A = action_size

    x = x_nchw.reshape(B, 1).astype(jnp.float32)

    vmem = pl.BlockSpec(memory_space=pltpu.MemorySpace.VMEM)
    out = pl.pallas_call(
        functools.partial(net_kernel, action_size=A),
        out_shape=jax.ShapeDtypeStruct((B, OUT_W), jnp.float32),
        in_specs=[vmem, vmem, vmem],
        out_specs=vmem,
    )(x, slab, wr)
    return out[:, :A], out[:, A:A + 1]


if __name__ == "__main__":
    key = jax.random.PRNGKey(0)
    k_x, k_p = jax.random.split(key)

    B, CONV_UNITS = 8, 32
    x = jax.random.normal(k_x, (B, 1, 1, 1), dtype=jnp.float32)  # NCHW, 1x1 spatial
    params = init_params(k_p, CONV_UNITS, ACTION_SIZE)

    # One-time packing, outside the jitted per-call hot path.
    slab, wr = jax.block_until_ready(pack_params(params, ACTION_SIZE))

    policy, value = net_forward(x, slab, wr)
    jax.block_until_ready((policy, value))

    assert policy.shape == (B, ACTION_SIZE) and value.shape == (B, 1)
    assert bool(jnp.all(jnp.isfinite(policy))) and bool(jnp.all(jnp.isfinite(value)))
    # exact divide in the softmax => rows sum to 1 to float precision
    assert bool(jnp.allclose(jnp.sum(policy, axis=1), 1.0, atol=1e-4))
    assert bool(jnp.all(jnp.abs(value) <= 1.0))
    print("KERNEL_OK")
</pallas_src>

<mosaic_0001>
module attributes {stable_mosaic.version = 11 : i64} {
  func.func @net_kernel(%arg0: memref<8x1xf32, #tpu.memory_space<vmem>>, %arg1: memref<12x32xf32, #tpu.memory_space<vmem>>, %arg2: memref<32x32xf32, #tpu.memory_space<vmem>>, %arg3: memref<8x128xf32, #tpu.memory_space<vmem>>) attributes {dimension_semantics = [], scalar_prefetch = 0 : i64, scratch_operands = 0 : i64, tpu.core_type = #tpu.core_type<tc>} {
    %c0 = arith.constant 0 : index
    %c0_0 = arith.constant 0 : index
    %0 = vector.load %arg0[%c0, %c0_0] : memref<8x1xf32, #tpu.memory_space<vmem>>, vector<8x1xf32>
    %c0_1 = arith.constant 0 : index
    %c0_2 = arith.constant 0 : index
    %1 = vector.load %arg1[%c0_1, %c0_2] : memref<12x32xf32, #tpu.memory_space<vmem>>, vector<12x32xf32>
    %2 = vector.extract_strided_slice %1 {offsets = [0, 0], sizes = [1, 32], strides = [1, 1]} : vector<12x32xf32> to vector<1x32xf32>
    %3 = vector.extract_strided_slice %1 {offsets = [1, 0], sizes = [1, 32], strides = [1, 1]} : vector<12x32xf32> to vector<1x32xf32>
    %4 = vector.extract_strided_slice %1 {offsets = [2, 0], sizes = [1, 32], strides = [1, 1]} : vector<12x32xf32> to vector<1x32xf32>
    %5 = vector.extract_strided_slice %1 {offsets = [3, 0], sizes = [1, 32], strides = [1, 1]} : vector<12x32xf32> to vector<1x32xf32>
    %6 = vector.extract_strided_slice %1 {offsets = [4, 0], sizes = [1, 32], strides = [1, 1]} : vector<12x32xf32> to vector<1x32xf32>
    %7 = vector.extract_strided_slice %1 {offsets = [5, 0], sizes = [3, 32], strides = [1, 1]} : vector<12x32xf32> to vector<3x32xf32>
    %8 = vector.extract_strided_slice %1 {offsets = [8, 0], sizes = [1, 2], strides = [1, 1]} : vector<12x32xf32> to vector<1x2xf32>
    %9 = vector.extract_strided_slice %1 {offsets = [8, 2], sizes = [1, 1], strides = [1, 1]} : vector<12x32xf32> to vector<1x1xf32>
    %10 = vector.extract_strided_slice %1 {offsets = [8, 3], sizes = [1, 1], strides = [1, 1]} : vector<12x32xf32> to vector<1x1xf32>
    %11 = vector.extract_strided_slice %1 {offsets = [8, 4], sizes = [1, 1], strides = [1, 1]} : vector<12x32xf32> to vector<1x1xf32>
    %12 = vector.extract_strided_slice %1 {offsets = [9, 0], sizes = [1, 9], strides = [1, 1]} : vector<12x32xf32> to vector<1x9xf32>
    %13 = vector.extract_strided_slice %1 {offsets = [10, 0], sizes = [1, 9], strides = [1, 1]} : vector<12x32xf32> to vector<1x9xf32>
    %14 = vector.extract_strided_slice %1 {offsets = [11, 0], sizes = [1, 9], strides = [1, 1]} : vector<12x32xf32> to vector<1x9xf32>
    %15 = vector.broadcast %0 : vector<8x1xf32> to vector<8x32xf32>
    %16 = vector.broadcast %2 : vector<1x32xf32> to vector<8x32xf32>
    %17 = arith.mulf %15, %16 : vector<8x32xf32>
    %18 = arith.mulf %17, %17 : vector<8x32xf32>
    %19 = tpu.concatenate %17, %18 in 1 : vector<8x32xf32>, vector<8x32xf32> -> vector<8x64xf32>
    %cst = arith.constant dense<0.000000e+00> : vector<64xf32>
    %20 = vector.multi_reduction <add>, %19, %cst [0] : vector<8x64xf32> to vector<64xf32>
    %21 = vector.shape_cast %20 : vector<64xf32> to vector<1x64xf32>
    %22 = vector.extract_strided_slice %21 {offsets = [0, 0], sizes = [1, 32], strides = [1, 1]} : vector<1x64xf32> to vector<1x32xf32>
    %23 = vector.extract_strided_slice %21 {offsets = [0, 32], sizes = [1, 32], strides = [1, 1]} : vector<1x64xf32> to vector<1x32xf32>
    %cst_3 = arith.constant 1.250000e-01 : f32
    %24 = vector.broadcast %cst_3 : f32 to vector<1x32xf32>
    %25 = arith.mulf %22, %24 : vector<1x32xf32>
    %cst_4 = arith.constant 1.250000e-01 : f32
    %26 = vector.broadcast %cst_4 : f32 to vector<1x32xf32>
    %27 = arith.mulf %23, %26 : vector<1x32xf32>
    %28 = arith.mulf %25, %25 : vector<1x32xf32>
    %29 = arith.subf %27, %28 : vector<1x32xf32>
    %cst_5 = arith.constant 0.000000e+00 : f32
    %30 = vector.broadcast %cst_5 : f32 to vector<1x32xf32>
    %31 = arith.maximumf %29, %30 : vector<1x32xf32>
    %cst_6 = arith.constant 9.99999974E-6 : f32
    %32 = vector.broadcast %cst_6 : f32 to vector<1x32xf32>
    %33 = arith.addf %31, %32 : vector<1x32xf32>
    %34 = math.rsqrt %33 : vector<1x32xf32>
    %35 = arith.mulf %3, %34 : vector<1x32xf32>
    %36 = arith.mulf %25, %35 : vector<1x32xf32>
    %37 = arith.subf %4, %36 : vector<1x32xf32>
    %38 = vector.broadcast %35 : vector<1x32xf32> to vector<8x32xf32>
    %39 = arith.mulf %17, %38 : vector<8x32xf32>
    %40 = vector.broadcast %37 : vector<1x32xf32> to vector<8x32xf32>
    %41 = arith.addf %39, %40 : vector<8x32xf32>
    %cst_7 = arith.constant 0.000000e+00 : f32
    %42 = vector.broadcast %cst_7 : f32 to vector<8x32xf32>
    %43 = arith.maximumf %41, %42 : vector<8x32xf32>
    %c0_8 = arith.constant 0 : index
    %c0_9 = arith.constant 0 : index
    %44 = vector.load %arg2[%c0_8, %c0_9] : memref<32x32xf32, #tpu.memory_space<vmem>>, vector<32x32xf32>
    %c0_i32 = arith.constant 0 : i32
    %cst_10 = arith.constant dense<0.000000e+00> : vector<8x32xf32>
    %45 = tpu.matmul %43, %44, %cst_10 {dimension_numbers = #tpu.dot_dimension_numbers<[1], [0], [0], [1], [0, 0, 1, 1], [], []>} : vector<8x32xf32>, vector<32x32xf32>, vector<8x32xf32> -> vector<8x32xf32>
    %46 = arith.mulf %45, %45 : vector<8x32xf32>
    %47 = tpu.concatenate %45, %46 in 1 : vector<8x32xf32>, vector<8x32xf32> -> vector<8x64xf32>
    %cst_11 = arith.constant dense<0.000000e+00> : vector<64xf32>
    %48 = vector.multi_reduction <add>, %47, %cst_11 [0] : vector<8x64xf32> to vector<64xf32>
    %49 = vector.shape_cast %48 : vector<64xf32> to vector<1x64xf32>
    %50 = vector.extract_strided_slice %49 {offsets = [0, 0], sizes = [1, 32], strides = [1, 1]} : vector<1x64xf32> to vector<1x32xf32>
    %51 = vector.extract_strided_slice %49 {offsets = [0, 32], sizes = [1, 32], strides = [1, 1]} : vector<1x64xf32> to vector<1x32xf32>
    %cst_12 = arith.constant 1.250000e-01 : f32
    %52 = vector.broadcast %cst_12 : f32 to vector<1x32xf32>
    %53 = arith.mulf %50, %52 : vector<1x32xf32>
    %cst_13 = arith.constant 1.250000e-01 : f32
    %54 = vector.broadcast %cst_13 : f32 to vector<1x32xf32>
    %55 = arith.mulf %51, %54 : vector<1x32xf32>
    %56 = arith.mulf %53, %53 : vector<1x32xf32>
    %57 = arith.subf %55, %56 : vector<1x32xf32>
    %cst_14 = arith.constant 0.000000e+00 : f32
    %58 = vector.broadcast %cst_14 : f32 to vector<1x32xf32>
    %59 = arith.maximumf %57, %58 : vector<1x32xf32>
    %cst_15 = arith.constant 9.99999974E-6 : f32
    %60 = vector.broadcast %cst_15 : f32 to vector<1x32xf32>
    %61 = arith.addf %59, %60 : vector<1x32xf32>
    %62 = math.rsqrt %61 : vector<1x32xf32>
    %63 = arith.mulf %5, %62 : vector<1x32xf32>
    %64 = arith.mulf %53, %63 : vector<1x32xf32>
    %65 = arith.subf %6, %64 : vector<1x32xf32>
    %66 = vector.broadcast %63 : vector<1x32xf32> to vector<8x32xf32>
    %67 = arith.mulf %45, %66 : vector<8x32xf32>
    %68 = vector.broadcast %65 : vector<1x32xf32> to vector<8x32xf32>
    %69 = arith.addf %67, %68 : vector<8x32xf32>
    %cst_16 = arith.constant 0.000000e+00 : f32
    %70 = vector.broadcast %cst_16 : f32 to vector<8x32xf32>
    %71 = arith.maximumf %69, %70 : vector<8x32xf32>
    %cst_17 = arith.constant dense<0.000000e+00> : vector<8x32xf32>
    %72 = tpu.matmul %71, %44, %cst_17 {dimension_numbers = #tpu.dot_dimension_numbers<[1], [0], [0], [1], [0, 0, 1, 1], [], []>} : vector<8x32xf32>, vector<32x32xf32>, vector<8x32xf32> -> vector<8x32xf32>
    %73 = arith.mulf %72, %72 : vector<8x32xf32>
    %74 = tpu.concatenate %72, %73 in 1 : vector<8x32xf32>, vector<8x32xf32> -> vector<8x64xf32>
    %cst_18 = arith.constant dense<0.000000e+00> : vector<64xf32>
    %75 = vector.multi_reduction <add>, %74, %cst_18 [0] : vector<8x64xf32> to vector<64xf32>
    %76 = vector.shape_cast %75 : vector<64xf32> to vector<1x64xf32>
    %77 = vector.extract_strided_slice %76 {offsets = [0, 0], sizes = [1, 32], strides = [1, 1]} : vector<1x64xf32> to vector<1x32xf32>
    %78 = vector.extract_strided_slice %76 {offsets = [0, 32], sizes = [1, 32], strides = [1, 1]} : vector<1x64xf32> to vector<1x32xf32>
    %cst_19 = arith.constant 1.250000e-01 : f32
    %79 = vector.broadcast %cst_19 : f32 to vector<1x32xf32>
    %80 = arith.mulf %77, %79 : vector<1x32xf32>
    %cst_20 = arith.constant 1.250000e-01 : f32
    %81 = vector.broadcast %cst_20 : f32 to vector<1x32xf32>
    %82 = arith.mulf %78, %81 : vector<1x32xf32>
    %83 = arith.mulf %80, %80 : vector<1x32xf32>
    %84 = arith.subf %82, %83 : vector<1x32xf32>
    %cst_21 = arith.constant 0.000000e+00 : f32
    %85 = vector.broadcast %cst_21 : f32 to vector<1x32xf32>
    %86 = arith.maximumf %84, %85 : vector<1x32xf32>
    %cst_22 = arith.constant 9.99999974E-6 : f32
    %87 = vector.broadcast %cst_22 : f32 to vector<1x32xf32>
    %88 = arith.addf %86, %87 : vector<1x32xf32>
    %89 = math.rsqrt %88 : vector<1x32xf32>
    %90 = arith.mulf %5, %89 : vector<1x32xf32>
    %91 = arith.mulf %80, %90 : vector<1x32xf32>
    %92 = arith.subf %6, %91 : vector<1x32xf32>
    %93 = vector.broadcast %90 : vector<1x32xf32> to vector<8x32xf32>
    %94 = arith.mulf %72, %93 : vector<8x32xf32>
    %95 = vector.broadcast %92 : vector<1x32xf32> to vector<8x32xf32>
    %96 = arith.addf %94, %95 : vector<8x32xf32>
    %97 = arith.addf %96, %43 : vector<8x32xf32>
    %cst_23 = arith.constant 0.000000e+00 : f32
    %98 = vector.broadcast %cst_23 : f32 to vector<8x32xf32>
    %99 = arith.maximumf %97, %98 : vector<8x32xf32>
    %c1_i32 = arith.constant 1 : i32
    %cst_24 = arith.constant dense<0.000000e+00> : vector<8x32xf32>
    %100 = tpu.matmul %99, %44, %cst_24 {dimension_numbers = #tpu.dot_dimension_numbers<[1], [0], [0], [1], [0, 0, 1, 1], [], []>} : vector<8x32xf32>, vector<32x32xf32>, vector<8x32xf32> -> vector<8x32xf32>
    %101 = arith.mulf %100, %100 : vector<8x32xf32>
    %102 = tpu.concatenate %100, %101 in 1 : vector<8x32xf32>, vector<8x32xf32> -> vector<8x64xf32>
    %cst_25 = arith.constant dense<0.000000e+00> : vector<64xf32>
    %103 = vector.multi_reduction <add>, %102, %cst_25 [0] : vector<8x64xf32> to vector<64xf32>
    %104 = vector.shape_cast %103 : vector<64xf32> to vector<1x64xf32>
    %105 = vector.extract_strided_slice %104 {offsets = [0, 0], sizes = [1, 32], strides = [1, 1]} : vector<1x64xf32> to vector<1x32xf32>
    %106 = vector.extract_strided_slice %104 {offsets = [0, 32], sizes = [1, 32], strides = [1, 1]} : vector<1x64xf32> to vector<1x32xf32>
    %cst_26 = arith.constant 1.250000e-01 : f32
    %107 = vector.broadcast %cst_26 : f32 to vector<1x32xf32>
    %108 = arith.mulf %105, %107 : vector<1x32xf32>
    %cst_27 = arith.constant 1.250000e-01 : f32
    %109 = vector.broadcast %cst_27 : f32 to vector<1x32xf32>
    %110 = arith.mulf %106, %109 : vector<1x32xf32>
    %111 = arith.mulf %108, %108 : vector<1x32xf32>
    %112 = arith.subf %110, %111 : vector<1x32xf32>
    %cst_28 = arith.constant 0.000000e+00 : f32
    %113 = vector.broadcast %cst_28 : f32 to vector<1x32xf32>
    %114 = arith.maximumf %112, %113 : vector<1x32xf32>
    %cst_29 = arith.constant 9.99999974E-6 : f32
    %115 = vector.broadcast %cst_29 : f32 to vector<1x32xf32>
    %116 = arith.addf %114, %115 : vector<1x32xf32>
    %117 = math.rsqrt %116 : vector<1x32xf32>
    %118 = arith.mulf %5, %117 : vector<1x32xf32>
    %119 = arith.mulf %108, %118 : vector<1x32xf32>
    %120 = arith.subf %6, %119 : vector<1x32xf32>
    %121 = vector.broadcast %118 : vector<1x32xf32> to vector<8x32xf32>
    %122 = arith.mulf %100, %121 : vector<8x32xf32>
    %123 = vector.broadcast %120 : vector<1x32xf32> to vector<8x32xf32>
    %124 = arith.addf %122, %123 : vector<8x32xf32>
    %cst_30 = arith.constant 0.000000e+00 : f32
    %125 = vector.broadcast %cst_30 : f32 to vector<8x32xf32>
    %126 = arith.maximumf %124, %125 : vector<8x32xf32>
    %cst_31 = arith.constant dense<0.000000e+00> : vector<8x32xf32>
    %127 = tpu.matmul %126, %44, %cst_31 {dimension_numbers = #tpu.dot_dimension_numbers<[1], [0], [0], [1], [0, 0, 1, 1], [], []>} : vector<8x32xf32>, vector<32x32xf32>, vector<8x32xf32> -> vector<8x32xf32>
    %128 = arith.mulf %127, %127 : vector<8x32xf32>
    %129 = tpu.concatenate %127, %128 in 1 : vector<8x32xf32>, vector<8x32xf32> -> vector<8x64xf32>
    %cst_32 = arith.constant dense<0.000000e+00> : vector<64xf32>
    %130 = vector.multi_reduction <add>, %129, %cst_32 [0] : vector<8x64xf32> to vector<64xf32>
    %131 = vector.shape_cast %130 : vector<64xf32> to vector<1x64xf32>
    %132 = vector.extract_strided_slice %131 {offsets = [0, 0], sizes = [1, 32], strides = [1, 1]} : vector<1x64xf32> to vector<1x32xf32>
    %133 = vector.extract_strided_slice %131 {offsets = [0, 32], sizes = [1, 32], strides = [1, 1]} : vector<1x64xf32> to vector<1x32xf32>
    %cst_33 = arith.constant 1.250000e-01 : f32
    %134 = vector.broadcast %cst_33 : f32 to vector<1x32xf32>
    %135 = arith.mulf %132, %134 : vector<1x32xf32>
    %cst_34 = arith.constant 1.250000e-01 : f32
    %136 = vector.broadcast %cst_34 : f32 to vector<1x32xf32>
    %137 = arith.mulf %133, %136 : vector<1x32xf32>
    %138 = arith.mulf %135, %135 : vector<1x32xf32>
    %139 = arith.subf %137, %138 : vector<1x32xf32>
    %cst_35 = arith.constant 0.000000e+00 : f32
    %140 = vector.broadcast %cst_35 : f32 to vector<1x32xf32>
    %141 = arith.maximumf %139, %140 : vector<1x32xf32>
    %cst_36 = arith.constant 9.99999974E-6 : f32
    %142 = vector.broadcast %cst_36 : f32 to vector<1x32xf32>
    %143 = arith.addf %141, %142 : vector<1x32xf32>
    %144 = math.rsqrt %143 : vector<1x32xf32>
    %145 = arith.mulf %5, %144 : vector<1x32xf32>
    %146 = arith.mulf %135, %145 : vector<1x32xf32>
    %147 = arith.subf %6, %146 : vector<1x32xf32>
    %148 = vector.broadcast %145 : vector<1x32xf32> to vector<8x32xf32>
    %149 = arith.mulf %127, %148 : vector<8x32xf32>
    %150 = vector.broadcast %147 : vector<1x32xf32> to vector<8x32xf32>
    %151 = arith.addf %149, %150 : vector<8x32xf32>
    %152 = arith.addf %151, %99 : vector<8x32xf32>
    %cst_37 = arith.constant 0.000000e+00 : f32
    %153 = vector.broadcast %cst_37 : f32 to vector<8x32xf32>
    %154 = arith.maximumf %152, %153 : vector<8x32xf32>
    %c2_i32 = arith.constant 2 : i32
    %cst_38 = arith.constant dense<0.000000e+00> : vector<8x32xf32>
    %155 = tpu.matmul %154, %44, %cst_38 {dimension_numbers = #tpu.dot_dimension_numbers<[1], [0], [0], [1], [0, 0, 1, 1], [], []>} : vector<8x32xf32>, vector<32x32xf32>, vector<8x32xf32> -> vector<8x32xf32>
    %156 = arith.mulf %155, %155 : vector<8x32xf32>
    %157 = tpu.concatenate %155, %156 in 1 : vector<8x32xf32>, vector<8x32xf32> -> vector<8x64xf32>
    %cst_39 = arith.constant dense<0.000000e+00> : vector<64xf32>
    %158 = vector.multi_reduction <add>, %157, %cst_39 [0] : vector<8x64xf32> to vector<64xf32>
    %159 = vector.shape_cast %158 : vector<64xf32> to vector<1x64xf32>
    %160 = vector.extract_strided_slice %159 {offsets = [0, 0], sizes = [1, 32], strides = [1, 1]} : vector<1x64xf32> to vector<1x32xf32>
    %161 = vector.extract_strided_slice %159 {offsets = [0, 32], sizes = [1, 32], strides = [1, 1]} : vector<1x64xf32> to vector<1x32xf32>
    %cst_40 = arith.constant 1.250000e-01 : f32
    %162 = vector.broadcast %cst_40 : f32 to vector<1x32xf32>
    %163 = arith.mulf %160, %162 : vector<1x32xf32>
    %cst_41 = arith.constant 1.250000e-01 : f32
    %164 = vector.broadcast %cst_41 : f32 to vector<1x32xf32>
    %165 = arith.mulf %161, %164 : vector<1x32xf32>
    %166 = arith.mulf %163, %163 : vector<1x32xf32>
    %167 = arith.subf %165, %166 : vector<1x32xf32>
    %cst_42 = arith.constant 0.000000e+00 : f32
    %168 = vector.broadcast %cst_42 : f32 to vector<1x32xf32>
    %169 = arith.maximumf %167, %168 : vector<1x32xf32>
    %cst_43 = arith.constant 9.99999974E-6 : f32
    %170 = vector.broadcast %cst_43 : f32 to vector<1x32xf32>
    %171 = arith.addf %169, %170 : vector<1x32xf32>
    %172 = math.rsqrt %171 : vector<1x32xf32>
    %173 = arith.mulf %5, %172 : vector<1x32xf32>
    %174 = arith.mulf %163, %173 : vector<1x32xf32>
    %175 = arith.subf %6, %174 : vector<1x32xf32>
    %176 = vector.broadcast %173 : vector<1x32xf32> to vector<8x32xf32>
    %177 = arith.mulf %155, %176 : vector<8x32xf32>
    %178 = vector.broadcast %175 : vector<1x32xf32> to vector<8x32xf32>
    %179 = arith.addf %177, %178 : vector<8x32xf32>
    %cst_44 = arith.constant 0.000000e+00 : f32
    %180 = vector.broadcast %cst_44 : f32 to vector<8x32xf32>
    %181 = arith.maximumf %179, %180 : vector<8x32xf32>
    %cst_45 = arith.constant dense<0.000000e+00> : vector<8x32xf32>
    %182 = tpu.matmul %181, %44, %cst_45 {dimension_numbers = #tpu.dot_dimension_numbers<[1], [0], [0], [1], [0, 0, 1, 1], [], []>} : vector<8x32xf32>, vector<32x32xf32>, vector<8x32xf32> -> vector<8x32xf32>
    %183 = arith.mulf %182, %182 : vector<8x32xf32>
    %184 = tpu.concatenate %182, %183 in 1 : vector<8x32xf32>, vector<8x32xf32> -> vector<8x64xf32>
    %cst_46 = arith.constant dense<0.000000e+00> : vector<64xf32>
    %185 = vector.multi_reduction <add>, %184, %cst_46 [0] : vector<8x64xf32> to vector<64xf32>
    %186 = vector.shape_cast %185 : vector<64xf32> to vector<1x64xf32>
    %187 = vector.extract_strided_slice %186 {offsets = [0, 0], sizes = [1, 32], strides = [1, 1]} : vector<1x64xf32> to vector<1x32xf32>
    %188 = vector.extract_strided_slice %186 {offsets = [0, 32], sizes = [1, 32], strides = [1, 1]} : vector<1x64xf32> to vector<1x32xf32>
    %cst_47 = arith.constant 1.250000e-01 : f32
    %189 = vector.broadcast %cst_47 : f32 to vector<1x32xf32>
    %190 = arith.mulf %187, %189 : vector<1x32xf32>
    %cst_48 = arith.constant 1.250000e-01 : f32
    %191 = vector.broadcast %cst_48 : f32 to vector<1x32xf32>
    %192 = arith.mulf %188, %191 : vector<1x32xf32>
    %193 = arith.mulf %190, %190 : vector<1x32xf32>
    %194 = arith.subf %192, %193 : vector<1x32xf32>
    %cst_49 = arith.constant 0.000000e+00 : f32
    %195 = vector.broadcast %cst_49 : f32 to vector<1x32xf32>
    %196 = arith.maximumf %194, %195 : vector<1x32xf32>
    %cst_50 = arith.constant 9.99999974E-6 : f32
    %197 = vector.broadcast %cst_50 : f32 to vector<1x32xf32>
    %198 = arith.addf %196, %197 : vector<1x32xf32>
    %199 = math.rsqrt %198 : vector<1x32xf32>
    %200 = arith.mulf %5, %199 : vector<1x32xf32>
    %201 = arith.mulf %190, %200 : vector<1x32xf32>
    %202 = arith.subf %6, %201 : vector<1x32xf32>
    %203 = vector.broadcast %200 : vector<1x32xf32> to vector<8x32xf32>
    %204 = arith.mulf %182, %203 : vector<8x32xf32>
    %205 = vector.broadcast %202 : vector<1x32xf32> to vector<8x32xf32>
    %206 = arith.addf %204, %205 : vector<8x32xf32>
    %207 = arith.addf %206, %154 : vector<8x32xf32>
    %cst_51 = arith.constant 0.000000e+00 : f32
    %208 = vector.broadcast %cst_51 : f32 to vector<8x32xf32>
    %209 = arith.maximumf %207, %208 : vector<8x32xf32>
    %c3_i32 = arith.constant 3 : i32
    %cst_52 = arith.constant dense<0.000000e+00> : vector<8x32xf32>
    %210 = tpu.matmul %209, %44, %cst_52 {dimension_numbers = #tpu.dot_dimension_numbers<[1], [0], [0], [1], [0, 0, 1, 1], [], []>} : vector<8x32xf32>, vector<32x32xf32>, vector<8x32xf32> -> vector<8x32xf32>
    %211 = arith.mulf %210, %210 : vector<8x32xf32>
    %212 = tpu.concatenate %210, %211 in 1 : vector<8x32xf32>, vector<8x32xf32> -> vector<8x64xf32>
    %cst_53 = arith.constant dense<0.000000e+00> : vector<64xf32>
    %213 = vector.multi_reduction <add>, %212, %cst_53 [0] : vector<8x64xf32> to vector<64xf32>
    %214 = vector.shape_cast %213 : vector<64xf32> to vector<1x64xf32>
    %215 = vector.extract_strided_slice %214 {offsets = [0, 0], sizes = [1, 32], strides = [1, 1]} : vector<1x64xf32> to vector<1x32xf32>
    %216 = vector.extract_strided_slice %214 {offsets = [0, 32], sizes = [1, 32], strides = [1, 1]} : vector<1x64xf32> to vector<1x32xf32>
    %cst_54 = arith.constant 1.250000e-01 : f32
    %217 = vector.broadcast %cst_54 : f32 to vector<1x32xf32>
    %218 = arith.mulf %215, %217 : vector<1x32xf32>
    %cst_55 = arith.constant 1.250000e-01 : f32
    %219 = vector.broadcast %cst_55 : f32 to vector<1x32xf32>
    %220 = arith.mulf %216, %219 : vector<1x32xf32>
    %221 = arith.mulf %218, %218 : vector<1x32xf32>
    %222 = arith.subf %220, %221 : vector<1x32xf32>
    %cst_56 = arith.constant 0.000000e+00 : f32
    %223 = vector.broadcast %cst_56 : f32 to vector<1x32xf32>
    %224 = arith.maximumf %222, %223 : vector<1x32xf32>
    %cst_57 = arith.constant 9.99999974E-6 : f32
    %225 = vector.broadcast %cst_57 : f32 to vector<1x32xf32>
    %226 = arith.addf %224, %225 : vector<1x32xf32>
    %227 = math.rsqrt %226 : vector<1x32xf32>
    %228 = arith.mulf %5, %227 : vector<1x32xf32>
    %229 = arith.mulf %218, %228 : vector<1x32xf32>
    %230 = arith.subf %6, %229 : vector<1x32xf32>
    %231 = vector.broadcast %228 : vector<1x32xf32> to vector<8x32xf32>
    %232 = arith.mulf %210, %231 : vector<8x32xf32>
    %233 = vector.broadcast %230 : vector<1x32xf32> to vector<8x32xf32>
    %234 = arith.addf %232, %233 : vector<8x32xf32>
    %cst_58 = arith.constant 0.000000e+00 : f32
    %235 = vector.broadcast %cst_58 : f32 to vector<8x32xf32>
    %236 = arith.maximumf %234, %235 : vector<8x32xf32>
    %cst_59 = arith.constant dense<0.000000e+00> : vector<8x32xf32>
    %237 = tpu.matmul %236, %44, %cst_59 {dimension_numbers = #tpu.dot_dimension_numbers<[1], [0], [0], [1], [0, 0, 1, 1], [], []>} : vector<8x32xf32>, vector<32x32xf32>, vector<8x32xf32> -> vector<8x32xf32>
    %238 = arith.mulf %237, %237 : vector<8x32xf32>
    %239 = tpu.concatenate %237, %238 in 1 : vector<8x32xf32>, vector<8x32xf32> -> vector<8x64xf32>
    %cst_60 = arith.constant dense<0.000000e+00> : vector<64xf32>
    %240 = vector.multi_reduction <add>, %239, %cst_60 [0] : vector<8x64xf32> to vector<64xf32>
    %241 = vector.shape_cast %240 : vector<64xf32> to vector<1x64xf32>
    %242 = vector.extract_strided_slice %241 {offsets = [0, 0], sizes = [1, 32], strides = [1, 1]} : vector<1x64xf32> to vector<1x32xf32>
    %243 = vector.extract_strided_slice %241 {offsets = [0, 32], sizes = [1, 32], strides = [1, 1]} : vector<1x64xf32> to vector<1x32xf32>
    %cst_61 = arith.constant 1.250000e-01 : f32
    %244 = vector.broadcast %cst_61 : f32 to vector<1x32xf32>
    %245 = arith.mulf %242, %244 : vector<1x32xf32>
    %cst_62 = arith.constant 1.250000e-01 : f32
    %246 = vector.broadcast %cst_62 : f32 to vector<1x32xf32>
    %247 = arith.mulf %243, %246 : vector<1x32xf32>
    %248 = arith.mulf %245, %245 : vector<1x32xf32>
    %249 = arith.subf %247, %248 : vector<1x32xf32>
    %cst_63 = arith.constant 0.000000e+00 : f32
    %250 = vector.broadcast %cst_63 : f32 to vector<1x32xf32>
    %251 = arith.maximumf %249, %250 : vector<1x32xf32>
    %cst_64 = arith.constant 9.99999974E-6 : f32
    %252 = vector.broadcast %cst_64 : f32 to vector<1x32xf32>
    %253 = arith.addf %251, %252 : vector<1x32xf32>
    %254 = math.rsqrt %253 : vector<1x32xf32>
    %255 = arith.mulf %5, %254 : vector<1x32xf32>
    %256 = arith.mulf %245, %255 : vector<1x32xf32>
    %257 = arith.subf %6, %256 : vector<1x32xf32>
    %258 = vector.broadcast %255 : vector<1x32xf32> to vector<8x32xf32>
    %259 = arith.mulf %237, %258 : vector<8x32xf32>
    %260 = vector.broadcast %257 : vector<1x32xf32> to vector<8x32xf32>
    %261 = arith.addf %259, %260 : vector<8x32xf32>
    %262 = arith.addf %261, %209 : vector<8x32xf32>
    %cst_65 = arith.constant 0.000000e+00 : f32
    %263 = vector.broadcast %cst_65 : f32 to vector<8x32xf32>
    %264 = arith.maximumf %262, %263 : vector<8x32xf32>
    %c4_i32 = arith.constant 4 : i32
    %cst_66 = arith.constant dense<0.000000e+00> : vector<8x32xf32>
    %265 = tpu.matmul %264, %44, %cst_66 {dimension_numbers = #tpu.dot_dimension_numbers<[1], [0], [0], [1], [0, 0, 1, 1], [], []>} : vector<8x32xf32>, vector<32x32xf32>, vector<8x32xf32> -> vector<8x32xf32>
    %266 = arith.mulf %265, %265 : vector<8x32xf32>
    %267 = tpu.concatenate %265, %266 in 1 : vector<8x32xf32>, vector<8x32xf32> -> vector<8x64xf32>
    %cst_67 = arith.constant dense<0.000000e+00> : vector<64xf32>
    %268 = vector.multi_reduction <add>, %267, %cst_67 [0] : vector<8x64xf32> to vector<64xf32>
    %269 = vector.shape_cast %268 : vector<64xf32> to vector<1x64xf32>
    %270 = vector.extract_strided_slice %269 {offsets = [0, 0], sizes = [1, 32], strides = [1, 1]} : vector<1x64xf32> to vector<1x32xf32>
    %271 = vector.extract_strided_slice %269 {offsets = [0, 32], sizes = [1, 32], strides = [1, 1]} : vector<1x64xf32> to vector<1x32xf32>
    %cst_68 = arith.constant 1.250000e-01 : f32
    %272 = vector.broadcast %cst_68 : f32 to vector<1x32xf32>
    %273 = arith.mulf %270, %272 : vector<1x32xf32>
    %cst_69 = arith.constant 1.250000e-01 : f32
    %274 = vector.broadcast %cst_69 : f32 to vector<1x32xf32>
    %275 = arith.mulf %271, %274 : vector<1x32xf32>
    %276 = arith.mulf %273, %273 : vector<1x32xf32>
    %277 = arith.subf %275, %276 : vector<1x32xf32>
    %cst_70 = arith.constant 0.000000e+00 : f32
    %278 = vector.broadcast %cst_70 : f32 to vector<1x32xf32>
    %279 = arith.maximumf %277, %278 : vector<1x32xf32>
    %cst_71 = arith.constant 9.99999974E-6 : f32
    %280 = vector.broadcast %cst_71 : f32 to vector<1x32xf32>
    %281 = arith.addf %279, %280 : vector<1x32xf32>
    %282 = math.rsqrt %281 : vector<1x32xf32>
    %283 = arith.mulf %5, %282 : vector<1x32xf32>
    %284 = arith.mulf %273, %283 : vector<1x32xf32>
    %285 = arith.subf %6, %284 : vector<1x32xf32>
    %286 = vector.broadcast %283 : vector<1x32xf32> to vector<8x32xf32>
    %287 = arith.mulf %265, %286 : vector<8x32xf32>
    %288 = vector.broadcast %285 : vector<1x32xf32> to vector<8x32xf32>
    %289 = arith.addf %287, %288 : vector<8x32xf32>
    %cst_72 = arith.constant 0.000000e+00 : f32
    %290 = vector.broadcast %cst_72 : f32 to vector<8x32xf32>
    %291 = arith.maximumf %289, %290 : vector<8x32xf32>
    %cst_73 = arith.constant dense<0.000000e+00> : vector<8x32xf32>
    %292 = tpu.matmul %291, %44, %cst_73 {dimension_numbers = #tpu.dot_dimension_numbers<[1], [0], [0], [1], [0, 0, 1, 1], [], []>} : vector<8x32xf32>, vector<32x32xf32>, vector<8x32xf32> -> vector<8x32xf32>
    %293 = arith.mulf %292, %292 : vector<8x32xf32>
    %294 = tpu.concatenate %292, %293 in 1 : vector<8x32xf32>, vector<8x32xf32> -> vector<8x64xf32>
    %cst_74 = arith.constant dense<0.000000e+00> : vector<64xf32>
    %295 = vector.multi_reduction <add>, %294, %cst_74 [0] : vector<8x64xf32> to vector<64xf32>
    %296 = vector.shape_cast %295 : vector<64xf32> to vector<1x64xf32>
    %297 = vector.extract_strided_slice %296 {offsets = [0, 0], sizes = [1, 32], strides = [1, 1]} : vector<1x64xf32> to vector<1x32xf32>
    %298 = vector.extract_strided_slice %296 {offsets = [0, 32], sizes = [1, 32], strides = [1, 1]} : vector<1x64xf32> to vector<1x32xf32>
    %cst_75 = arith.constant 1.250000e-01 : f32
    %299 = vector.broadcast %cst_75 : f32 to vector<1x32xf32>
    %300 = arith.mulf %297, %299 : vector<1x32xf32>
    %cst_76 = arith.constant 1.250000e-01 : f32
    %301 = vector.broadcast %cst_76 : f32 to vector<1x32xf32>
    %302 = arith.mulf %298, %301 : vector<1x32xf32>
    %303 = arith.mulf %300, %300 : vector<1x32xf32>
    %304 = arith.subf %302, %303 : vector<1x32xf32>
    %cst_77 = arith.constant 0.000000e+00 : f32
    %305 = vector.broadcast %cst_77 : f32 to vector<1x32xf32>
    %306 = arith.maximumf %304, %305 : vector<1x32xf32>
    %cst_78 = arith.constant 9.99999974E-6 : f32
    %307 = vector.broadcast %cst_78 : f32 to vector<1x32xf32>
    %308 = arith.addf %306, %307 : vector<1x32xf32>
    %309 = math.rsqrt %308 : vector<1x32xf32>
    %310 = arith.mulf %5, %309 : vector<1x32xf32>
    %311 = arith.mulf %300, %310 : vector<1x32xf32>
    %312 = arith.subf %6, %311 : vector<1x32xf32>
    %313 = vector.broadcast %310 : vector<1x32xf32> to vector<8x32xf32>
    %314 = arith.mulf %292, %313 : vector<8x32xf32>
    %315 = vector.broadcast %312 : vector<1x32xf32> to vector<8x32xf32>
    %316 = arith.addf %314, %315 : vector<8x32xf32>
    %317 = arith.addf %316, %264 : vector<8x32xf32>
    %cst_79 = arith.constant 0.000000e+00 : f32
    %318 = vector.broadcast %cst_79 : f32 to vector<8x32xf32>
    %319 = arith.maximumf %317, %318 : vector<8x32xf32>
    %c5_i32 = arith.constant 5 : i32
    %cst_80 = arith.constant dense<0.000000e+00> : vector<8x32xf32>
    %320 = tpu.matmul %319, %44, %cst_80 {dimension_numbers = #tpu.dot_dimension_numbers<[1], [0], [0], [1], [0, 0, 1, 1], [], []>} : vector<8x32xf32>, vector<32x32xf32>, vector<8x32xf32> -> vector<8x32xf32>
    %321 = arith.mulf %320, %320 : vector<8x32xf32>
    %322 = tpu.concatenate %320, %321 in 1 : vector<8x32xf32>, vector<8x32xf32> -> vector<8x64xf32>
    %cst_81 = arith.constant dense<0.000000e+00> : vector<64xf32>
    %323 = vector.multi_reduction <add>, %322, %cst_81 [0] : vector<8x64xf32> to vector<64xf32>
    %324 = vector.shape_cast %323 : vector<64xf32> to vector<1x64xf32>
    %325 = vector.extract_strided_slice %324 {offsets = [0, 0], sizes = [1, 32], strides = [1, 1]} : vector<1x64xf32> to vector<1x32xf32>
    %326 = vector.extract_strided_slice %324 {offsets = [0, 32], sizes = [1, 32], strides = [1, 1]} : vector<1x64xf32> to vector<1x32xf32>
    %cst_82 = arith.constant 1.250000e-01 : f32
    %327 = vector.broadcast %cst_82 : f32 to vector<1x32xf32>
    %328 = arith.mulf %325, %327 : vector<1x32xf32>
    %cst_83 = arith.constant 1.250000e-01 : f32
    %329 = vector.broadcast %cst_83 : f32 to vector<1x32xf32>
    %330 = arith.mulf %326, %329 : vector<1x32xf32>
    %331 = arith.mulf %328, %328 : vector<1x32xf32>
    %332 = arith.subf %330, %331 : vector<1x32xf32>
    %cst_84 = arith.constant 0.000000e+00 : f32
    %333 = vector.broadcast %cst_84 : f32 to vector<1x32xf32>
    %334 = arith.maximumf %332, %333 : vector<1x32xf32>
    %cst_85 = arith.constant 9.99999974E-6 : f32
    %335 = vector.broadcast %cst_85 : f32 to vector<1x32xf32>
    %336 = arith.addf %334, %335 : vector<1x32xf32>
    %337 = math.rsqrt %336 : vector<1x32xf32>
    %338 = arith.mulf %5, %337 : vector<1x32xf32>
    %339 = arith.mulf %328, %338 : vector<1x32xf32>
    %340 = arith.subf %6, %339 : vector<1x32xf32>
    %341 = vector.broadcast %338 : vector<1x32xf32> to vector<8x32xf32>
    %342 = arith.mulf %320, %341 : vector<8x32xf32>
    %343 = vector.broadcast %340 : vector<1x32xf32> to vector<8x32xf32>
    %344 = arith.addf %342, %343 : vector<8x32xf32>
    %cst_86 = arith.constant 0.000000e+00 : f32
    %345 = vector.broadcast %cst_86 : f32 to vector<8x32xf32>
    %346 = arith.maximumf %344, %345 : vector<8x32xf32>
    %cst_87 = arith.constant dense<0.000000e+00> : vector<8x32xf32>
    %347 = tpu.matmul %346, %44, %cst_87 {dimension_numbers = #tpu.dot_dimension_numbers<[1], [0], [0], [1], [0, 0, 1, 1], [], []>} : vector<8x32xf32>, vector<32x32xf32>, vector<8x32xf32> -> vector<8x32xf32>
    %348 = arith.mulf %347, %347 : vector<8x32xf32>
    %349 = tpu.concatenate %347, %348 in 1 : vector<8x32xf32>, vector<8x32xf32> -> vector<8x64xf32>
    %cst_88 = arith.constant dense<0.000000e+00> : vector<64xf32>
    %350 = vector.multi_reduction <add>, %349, %cst_88 [0] : vector<8x64xf32> to vector<64xf32>
    %351 = vector.shape_cast %350 : vector<64xf32> to vector<1x64xf32>
    %352 = vector.extract_strided_slice %351 {offsets = [0, 0], sizes = [1, 32], strides = [1, 1]} : vector<1x64xf32> to vector<1x32xf32>
    %353 = vector.extract_strided_slice %351 {offsets = [0, 32], sizes = [1, 32], strides = [1, 1]} : vector<1x64xf32> to vector<1x32xf32>
    %cst_89 = arith.constant 1.250000e-01 : f32
    %354 = vector.broadcast %cst_89 : f32 to vector<1x32xf32>
    %355 = arith.mulf %352, %354 : vector<1x32xf32>
    %cst_90 = arith.constant 1.250000e-01 : f32
    %356 = vector.broadcast %cst_90 : f32 to vector<1x32xf32>
    %357 = arith.mulf %353, %356 : vector<1x32xf32>
    %358 = arith.mulf %355, %355 : vector<1x32xf32>
    %359 = arith.subf %357, %358 : vector<1x32xf32>
    %cst_91 = arith.constant 0.000000e+00 : f32
    %360 = vector.broadcast %cst_91 : f32 to vector<1x32xf32>
    %361 = arith.maximumf %359, %360 : vector<1x32xf32>
    %cst_92 = arith.constant 9.99999974E-6 : f32
    %362 = vector.broadcast %cst_92 : f32 to vector<1x32xf32>
    %363 = arith.addf %361, %362 : vector<1x32xf32>
    %364 = math.rsqrt %363 : vector<1x32xf32>
    %365 = arith.mulf %5, %364 : vector<1x32xf32>
    %366 = arith.mulf %355, %365 : vector<1x32xf32>
    %367 = arith.subf %6, %366 : vector<1x32xf32>
    %368 = vector.broadcast %365 : vector<1x32xf32> to vector<8x32xf32>
    %369 = arith.mulf %347, %368 : vector<8x32xf32>
    %370 = vector.broadcast %367 : vector<1x32xf32> to vector<8x32xf32>
    %371 = arith.addf %369, %370 : vector<8x32xf32>
    %372 = arith.addf %371, %319 : vector<8x32xf32>
    %cst_93 = arith.constant 0.000000e+00 : f32
    %373 = vector.broadcast %cst_93 : f32 to vector<8x32xf32>
    %374 = arith.maximumf %372, %373 : vector<8x32xf32>
    %c6_i32 = arith.constant 6 : i32
    %cst_94 = arith.constant dense<0.000000e+00> : vector<8x32xf32>
    %375 = tpu.matmul %374, %44, %cst_94 {dimension_numbers = #tpu.dot_dimension_numbers<[1], [0], [0], [1], [0, 0, 1, 1], [], []>} : vector<8x32xf32>, vector<32x32xf32>, vector<8x32xf32> -> vector<8x32xf32>
    %376 = arith.mulf %375, %375 : vector<8x32xf32>
    %377 = tpu.concatenate %375, %376 in 1 : vector<8x32xf32>, vector<8x32xf32> -> vector<8x64xf32>
    %cst_95 = arith.constant dense<0.000000e+00> : vector<64xf32>
    %378 = vector.multi_reduction <add>, %377, %cst_95 [0] : vector<8x64xf32> to vector<64xf32>
    %379 = vector.shape_cast %378 : vector<64xf32> to vector<1x64xf32>
    %380 = vector.extract_strided_slice %379 {offsets = [0, 0], sizes = [1, 32], strides = [1, 1]} : vector<1x64xf32> to vector<1x32xf32>
    %381 = vector.extract_strided_slice %379 {offsets = [0, 32], sizes = [1, 32], strides = [1, 1]} : vector<1x64xf32> to vector<1x32xf32>
    %cst_96 = arith.constant 1.250000e-01 : f32
    %382 = vector.broadcast %cst_96 : f32 to vector<1x32xf32>
    %383 = arith.mulf %380, %382 : vector<1x32xf32>
    %cst_97 = arith.constant 1.250000e-01 : f32
    %384 = vector.broadcast %cst_97 : f32 to vector<1x32xf32>
    %385 = arith.mulf %381, %384 : vector<1x32xf32>
    %386 = arith.mulf %383, %383 : vector<1x32xf32>
    %387 = arith.subf %385, %386 : vector<1x32xf32>
    %cst_98 = arith.constant 0.000000e+00 : f32
    %388 = vector.broadcast %cst_98 : f32 to vector<1x32xf32>
    %389 = arith.maximumf %387, %388 : vector<1x32xf32>
    %cst_99 = arith.constant 9.99999974E-6 : f32
    %390 = vector.broadcast %cst_99 : f32 to vector<1x32xf32>
    %391 = arith.addf %389, %390 : vector<1x32xf32>
    %392 = math.rsqrt %391 : vector<1x32xf32>
    %393 = arith.mulf %5, %392 : vector<1x32xf32>
    %394 = arith.mulf %383, %393 : vector<1x32xf32>
    %395 = arith.subf %6, %394 : vector<1x32xf32>
    %396 = vector.broadcast %393 : vector<1x32xf32> to vector<8x32xf32>
    %397 = arith.mulf %375, %396 : vector<8x32xf32>
    %398 = vector.broadcast %395 : vector<1x32xf32> to vector<8x32xf32>
    %399 = arith.addf %397, %398 : vector<8x32xf32>
    %cst_100 = arith.constant 0.000000e+00 : f32
    %400 = vector.broadcast %cst_100 : f32 to vector<8x32xf32>
    %401 = arith.maximumf %399, %400 : vector<8x32xf32>
    %cst_101 = arith.constant dense<0.000000e+00> : vector<8x32xf32>
    %402 = tpu.matmul %401, %44, %cst_101 {dimension_numbers = #tpu.dot_dimension_numbers<[1], [0], [0], [1], [0, 0, 1, 1], [], []>} : vector<8x32xf32>, vector<32x32xf32>, vector<8x32xf32> -> vector<8x32xf32>
    %403 = arith.mulf %402, %402 : vector<8x32xf32>
    %404 = tpu.concatenate %402, %403 in 1 : vector<8x32xf32>, vector<8x32xf32> -> vector<8x64xf32>
    %cst_102 = arith.constant dense<0.000000e+00> : vector<64xf32>
    %405 = vector.multi_reduction <add>, %404, %cst_102 [0] : vector<8x64xf32> to vector<64xf32>
    %406 = vector.shape_cast %405 : vector<64xf32> to vector<1x64xf32>
    %407 = vector.extract_strided_slice %406 {offsets = [0, 0], sizes = [1, 32], strides = [1, 1]} : vector<1x64xf32> to vector<1x32xf32>
    %408 = vector.extract_strided_slice %406 {offsets = [0, 32], sizes = [1, 32], strides = [1, 1]} : vector<1x64xf32> to vector<1x32xf32>
    %cst_103 = arith.constant 1.250000e-01 : f32
    %409 = vector.broadcast %cst_103 : f32 to vector<1x32xf32>
    %410 = arith.mulf %407, %409 : vector<1x32xf32>
    %cst_104 = arith.constant 1.250000e-01 : f32
    %411 = vector.broadcast %cst_104 : f32 to vector<1x32xf32>
    %412 = arith.mulf %408, %411 : vector<1x32xf32>
    %413 = arith.mulf %410, %410 : vector<1x32xf32>
    %414 = arith.subf %412, %413 : vector<1x32xf32>
    %cst_105 = arith.constant 0.000000e+00 : f32
    %415 = vector.broadcast %cst_105 : f32 to vector<1x32xf32>
    %416 = arith.maximumf %414, %415 : vector<1x32xf32>
    %cst_106 = arith.constant 9.99999974E-6 : f32
    %417 = vector.broadcast %cst_106 : f32 to vector<1x32xf32>
    %418 = arith.addf %416, %417 : vector<1x32xf32>
    %419 = math.rsqrt %418 : vector<1x32xf32>
    %420 = arith.mulf %5, %419 : vector<1x32xf32>
    %421 = arith.mulf %410, %420 : vector<1x32xf32>
    %422 = arith.subf %6, %421 : vector<1x32xf32>
    %423 = vector.broadcast %420 : vector<1x32xf32> to vector<8x32xf32>
    %424 = arith.mulf %402, %423 : vector<8x32xf32>
    %425 = vector.broadcast %422 : vector<1x32xf32> to vector<8x32xf32>
    %426 = arith.addf %424, %425 : vector<8x32xf32>
    %427 = arith.addf %426, %374 : vector<8x32xf32>
    %cst_107 = arith.constant 0.000000e+00 : f32
    %428 = vector.broadcast %cst_107 : f32 to vector<8x32xf32>
    %429 = arith.maximumf %427, %428 : vector<8x32xf32>
    %c7_i32 = arith.constant 7 : i32
    %cst_108 = arith.constant dense<0.000000e+00> : vector<8x32xf32>
    %430 = tpu.matmul %429, %44, %cst_108 {dimension_numbers = #tpu.dot_dimension_numbers<[1], [0], [0], [1], [0, 0, 1, 1], [], []>} : vector<8x32xf32>, vector<32x32xf32>, vector<8x32xf32> -> vector<8x32xf32>
    %431 = arith.mulf %430, %430 : vector<8x32xf32>
    %432 = tpu.concatenate %430, %431 in 1 : vector<8x32xf32>, vector<8x32xf32> -> vector<8x64xf32>
    %cst_109 = arith.constant dense<0.000000e+00> : vector<64xf32>
    %433 = vector.multi_reduction <add>, %432, %cst_109 [0] : vector<8x64xf32> to vector<64xf32>
    %434 = vector.shape_cast %433 : vector<64xf32> to vector<1x64xf32>
    %435 = vector.extract_strided_slice %434 {offsets = [0, 0], sizes = [1, 32], strides = [1, 1]} : vector<1x64xf32> to vector<1x32xf32>
    %436 = vector.extract_strided_slice %434 {offsets = [0, 32], sizes = [1, 32], strides = [1, 1]} : vector<1x64xf32> to vector<1x32xf32>
    %cst_110 = arith.constant 1.250000e-01 : f32
    %437 = vector.broadcast %cst_110 : f32 to vector<1x32xf32>
    %438 = arith.mulf %435, %437 : vector<1x32xf32>
    %cst_111 = arith.constant 1.250000e-01 : f32
    %439 = vector.broadcast %cst_111 : f32 to vector<1x32xf32>
    %440 = arith.mulf %436, %439 : vector<1x32xf32>
    %441 = arith.mulf %438, %438 : vector<1x32xf32>
    %442 = arith.subf %440, %441 : vector<1x32xf32>
    %cst_112 = arith.constant 0.000000e+00 : f32
    %443 = vector.broadcast %cst_112 : f32 to vector<1x32xf32>
    %444 = arith.maximumf %442, %443 : vector<1x32xf32>
    %cst_113 = arith.constant 9.99999974E-6 : f32
    %445 = vector.broadcast %cst_113 : f32 to vector<1x32xf32>
    %446 = arith.addf %444, %445 : vector<1x32xf32>
    %447 = math.rsqrt %446 : vector<1x32xf32>
    %448 = arith.mulf %5, %447 : vector<1x32xf32>
    %449 = arith.mulf %438, %448 : vector<1x32xf32>
    %450 = arith.subf %6, %449 : vector<1x32xf32>
    %451 = vector.broadcast %448 : vector<1x32xf32> to vector<8x32xf32>
    %452 = arith.mulf %430, %451 : vector<8x32xf32>
    %453 = vector.broadcast %450 : vector<1x32xf32> to vector<8x32xf32>
    %454 = arith.addf %452, %453 : vector<8x32xf32>
    %cst_114 = arith.constant 0.000000e+00 : f32
    %455 = vector.broadcast %cst_114 : f32 to vector<8x32xf32>
    %456 = arith.maximumf %454, %455 : vector<8x32xf32>
    %cst_115 = arith.constant dense<0.000000e+00> : vector<8x32xf32>
    %457 = tpu.matmul %456, %44, %cst_115 {dimension_numbers = #tpu.dot_dimension_numbers<[1], [0], [0], [1], [0, 0, 1, 1], [], []>} : vector<8x32xf32>, vector<32x32xf32>, vector<8x32xf32> -> vector<8x32xf32>
    %458 = arith.mulf %457, %457 : vector<8x32xf32>
    %459 = tpu.concatenate %457, %458 in 1 : vector<8x32xf32>, vector<8x32xf32> -> vector<8x64xf32>
    %cst_116 = arith.constant dense<0.000000e+00> : vector<64xf32>
    %460 = vector.multi_reduction <add>, %459, %cst_116 [0] : vector<8x64xf32> to vector<64xf32>
    %461 = vector.shape_cast %460 : vector<64xf32> to vector<1x64xf32>
    %462 = vector.extract_strided_slice %461 {offsets = [0, 0], sizes = [1, 32], strides = [1, 1]} : vector<1x64xf32> to vector<1x32xf32>
    %463 = vector.extract_strided_slice %461 {offsets = [0, 32], sizes = [1, 32], strides = [1, 1]} : vector<1x64xf32> to vector<1x32xf32>
    %cst_117 = arith.constant 1.250000e-01 : f32
    %464 = vector.broadcast %cst_117 : f32 to vector<1x32xf32>
    %465 = arith.mulf %462, %464 : vector<1x32xf32>
    %cst_118 = arith.constant 1.250000e-01 : f32
    %466 = vector.broadcast %cst_118 : f32 to vector<1x32xf32>
    %467 = arith.mulf %463, %466 : vector<1x32xf32>
    %468 = arith.mulf %465, %465 : vector<1x32xf32>
    %469 = arith.subf %467, %468 : vector<1x32xf32>
    %cst_119 = arith.constant 0.000000e+00 : f32
    %470 = vector.broadcast %cst_119 : f32 to vector<1x32xf32>
    %471 = arith.maximumf %469, %470 : vector<1x32xf32>
    %cst_120 = arith.constant 9.99999974E-6 : f32
    %472 = vector.broadcast %cst_120 : f32 to vector<1x32xf32>
    %473 = arith.addf %471, %472 : vector<1x32xf32>
    %474 = math.rsqrt %473 : vector<1x32xf32>
    %475 = arith.mulf %5, %474 : vector<1x32xf32>
    %476 = arith.mulf %465, %475 : vector<1x32xf32>
    %477 = arith.subf %6, %476 : vector<1x32xf32>
    %478 = vector.broadcast %475 : vector<1x32xf32> to vector<8x32xf32>
    %479 = arith.mulf %457, %478 : vector<8x32xf32>
    %480 = vector.broadcast %477 : vector<1x32xf32> to vector<8x32xf32>
    %481 = arith.addf %479, %480 : vector<8x32xf32>
    %482 = arith.addf %481, %429 : vector<8x32xf32>
    %cst_121 = arith.constant 0.000000e+00 : f32
    %483 = vector.broadcast %cst_121 : f32 to vector<8x32xf32>
    %484 = arith.maximumf %482, %483 : vector<8x32xf32>
    %c8_i32 = arith.constant 8 : i32
    %cst_122 = arith.constant dense<0.000000e+00> : vector<8x32xf32>
    %485 = tpu.matmul %484, %44, %cst_122 {dimension_numbers = #tpu.dot_dimension_numbers<[1], [0], [0], [1], [0, 0, 1, 1], [], []>} : vector<8x32xf32>, vector<32x32xf32>, vector<8x32xf32> -> vector<8x32xf32>
    %486 = arith.mulf %485, %485 : vector<8x32xf32>
    %487 = tpu.concatenate %485, %486 in 1 : vector<8x32xf32>, vector<8x32xf32> -> vector<8x64xf32>
    %cst_123 = arith.constant dense<0.000000e+00> : vector<64xf32>
    %488 = vector.multi_reduction <add>, %487, %cst_123 [0] : vector<8x64xf32> to vector<64xf32>
    %489 = vector.shape_cast %488 : vector<64xf32> to vector<1x64xf32>
    %490 = vector.extract_strided_slice %489 {offsets = [0, 0], sizes = [1, 32], strides = [1, 1]} : vector<1x64xf32> to vector<1x32xf32>
    %491 = vector.extract_strided_slice %489 {offsets = [0, 32], sizes = [1, 32], strides = [1, 1]} : vector<1x64xf32> to vector<1x32xf32>
    %cst_124 = arith.constant 1.250000e-01 : f32
    %492 = vector.broadcast %cst_124 : f32 to vector<1x32xf32>
    %493 = arith.mulf %490, %492 : vector<1x32xf32>
    %cst_125 = arith.constant 1.250000e-01 : f32
    %494 = vector.broadcast %cst_125 : f32 to vector<1x32xf32>
    %495 = arith.mulf %491, %494 : vector<1x32xf32>
    %496 = arith.mulf %493, %493 : vector<1x32xf32>
    %497 = arith.subf %495, %496 : vector<1x32xf32>
    %cst_126 = arith.constant 0.000000e+00 : f32
    %498 = vector.broadcast %cst_126 : f32 to vector<1x32xf32>
    %499 = arith.maximumf %497, %498 : vector<1x32xf32>
    %cst_127 = arith.constant 9.99999974E-6 : f32
    %500 = vector.broadcast %cst_127 : f32 to vector<1x32xf32>
    %501 = arith.addf %499, %500 : vector<1x32xf32>
    %502 = math.rsqrt %501 : vector<1x32xf32>
    %503 = arith.mulf %5, %502 : vector<1x32xf32>
    %504 = arith.mulf %493, %503 : vector<1x32xf32>
    %505 = arith.subf %6, %504 : vector<1x32xf32>
    %506 = vector.broadcast %503 : vector<1x32xf32> to vector<8x32xf32>
    %507 = arith.mulf %485, %506 : vector<8x32xf32>
    %508 = vector.broadcast %505 : vector<1x32xf32> to vector<8x32xf32>
    %509 = arith.addf %507, %508 : vector<8x32xf32>
    %cst_128 = arith.constant 0.000000e+00 : f32
    %510 = vector.broadcast %cst_128 : f32 to vector<8x32xf32>
    %511 = arith.maximumf %509, %510 : vector<8x32xf32>
    %cst_129 = arith.constant dense<0.000000e+00> : vector<8x32xf32>
    %512 = tpu.matmul %511, %44, %cst_129 {dimension_numbers = #tpu.dot_dimension_numbers<[1], [0], [0], [1], [0, 0, 1, 1], [], []>} : vector<8x32xf32>, vector<32x32xf32>, vector<8x32xf32> -> vector<8x32xf32>
    %513 = arith.mulf %512, %512 : vector<8x32xf32>
    %514 = tpu.concatenate %512, %513 in 1 : vector<8x32xf32>, vector<8x32xf32> -> vector<8x64xf32>
    %cst_130 = arith.constant dense<0.000000e+00> : vector<64xf32>
    %515 = vector.multi_reduction <add>, %514, %cst_130 [0] : vector<8x64xf32> to vector<64xf32>
    %516 = vector.shape_cast %515 : vector<64xf32> to vector<1x64xf32>
    %517 = vector.extract_strided_slice %516 {offsets = [0, 0], sizes = [1, 32], strides = [1, 1]} : vector<1x64xf32> to vector<1x32xf32>
    %518 = vector.extract_strided_slice %516 {offsets = [0, 32], sizes = [1, 32], strides = [1, 1]} : vector<1x64xf32> to vector<1x32xf32>
    %cst_131 = arith.constant 1.250000e-01 : f32
    %519 = vector.broadcast %cst_131 : f32 to vector<1x32xf32>
    %520 = arith.mulf %517, %519 : vector<1x32xf32>
    %cst_132 = arith.constant 1.250000e-01 : f32
    %521 = vector.broadcast %cst_132 : f32 to vector<1x32xf32>
    %522 = arith.mulf %518, %521 : vector<1x32xf32>
    %523 = arith.mulf %520, %520 : vector<1x32xf32>
    %524 = arith.subf %522, %523 : vector<1x32xf32>
    %cst_133 = arith.constant 0.000000e+00 : f32
    %525 = vector.broadcast %cst_133 : f32 to vector<1x32xf32>
    %526 = arith.maximumf %524, %525 : vector<1x32xf32>
    %cst_134 = arith.constant 9.99999974E-6 : f32
    %527 = vector.broadcast %cst_134 : f32 to vector<1x32xf32>
    %528 = arith.addf %526, %527 : vector<1x32xf32>
    %529 = math.rsqrt %528 : vector<1x32xf32>
    %530 = arith.mulf %5, %529 : vector<1x32xf32>
    %531 = arith.mulf %520, %530 : vector<1x32xf32>
    %532 = arith.subf %6, %531 : vector<1x32xf32>
    %533 = vector.broadcast %530 : vector<1x32xf32> to vector<8x32xf32>
    %534 = arith.mulf %512, %533 : vector<8x32xf32>
    %535 = vector.broadcast %532 : vector<1x32xf32> to vector<8x32xf32>
    %536 = arith.addf %534, %535 : vector<8x32xf32>
    %537 = arith.addf %536, %484 : vector<8x32xf32>
    %cst_135 = arith.constant 0.000000e+00 : f32
    %538 = vector.broadcast %cst_135 : f32 to vector<8x32xf32>
    %539 = arith.maximumf %537, %538 : vector<8x32xf32>
    %c9_i32 = arith.constant 9 : i32
    %cst_136 = arith.constant dense<0.000000e+00> : vector<8x32xf32>
    %540 = tpu.matmul %539, %44, %cst_136 {dimension_numbers = #tpu.dot_dimension_numbers<[1], [0], [0], [1], [0, 0, 1, 1], [], []>} : vector<8x32xf32>, vector<32x32xf32>, vector<8x32xf32> -> vector<8x32xf32>
    %541 = arith.mulf %540, %540 : vector<8x32xf32>
    %542 = tpu.concatenate %540, %541 in 1 : vector<8x32xf32>, vector<8x32xf32> -> vector<8x64xf32>
    %cst_137 = arith.constant dense<0.000000e+00> : vector<64xf32>
    %543 = vector.multi_reduction <add>, %542, %cst_137 [0] : vector<8x64xf32> to vector<64xf32>
    %544 = vector.shape_cast %543 : vector<64xf32> to vector<1x64xf32>
    %545 = vector.extract_strided_slice %544 {offsets = [0, 0], sizes = [1, 32], strides = [1, 1]} : vector<1x64xf32> to vector<1x32xf32>
    %546 = vector.extract_strided_slice %544 {offsets = [0, 32], sizes = [1, 32], strides = [1, 1]} : vector<1x64xf32> to vector<1x32xf32>
    %cst_138 = arith.constant 1.250000e-01 : f32
    %547 = vector.broadcast %cst_138 : f32 to vector<1x32xf32>
    %548 = arith.mulf %545, %547 : vector<1x32xf32>
    %cst_139 = arith.constant 1.250000e-01 : f32
    %549 = vector.broadcast %cst_139 : f32 to vector<1x32xf32>
    %550 = arith.mulf %546, %549 : vector<1x32xf32>
    %551 = arith.mulf %548, %548 : vector<1x32xf32>
    %552 = arith.subf %550, %551 : vector<1x32xf32>
    %cst_140 = arith.constant 0.000000e+00 : f32
    %553 = vector.broadcast %cst_140 : f32 to vector<1x32xf32>
    %554 = arith.maximumf %552, %553 : vector<1x32xf32>
    %cst_141 = arith.constant 9.99999974E-6 : f32
    %555 = vector.broadcast %cst_141 : f32 to vector<1x32xf32>
    %556 = arith.addf %554, %555 : vector<1x32xf32>
    %557 = math.rsqrt %556 : vector<1x32xf32>
    %558 = arith.mulf %5, %557 : vector<1x32xf32>
    %559 = arith.mulf %548, %558 : vector<1x32xf32>
    %560 = arith.subf %6, %559 : vector<1x32xf32>
    %561 = vector.broadcast %558 : vector<1x32xf32> to vector<8x32xf32>
    %562 = arith.mulf %540, %561 : vector<8x32xf32>
    %563 = vector.broadcast %560 : vector<1x32xf32> to vector<8x32xf32>
    %564 = arith.addf %562, %563 : vector<8x32xf32>
    %cst_142 = arith.constant 0.000000e+00 : f32
    %565 = vector.broadcast %cst_142 : f32 to vector<8x32xf32>
    %566 = arith.maximumf %564, %565 : vector<8x32xf32>
    %cst_143 = arith.constant dense<0.000000e+00> : vector<8x32xf32>
    %567 = tpu.matmul %566, %44, %cst_143 {dimension_numbers = #tpu.dot_dimension_numbers<[1], [0], [0], [1], [0, 0, 1, 1], [], []>} : vector<8x32xf32>, vector<32x32xf32>, vector<8x32xf32> -> vector<8x32xf32>
    %568 = arith.mulf %567, %567 : vector<8x32xf32>
    %569 = tpu.concatenate %567, %568 in 1 : vector<8x32xf32>, vector<8x32xf32> -> vector<8x64xf32>
    %cst_144 = arith.constant dense<0.000000e+00> : vector<64xf32>
    %570 = vector.multi_reduction <add>, %569, %cst_144 [0] : vector<8x64xf32> to vector<64xf32>
    %571 = vector.shape_cast %570 : vector<64xf32> to vector<1x64xf32>
    %572 = vector.extract_strided_slice %571 {offsets = [0, 0], sizes = [1, 32], strides = [1, 1]} : vector<1x64xf32> to vector<1x32xf32>
    %573 = vector.extract_strided_slice %571 {offsets = [0, 32], sizes = [1, 32], strides = [1, 1]} : vector<1x64xf32> to vector<1x32xf32>
    %cst_145 = arith.constant 1.250000e-01 : f32
    %574 = vector.broadcast %cst_145 : f32 to vector<1x32xf32>
    %575 = arith.mulf %572, %574 : vector<1x32xf32>
    %cst_146 = arith.constant 1.250000e-01 : f32
    %576 = vector.broadcast %cst_146 : f32 to vector<1x32xf32>
    %577 = arith.mulf %573, %576 : vector<1x32xf32>
    %578 = arith.mulf %575, %575 : vector<1x32xf32>
    %579 = arith.subf %577, %578 : vector<1x32xf32>
    %cst_147 = arith.constant 0.000000e+00 : f32
    %580 = vector.broadcast %cst_147 : f32 to vector<1x32xf32>
    %581 = arith.maximumf %579, %580 : vector<1x32xf32>
    %cst_148 = arith.constant 9.99999974E-6 : f32
    %582 = vector.broadcast %cst_148 : f32 to vector<1x32xf32>
    %583 = arith.addf %581, %582 : vector<1x32xf32>
    %584 = math.rsqrt %583 : vector<1x32xf32>
    %585 = arith.mulf %5, %584 : vector<1x32xf32>
    %586 = arith.mulf %575, %585 : vector<1x32xf32>
    %587 = arith.subf %6, %586 : vector<1x32xf32>
    %588 = vector.broadcast %585 : vector<1x32xf32> to vector<8x32xf32>
    %589 = arith.mulf %567, %588 : vector<8x32xf32>
    %590 = vector.broadcast %587 : vector<1x32xf32> to vector<8x32xf32>
    %591 = arith.addf %589, %590 : vector<8x32xf32>
    %592 = arith.addf %591, %539 : vector<8x32xf32>
    %cst_149 = arith.constant 0.000000e+00 : f32
    %593 = vector.broadcast %cst_149 : f32 to vector<8x32xf32>
    %594 = arith.maximumf %592, %593 : vector<8x32xf32>
    %c10_i32 = arith.constant 10 : i32
    %cst_150 = arith.constant dense<0.000000e+00> : vector<8x32xf32>
    %595 = tpu.matmul %594, %44, %cst_150 {dimension_numbers = #tpu.dot_dimension_numbers<[1], [0], [0], [1], [0, 0, 1, 1], [], []>} : vector<8x32xf32>, vector<32x32xf32>, vector<8x32xf32> -> vector<8x32xf32>
    %596 = arith.mulf %595, %595 : vector<8x32xf32>
    %597 = tpu.concatenate %595, %596 in 1 : vector<8x32xf32>, vector<8x32xf32> -> vector<8x64xf32>
    %cst_151 = arith.constant dense<0.000000e+00> : vector<64xf32>
    %598 = vector.multi_reduction <add>, %597, %cst_151 [0] : vector<8x64xf32> to vector<64xf32>
    %599 = vector.shape_cast %598 : vector<64xf32> to vector<1x64xf32>
    %600 = vector.extract_strided_slice %599 {offsets = [0, 0], sizes = [1, 32], strides = [1, 1]} : vector<1x64xf32> to vector<1x32xf32>
    %601 = vector.extract_strided_slice %599 {offsets = [0, 32], sizes = [1, 32], strides = [1, 1]} : vector<1x64xf32> to vector<1x32xf32>
    %cst_152 = arith.constant 1.250000e-01 : f32
    %602 = vector.broadcast %cst_152 : f32 to vector<1x32xf32>
    %603 = arith.mulf %600, %602 : vector<1x32xf32>
    %cst_153 = arith.constant 1.250000e-01 : f32
    %604 = vector.broadcast %cst_153 : f32 to vector<1x32xf32>
    %605 = arith.mulf %601, %604 : vector<1x32xf32>
    %606 = arith.mulf %603, %603 : vector<1x32xf32>
    %607 = arith.subf %605, %606 : vector<1x32xf32>
    %cst_154 = arith.constant 0.000000e+00 : f32
    %608 = vector.broadcast %cst_154 : f32 to vector<1x32xf32>
    %609 = arith.maximumf %607, %608 : vector<1x32xf32>
    %cst_155 = arith.constant 9.99999974E-6 : f32
    %610 = vector.broadcast %cst_155 : f32 to vector<1x32xf32>
    %611 = arith.addf %609, %610 : vector<1x32xf32>
    %612 = math.rsqrt %611 : vector<1x32xf32>
    %613 = arith.mulf %5, %612 : vector<1x32xf32>
    %614 = arith.mulf %603, %613 : vector<1x32xf32>
    %615 = arith.subf %6, %614 : vector<1x32xf32>
    %616 = vector.broadcast %613 : vector<1x32xf32> to vector<8x32xf32>
    %617 = arith.mulf %595, %616 : vector<8x32xf32>
    %618 = vector.broadcast %615 : vector<1x32xf32> to vector<8x32xf32>
    %619 = arith.addf %617, %618 : vector<8x32xf32>
    %cst_156 = arith.constant 0.000000e+00 : f32
    %620 = vector.broadcast %cst_156 : f32 to vector<8x32xf32>
    %621 = arith.maximumf %619, %620 : vector<8x32xf32>
    %cst_157 = arith.constant dense<0.000000e+00> : vector<8x32xf32>
    %622 = tpu.matmul %621, %44, %cst_157 {dimension_numbers = #tpu.dot_dimension_numbers<[1], [0], [0], [1], [0, 0, 1, 1], [], []>} : vector<8x32xf32>, vector<32x32xf32>, vector<8x32xf32> -> vector<8x32xf32>
    %623 = arith.mulf %622, %622 : vector<8x32xf32>
    %624 = tpu.concatenate %622, %623 in 1 : vector<8x32xf32>, vector<8x32xf32> -> vector<8x64xf32>
    %cst_158 = arith.constant dense<0.000000e+00> : vector<64xf32>
    %625 = vector.multi_reduction <add>, %624, %cst_158 [0] : vector<8x64xf32> to vector<64xf32>
    %626 = vector.shape_cast %625 : vector<64xf32> to vector<1x64xf32>
    %627 = vector.extract_strided_slice %626 {offsets = [0, 0], sizes = [1, 32], strides = [1, 1]} : vector<1x64xf32> to vector<1x32xf32>
    %628 = vector.extract_strided_slice %626 {offsets = [0, 32], sizes = [1, 32], strides = [1, 1]} : vector<1x64xf32> to vector<1x32xf32>
    %cst_159 = arith.constant 1.250000e-01 : f32
    %629 = vector.broadcast %cst_159 : f32 to vector<1x32xf32>
    %630 = arith.mulf %627, %629 : vector<1x32xf32>
    %cst_160 = arith.constant 1.250000e-01 : f32
    %631 = vector.broadcast %cst_160 : f32 to vector<1x32xf32>
    %632 = arith.mulf %628, %631 : vector<1x32xf32>
    %633 = arith.mulf %630, %630 : vector<1x32xf32>
    %634 = arith.subf %632, %633 : vector<1x32xf32>
    %cst_161 = arith.constant 0.000000e+00 : f32
    %635 = vector.broadcast %cst_161 : f32 to vector<1x32xf32>
    %636 = arith.maximumf %634, %635 : vector<1x32xf32>
    %cst_162 = arith.constant 9.99999974E-6 : f32
    %637 = vector.broadcast %cst_162 : f32 to vector<1x32xf32>
    %638 = arith.addf %636, %637 : vector<1x32xf32>
    %639 = math.rsqrt %638 : vector<1x32xf32>
    %640 = arith.mulf %5, %639 : vector<1x32xf32>
    %641 = arith.mulf %630, %640 : vector<1x32xf32>
    %642 = arith.subf %6, %641 : vector<1x32xf32>
    %643 = vector.broadcast %640 : vector<1x32xf32> to vector<8x32xf32>
    %644 = arith.mulf %622, %643 : vector<8x32xf32>
    %645 = vector.broadcast %642 : vector<1x32xf32> to vector<8x32xf32>
    %646 = arith.addf %644, %645 : vector<8x32xf32>
    %647 = arith.addf %646, %594 : vector<8x32xf32>
    %cst_163 = arith.constant 0.000000e+00 : f32
    %648 = vector.broadcast %cst_163 : f32 to vector<8x32xf32>
    %649 = arith.maximumf %647, %648 : vector<8x32xf32>
    %c11_i32 = arith.constant 11 : i32
    %cst_164 = arith.constant dense<0.000000e+00> : vector<8x32xf32>
    %650 = tpu.matmul %649, %44, %cst_164 {dimension_numbers = #tpu.dot_dimension_numbers<[1], [0], [0], [1], [0, 0, 1, 1], [], []>} : vector<8x32xf32>, vector<32x32xf32>, vector<8x32xf32> -> vector<8x32xf32>
    %651 = arith.mulf %650, %650 : vector<8x32xf32>
    %652 = tpu.concatenate %650, %651 in 1 : vector<8x32xf32>, vector<8x32xf32> -> vector<8x64xf32>
    %cst_165 = arith.constant dense<0.000000e+00> : vector<64xf32>
    %653 = vector.multi_reduction <add>, %652, %cst_165 [0] : vector<8x64xf32> to vector<64xf32>
    %654 = vector.shape_cast %653 : vector<64xf32> to vector<1x64xf32>
    %655 = vector.extract_strided_slice %654 {offsets = [0, 0], sizes = [1, 32], strides = [1, 1]} : vector<1x64xf32> to vector<1x32xf32>
    %656 = vector.extract_strided_slice %654 {offsets = [0, 32], sizes = [1, 32], strides = [1, 1]} : vector<1x64xf32> to vector<1x32xf32>
    %cst_166 = arith.constant 1.250000e-01 : f32
    %657 = vector.broadcast %cst_166 : f32 to vector<1x32xf32>
    %658 = arith.mulf %655, %657 : vector<1x32xf32>
    %cst_167 = arith.constant 1.250000e-01 : f32
    %659 = vector.broadcast %cst_167 : f32 to vector<1x32xf32>
    %660 = arith.mulf %656, %659 : vector<1x32xf32>
    %661 = arith.mulf %658, %658 : vector<1x32xf32>
    %662 = arith.subf %660, %661 : vector<1x32xf32>
    %cst_168 = arith.constant 0.000000e+00 : f32
    %663 = vector.broadcast %cst_168 : f32 to vector<1x32xf32>
    %664 = arith.maximumf %662, %663 : vector<1x32xf32>
    %cst_169 = arith.constant 9.99999974E-6 : f32
    %665 = vector.broadcast %cst_169 : f32 to vector<1x32xf32>
    %666 = arith.addf %664, %665 : vector<1x32xf32>
    %667 = math.rsqrt %666 : vector<1x32xf32>
    %668 = arith.mulf %5, %667 : vector<1x32xf32>
    %669 = arith.mulf %658, %668 : vector<1x32xf32>
    %670 = arith.subf %6, %669 : vector<1x32xf32>
    %671 = vector.broadcast %668 : vector<1x32xf32> to vector<8x32xf32>
    %672 = arith.mulf %650, %671 : vector<8x32xf32>
    %673 = vector.broadcast %670 : vector<1x32xf32> to vector<8x32xf32>
    %674 = arith.addf %672, %673 : vector<8x32xf32>
    %cst_170 = arith.constant 0.000000e+00 : f32
    %675 = vector.broadcast %cst_170 : f32 to vector<8x32xf32>
    %676 = arith.maximumf %674, %675 : vector<8x32xf32>
    %cst_171 = arith.constant dense<0.000000e+00> : vector<8x32xf32>
    %677 = tpu.matmul %676, %44, %cst_171 {dimension_numbers = #tpu.dot_dimension_numbers<[1], [0], [0], [1], [0, 0, 1, 1], [], []>} : vector<8x32xf32>, vector<32x32xf32>, vector<8x32xf32> -> vector<8x32xf32>
    %678 = arith.mulf %677, %677 : vector<8x32xf32>
    %679 = tpu.concatenate %677, %678 in 1 : vector<8x32xf32>, vector<8x32xf32> -> vector<8x64xf32>
    %cst_172 = arith.constant dense<0.000000e+00> : vector<64xf32>
    %680 = vector.multi_reduction <add>, %679, %cst_172 [0] : vector<8x64xf32> to vector<64xf32>
    %681 = vector.shape_cast %680 : vector<64xf32> to vector<1x64xf32>
    %682 = vector.extract_strided_slice %681 {offsets = [0, 0], sizes = [1, 32], strides = [1, 1]} : vector<1x64xf32> to vector<1x32xf32>
    %683 = vector.extract_strided_slice %681 {offsets = [0, 32], sizes = [1, 32], strides = [1, 1]} : vector<1x64xf32> to vector<1x32xf32>
    %cst_173 = arith.constant 1.250000e-01 : f32
    %684 = vector.broadcast %cst_173 : f32 to vector<1x32xf32>
    %685 = arith.mulf %682, %684 : vector<1x32xf32>
    %cst_174 = arith.constant 1.250000e-01 : f32
    %686 = vector.broadcast %cst_174 : f32 to vector<1x32xf32>
    %687 = arith.mulf %683, %686 : vector<1x32xf32>
    %688 = arith.mulf %685, %685 : vector<1x32xf32>
    %689 = arith.subf %687, %688 : vector<1x32xf32>
    %cst_175 = arith.constant 0.000000e+00 : f32
    %690 = vector.broadcast %cst_175 : f32 to vector<1x32xf32>
    %691 = arith.maximumf %689, %690 : vector<1x32xf32>
    %cst_176 = arith.constant 9.99999974E-6 : f32
    %692 = vector.broadcast %cst_176 : f32 to vector<1x32xf32>
    %693 = arith.addf %691, %692 : vector<1x32xf32>
    %694 = math.rsqrt %693 : vector<1x32xf32>
    %695 = arith.mulf %5, %694 : vector<1x32xf32>
    %696 = arith.mulf %685, %695 : vector<1x32xf32>
    %697 = arith.subf %6, %696 : vector<1x32xf32>
    %698 = vector.broadcast %695 : vector<1x32xf32> to vector<8x32xf32>
    %699 = arith.mulf %677, %698 : vector<8x32xf32>
    %700 = vector.broadcast %697 : vector<1x32xf32> to vector<8x32xf32>
    %701 = arith.addf %699, %700 : vector<8x32xf32>
    %702 = arith.addf %701, %649 : vector<8x32xf32>
    %cst_177 = arith.constant 0.000000e+00 : f32
    %703 = vector.broadcast %cst_177 : f32 to vector<8x32xf32>
    %704 = arith.maximumf %702, %703 : vector<8x32xf32>
    %c12_i32 = arith.constant 12 : i32
    %cst_178 = arith.constant dense<0.000000e+00> : vector<8x32xf32>
    %705 = tpu.matmul %704, %44, %cst_178 {dimension_numbers = #tpu.dot_dimension_numbers<[1], [0], [0], [1], [0, 0, 1, 1], [], []>} : vector<8x32xf32>, vector<32x32xf32>, vector<8x32xf32> -> vector<8x32xf32>
    %706 = arith.mulf %705, %705 : vector<8x32xf32>
    %707 = tpu.concatenate %705, %706 in 1 : vector<8x32xf32>, vector<8x32xf32> -> vector<8x64xf32>
    %cst_179 = arith.constant dense<0.000000e+00> : vector<64xf32>
    %708 = vector.multi_reduction <add>, %707, %cst_179 [0] : vector<8x64xf32> to vector<64xf32>
    %709 = vector.shape_cast %708 : vector<64xf32> to vector<1x64xf32>
    %710 = vector.extract_strided_slice %709 {offsets = [0, 0], sizes = [1, 32], strides = [1, 1]} : vector<1x64xf32> to vector<1x32xf32>
    %711 = vector.extract_strided_slice %709 {offsets = [0, 32], sizes = [1, 32], strides = [1, 1]} : vector<1x64xf32> to vector<1x32xf32>
    %cst_180 = arith.constant 1.250000e-01 : f32
    %712 = vector.broadcast %cst_180 : f32 to vector<1x32xf32>
    %713 = arith.mulf %710, %712 : vector<1x32xf32>
    %cst_181 = arith.constant 1.250000e-01 : f32
    %714 = vector.broadcast %cst_181 : f32 to vector<1x32xf32>
    %715 = arith.mulf %711, %714 : vector<1x32xf32>
    %716 = arith.mulf %713, %713 : vector<1x32xf32>
    %717 = arith.subf %715, %716 : vector<1x32xf32>
    %cst_182 = arith.constant 0.000000e+00 : f32
    %718 = vector.broadcast %cst_182 : f32 to vector<1x32xf32>
    %719 = arith.maximumf %717, %718 : vector<1x32xf32>
    %cst_183 = arith.constant 9.99999974E-6 : f32
    %720 = vector.broadcast %cst_183 : f32 to vector<1x32xf32>
    %721 = arith.addf %719, %720 : vector<1x32xf32>
    %722 = math.rsqrt %721 : vector<1x32xf32>
    %723 = arith.mulf %5, %722 : vector<1x32xf32>
    %724 = arith.mulf %713, %723 : vector<1x32xf32>
    %725 = arith.subf %6, %724 : vector<1x32xf32>
    %726 = vector.broadcast %723 : vector<1x32xf32> to vector<8x32xf32>
    %727 = arith.mulf %705, %726 : vector<8x32xf32>
    %728 = vector.broadcast %725 : vector<1x32xf32> to vector<8x32xf32>
    %729 = arith.addf %727, %728 : vector<8x32xf32>
    %cst_184 = arith.constant 0.000000e+00 : f32
    %730 = vector.broadcast %cst_184 : f32 to vector<8x32xf32>
    %731 = arith.maximumf %729, %730 : vector<8x32xf32>
    %cst_185 = arith.constant dense<0.000000e+00> : vector<8x32xf32>
    %732 = tpu.matmul %731, %44, %cst_185 {dimension_numbers = #tpu.dot_dimension_numbers<[1], [0], [0], [1], [0, 0, 1, 1], [], []>} : vector<8x32xf32>, vector<32x32xf32>, vector<8x32xf32> -> vector<8x32xf32>
    %733 = arith.mulf %732, %732 : vector<8x32xf32>
    %734 = tpu.concatenate %732, %733 in 1 : vector<8x32xf32>, vector<8x32xf32> -> vector<8x64xf32>
    %cst_186 = arith.constant dense<0.000000e+00> : vector<64xf32>
    %735 = vector.multi_reduction <add>, %734, %cst_186 [0] : vector<8x64xf32> to vector<64xf32>
    %736 = vector.shape_cast %735 : vector<64xf32> to vector<1x64xf32>
    %737 = vector.extract_strided_slice %736 {offsets = [0, 0], sizes = [1, 32], strides = [1, 1]} : vector<1x64xf32> to vector<1x32xf32>
    %738 = vector.extract_strided_slice %736 {offsets = [0, 32], sizes = [1, 32], strides = [1, 1]} : vector<1x64xf32> to vector<1x32xf32>
    %cst_187 = arith.constant 1.250000e-01 : f32
    %739 = vector.broadcast %cst_187 : f32 to vector<1x32xf32>
    %740 = arith.mulf %737, %739 : vector<1x32xf32>
    %cst_188 = arith.constant 1.250000e-01 : f32
    %741 = vector.broadcast %cst_188 : f32 to vector<1x32xf32>
    %742 = arith.mulf %738, %741 : vector<1x32xf32>
    %743 = arith.mulf %740, %740 : vector<1x32xf32>
    %744 = arith.subf %742, %743 : vector<1x32xf32>
    %cst_189 = arith.constant 0.000000e+00 : f32
    %745 = vector.broadcast %cst_189 : f32 to vector<1x32xf32>
    %746 = arith.maximumf %744, %745 : vector<1x32xf32>
    %cst_190 = arith.constant 9.99999974E-6 : f32
    %747 = vector.broadcast %cst_190 : f32 to vector<1x32xf32>
    %748 = arith.addf %746, %747 : vector<1x32xf32>
    %749 = math.rsqrt %748 : vector<1x32xf32>
    %750 = arith.mulf %5, %749 : vector<1x32xf32>
    %751 = arith.mulf %740, %750 : vector<1x32xf32>
    %752 = arith.subf %6, %751 : vector<1x32xf32>
    %753 = vector.broadcast %750 : vector<1x32xf32> to vector<8x32xf32>
    %754 = arith.mulf %732, %753 : vector<8x32xf32>
    %755 = vector.broadcast %752 : vector<1x32xf32> to vector<8x32xf32>
    %756 = arith.addf %754, %755 : vector<8x32xf32>
    %757 = arith.addf %756, %704 : vector<8x32xf32>
    %cst_191 = arith.constant 0.000000e+00 : f32
    %758 = vector.broadcast %cst_191 : f32 to vector<8x32xf32>
    %759 = arith.maximumf %757, %758 : vector<8x32xf32>
    %c13_i32 = arith.constant 13 : i32
    %cst_192 = arith.constant dense<0.000000e+00> : vector<8x32xf32>
    %760 = tpu.matmul %759, %44, %cst_192 {dimension_numbers = #tpu.dot_dimension_numbers<[1], [0], [0], [1], [0, 0, 1, 1], [], []>} : vector<8x32xf32>, vector<32x32xf32>, vector<8x32xf32> -> vector<8x32xf32>
    %761 = arith.mulf %760, %760 : vector<8x32xf32>
    %762 = tpu.concatenate %760, %761 in 1 : vector<8x32xf32>, vector<8x32xf32> -> vector<8x64xf32>
    %cst_193 = arith.constant dense<0.000000e+00> : vector<64xf32>
    %763 = vector.multi_reduction <add>, %762, %cst_193 [0] : vector<8x64xf32> to vector<64xf32>
    %764 = vector.shape_cast %763 : vector<64xf32> to vector<1x64xf32>
    %765 = vector.extract_strided_slice %764 {offsets = [0, 0], sizes = [1, 32], strides = [1, 1]} : vector<1x64xf32> to vector<1x32xf32>
    %766 = vector.extract_strided_slice %764 {offsets = [0, 32], sizes = [1, 32], strides = [1, 1]} : vector<1x64xf32> to vector<1x32xf32>
    %cst_194 = arith.constant 1.250000e-01 : f32
    %767 = vector.broadcast %cst_194 : f32 to vector<1x32xf32>
    %768 = arith.mulf %765, %767 : vector<1x32xf32>
    %cst_195 = arith.constant 1.250000e-01 : f32
    %769 = vector.broadcast %cst_195 : f32 to vector<1x32xf32>
    %770 = arith.mulf %766, %769 : vector<1x32xf32>
    %771 = arith.mulf %768, %768 : vector<1x32xf32>
    %772 = arith.subf %770, %771 : vector<1x32xf32>
    %cst_196 = arith.constant 0.000000e+00 : f32
    %773 = vector.broadcast %cst_196 : f32 to vector<1x32xf32>
    %774 = arith.maximumf %772, %773 : vector<1x32xf32>
    %cst_197 = arith.constant 9.99999974E-6 : f32
    %775 = vector.broadcast %cst_197 : f32 to vector<1x32xf32>
    %776 = arith.addf %774, %775 : vector<1x32xf32>
    %777 = math.rsqrt %776 : vector<1x32xf32>
    %778 = arith.mulf %5, %777 : vector<1x32xf32>
    %779 = arith.mulf %768, %778 : vector<1x32xf32>
    %780 = arith.subf %6, %779 : vector<1x32xf32>
    %781 = vector.broadcast %778 : vector<1x32xf32> to vector<8x32xf32>
    %782 = arith.mulf %760, %781 : vector<8x32xf32>
    %783 = vector.broadcast %780 : vector<1x32xf32> to vector<8x32xf32>
    %784 = arith.addf %782, %783 : vector<8x32xf32>
    %cst_198 = arith.constant 0.000000e+00 : f32
    %785 = vector.broadcast %cst_198 : f32 to vector<8x32xf32>
    %786 = arith.maximumf %784, %785 : vector<8x32xf32>
    %cst_199 = arith.constant dense<0.000000e+00> : vector<8x32xf32>
    %787 = tpu.matmul %786, %44, %cst_199 {dimension_numbers = #tpu.dot_dimension_numbers<[1], [0], [0], [1], [0, 0, 1, 1], [], []>} : vector<8x32xf32>, vector<32x32xf32>, vector<8x32xf32> -> vector<8x32xf32>
    %788 = arith.mulf %787, %787 : vector<8x32xf32>
    %789 = tpu.concatenate %787, %788 in 1 : vector<8x32xf32>, vector<8x32xf32> -> vector<8x64xf32>
    %cst_200 = arith.constant dense<0.000000e+00> : vector<64xf32>
    %790 = vector.multi_reduction <add>, %789, %cst_200 [0] : vector<8x64xf32> to vector<64xf32>
    %791 = vector.shape_cast %790 : vector<64xf32> to vector<1x64xf32>
    %792 = vector.extract_strided_slice %791 {offsets = [0, 0], sizes = [1, 32], strides = [1, 1]} : vector<1x64xf32> to vector<1x32xf32>
    %793 = vector.extract_strided_slice %791 {offsets = [0, 32], sizes = [1, 32], strides = [1, 1]} : vector<1x64xf32> to vector<1x32xf32>
    %cst_201 = arith.constant 1.250000e-01 : f32
    %794 = vector.broadcast %cst_201 : f32 to vector<1x32xf32>
    %795 = arith.mulf %792, %794 : vector<1x32xf32>
    %cst_202 = arith.constant 1.250000e-01 : f32
    %796 = vector.broadcast %cst_202 : f32 to vector<1x32xf32>
    %797 = arith.mulf %793, %796 : vector<1x32xf32>
    %798 = arith.mulf %795, %795 : vector<1x32xf32>
    %799 = arith.subf %797, %798 : vector<1x32xf32>
    %cst_203 = arith.constant 0.000000e+00 : f32
    %800 = vector.broadcast %cst_203 : f32 to vector<1x32xf32>
    %801 = arith.maximumf %799, %800 : vector<1x32xf32>
    %cst_204 = arith.constant 9.99999974E-6 : f32
    %802 = vector.broadcast %cst_204 : f32 to vector<1x32xf32>
    %803 = arith.addf %801, %802 : vector<1x32xf32>
    %804 = math.rsqrt %803 : vector<1x32xf32>
    %805 = arith.mulf %5, %804 : vector<1x32xf32>
    %806 = arith.mulf %795, %805 : vector<1x32xf32>
    %807 = arith.subf %6, %806 : vector<1x32xf32>
    %808 = vector.broadcast %805 : vector<1x32xf32> to vector<8x32xf32>
    %809 = arith.mulf %787, %808 : vector<8x32xf32>
    %810 = vector.broadcast %807 : vector<1x32xf32> to vector<8x32xf32>
    %811 = arith.addf %809, %810 : vector<8x32xf32>
    %812 = arith.addf %811, %759 : vector<8x32xf32>
    %cst_205 = arith.constant 0.000000e+00 : f32
    %813 = vector.broadcast %cst_205 : f32 to vector<8x32xf32>
    %814 = arith.maximumf %812, %813 : vector<8x32xf32>
    %c14_i32 = arith.constant 14 : i32
    %cst_206 = arith.constant dense<0.000000e+00> : vector<8x32xf32>
    %815 = tpu.matmul %814, %44, %cst_206 {dimension_numbers = #tpu.dot_dimension_numbers<[1], [0], [0], [1], [0, 0, 1, 1], [], []>} : vector<8x32xf32>, vector<32x32xf32>, vector<8x32xf32> -> vector<8x32xf32>
    %816 = arith.mulf %815, %815 : vector<8x32xf32>
    %817 = tpu.concatenate %815, %816 in 1 : vector<8x32xf32>, vector<8x32xf32> -> vector<8x64xf32>
    %cst_207 = arith.constant dense<0.000000e+00> : vector<64xf32>
    %818 = vector.multi_reduction <add>, %817, %cst_207 [0] : vector<8x64xf32> to vector<64xf32>
    %819 = vector.shape_cast %818 : vector<64xf32> to vector<1x64xf32>
    %820 = vector.extract_strided_slice %819 {offsets = [0, 0], sizes = [1, 32], strides = [1, 1]} : vector<1x64xf32> to vector<1x32xf32>
    %821 = vector.extract_strided_slice %819 {offsets = [0, 32], sizes = [1, 32], strides = [1, 1]} : vector<1x64xf32> to vector<1x32xf32>
    %cst_208 = arith.constant 1.250000e-01 : f32
    %822 = vector.broadcast %cst_208 : f32 to vector<1x32xf32>
    %823 = arith.mulf %820, %822 : vector<1x32xf32>
    %cst_209 = arith.constant 1.250000e-01 : f32
    %824 = vector.broadcast %cst_209 : f32 to vector<1x32xf32>
    %825 = arith.mulf %821, %824 : vector<1x32xf32>
    %826 = arith.mulf %823, %823 : vector<1x32xf32>
    %827 = arith.subf %825, %826 : vector<1x32xf32>
    %cst_210 = arith.constant 0.000000e+00 : f32
    %828 = vector.broadcast %cst_210 : f32 to vector<1x32xf32>
    %829 = arith.maximumf %827, %828 : vector<1x32xf32>
    %cst_211 = arith.constant 9.99999974E-6 : f32
    %830 = vector.broadcast %cst_211 : f32 to vector<1x32xf32>
    %831 = arith.addf %829, %830 : vector<1x32xf32>
    %832 = math.rsqrt %831 : vector<1x32xf32>
    %833 = arith.mulf %5, %832 : vector<1x32xf32>
    %834 = arith.mulf %823, %833 : vector<1x32xf32>
    %835 = arith.subf %6, %834 : vector<1x32xf32>
    %836 = vector.broadcast %833 : vector<1x32xf32> to vector<8x32xf32>
    %837 = arith.mulf %815, %836 : vector<8x32xf32>
    %838 = vector.broadcast %835 : vector<1x32xf32> to vector<8x32xf32>
    %839 = arith.addf %837, %838 : vector<8x32xf32>
    %cst_212 = arith.constant 0.000000e+00 : f32
    %840 = vector.broadcast %cst_212 : f32 to vector<8x32xf32>
    %841 = arith.maximumf %839, %840 : vector<8x32xf32>
    %cst_213 = arith.constant dense<0.000000e+00> : vector<8x32xf32>
    %842 = tpu.matmul %841, %44, %cst_213 {dimension_numbers = #tpu.dot_dimension_numbers<[1], [0], [0], [1], [0, 0, 1, 1], [], []>} : vector<8x32xf32>, vector<32x32xf32>, vector<8x32xf32> -> vector<8x32xf32>
    %843 = arith.mulf %842, %842 : vector<8x32xf32>
    %844 = tpu.concatenate %842, %843 in 1 : vector<8x32xf32>, vector<8x32xf32> -> vector<8x64xf32>
    %cst_214 = arith.constant dense<0.000000e+00> : vector<64xf32>
    %845 = vector.multi_reduction <add>, %844, %cst_214 [0] : vector<8x64xf32> to vector<64xf32>
    %846 = vector.shape_cast %845 : vector<64xf32> to vector<1x64xf32>
    %847 = vector.extract_strided_slice %846 {offsets = [0, 0], sizes = [1, 32], strides = [1, 1]} : vector<1x64xf32> to vector<1x32xf32>
    %848 = vector.extract_strided_slice %846 {offsets = [0, 32], sizes = [1, 32], strides = [1, 1]} : vector<1x64xf32> to vector<1x32xf32>
    %cst_215 = arith.constant 1.250000e-01 : f32
    %849 = vector.broadcast %cst_215 : f32 to vector<1x32xf32>
    %850 = arith.mulf %847, %849 : vector<1x32xf32>
    %cst_216 = arith.constant 1.250000e-01 : f32
    %851 = vector.broadcast %cst_216 : f32 to vector<1x32xf32>
    %852 = arith.mulf %848, %851 : vector<1x32xf32>
    %853 = arith.mulf %850, %850 : vector<1x32xf32>
    %854 = arith.subf %852, %853 : vector<1x32xf32>
    %cst_217 = arith.constant 0.000000e+00 : f32
    %855 = vector.broadcast %cst_217 : f32 to vector<1x32xf32>
    %856 = arith.maximumf %854, %855 : vector<1x32xf32>
    %cst_218 = arith.constant 9.99999974E-6 : f32
    %857 = vector.broadcast %cst_218 : f32 to vector<1x32xf32>
    %858 = arith.addf %856, %857 : vector<1x32xf32>
    %859 = math.rsqrt %858 : vector<1x32xf32>
    %860 = arith.mulf %5, %859 : vector<1x32xf32>
    %861 = arith.mulf %850, %860 : vector<1x32xf32>
    %862 = arith.subf %6, %861 : vector<1x32xf32>
    %863 = vector.broadcast %860 : vector<1x32xf32> to vector<8x32xf32>
    %864 = arith.mulf %842, %863 : vector<8x32xf32>
    %865 = vector.broadcast %862 : vector<1x32xf32> to vector<8x32xf32>
    %866 = arith.addf %864, %865 : vector<8x32xf32>
    %867 = arith.addf %866, %814 : vector<8x32xf32>
    %cst_219 = arith.constant 0.000000e+00 : f32
    %868 = vector.broadcast %cst_219 : f32 to vector<8x32xf32>
    %869 = arith.maximumf %867, %868 : vector<8x32xf32>
    %c15_i32 = arith.constant 15 : i32
    %cst_220 = arith.constant dense<0.000000e+00> : vector<8x32xf32>
    %870 = tpu.matmul %869, %44, %cst_220 {dimension_numbers = #tpu.dot_dimension_numbers<[1], [0], [0], [1], [0, 0, 1, 1], [], []>} : vector<8x32xf32>, vector<32x32xf32>, vector<8x32xf32> -> vector<8x32xf32>
    %871 = arith.mulf %870, %870 : vector<8x32xf32>
    %872 = tpu.concatenate %870, %871 in 1 : vector<8x32xf32>, vector<8x32xf32> -> vector<8x64xf32>
    %cst_221 = arith.constant dense<0.000000e+00> : vector<64xf32>
    %873 = vector.multi_reduction <add>, %872, %cst_221 [0] : vector<8x64xf32> to vector<64xf32>
    %874 = vector.shape_cast %873 : vector<64xf32> to vector<1x64xf32>
    %875 = vector.extract_strided_slice %874 {offsets = [0, 0], sizes = [1, 32], strides = [1, 1]} : vector<1x64xf32> to vector<1x32xf32>
    %876 = vector.extract_strided_slice %874 {offsets = [0, 32], sizes = [1, 32], strides = [1, 1]} : vector<1x64xf32> to vector<1x32xf32>
    %cst_222 = arith.constant 1.250000e-01 : f32
    %877 = vector.broadcast %cst_222 : f32 to vector<1x32xf32>
    %878 = arith.mulf %875, %877 : vector<1x32xf32>
    %cst_223 = arith.constant 1.250000e-01 : f32
    %879 = vector.broadcast %cst_223 : f32 to vector<1x32xf32>
    %880 = arith.mulf %876, %879 : vector<1x32xf32>
    %881 = arith.mulf %878, %878 : vector<1x32xf32>
    %882 = arith.subf %880, %881 : vector<1x32xf32>
    %cst_224 = arith.constant 0.000000e+00 : f32
    %883 = vector.broadcast %cst_224 : f32 to vector<1x32xf32>
    %884 = arith.maximumf %882, %883 : vector<1x32xf32>
    %cst_225 = arith.constant 9.99999974E-6 : f32
    %885 = vector.broadcast %cst_225 : f32 to vector<1x32xf32>
    %886 = arith.addf %884, %885 : vector<1x32xf32>
    %887 = math.rsqrt %886 : vector<1x32xf32>
    %888 = arith.mulf %5, %887 : vector<1x32xf32>
    %889 = arith.mulf %878, %888 : vector<1x32xf32>
    %890 = arith.subf %6, %889 : vector<1x32xf32>
    %891 = vector.broadcast %888 : vector<1x32xf32> to vector<8x32xf32>
    %892 = arith.mulf %870, %891 : vector<8x32xf32>
    %893 = vector.broadcast %890 : vector<1x32xf32> to vector<8x32xf32>
    %894 = arith.addf %892, %893 : vector<8x32xf32>
    %cst_226 = arith.constant 0.000000e+00 : f32
    %895 = vector.broadcast %cst_226 : f32 to vector<8x32xf32>
    %896 = arith.maximumf %894, %895 : vector<8x32xf32>
    %cst_227 = arith.constant dense<0.000000e+00> : vector<8x32xf32>
    %897 = tpu.matmul %896, %44, %cst_227 {dimension_numbers = #tpu.dot_dimension_numbers<[1], [0], [0], [1], [0, 0, 1, 1], [], []>} : vector<8x32xf32>, vector<32x32xf32>, vector<8x32xf32> -> vector<8x32xf32>
    %898 = arith.mulf %897, %897 : vector<8x32xf32>
    %899 = tpu.concatenate %897, %898 in 1 : vector<8x32xf32>, vector<8x32xf32> -> vector<8x64xf32>
    %cst_228 = arith.constant dense<0.000000e+00> : vector<64xf32>
    %900 = vector.multi_reduction <add>, %899, %cst_228 [0] : vector<8x64xf32> to vector<64xf32>
    %901 = vector.shape_cast %900 : vector<64xf32> to vector<1x64xf32>
    %902 = vector.extract_strided_slice %901 {offsets = [0, 0], sizes = [1, 32], strides = [1, 1]} : vector<1x64xf32> to vector<1x32xf32>
    %903 = vector.extract_strided_slice %901 {offsets = [0, 32], sizes = [1, 32], strides = [1, 1]} : vector<1x64xf32> to vector<1x32xf32>
    %cst_229 = arith.constant 1.250000e-01 : f32
    %904 = vector.broadcast %cst_229 : f32 to vector<1x32xf32>
    %905 = arith.mulf %902, %904 : vector<1x32xf32>
    %cst_230 = arith.constant 1.250000e-01 : f32
    %906 = vector.broadcast %cst_230 : f32 to vector<1x32xf32>
    %907 = arith.mulf %903, %906 : vector<1x32xf32>
    %908 = arith.mulf %905, %905 : vector<1x32xf32>
    %909 = arith.subf %907, %908 : vector<1x32xf32>
    %cst_231 = arith.constant 0.000000e+00 : f32
    %910 = vector.broadcast %cst_231 : f32 to vector<1x32xf32>
    %911 = arith.maximumf %909, %910 : vector<1x32xf32>
    %cst_232 = arith.constant 9.99999974E-6 : f32
    %912 = vector.broadcast %cst_232 : f32 to vector<1x32xf32>
    %913 = arith.addf %911, %912 : vector<1x32xf32>
    %914 = math.rsqrt %913 : vector<1x32xf32>
    %915 = arith.mulf %5, %914 : vector<1x32xf32>
    %916 = arith.mulf %905, %915 : vector<1x32xf32>
    %917 = arith.subf %6, %916 : vector<1x32xf32>
    %918 = vector.broadcast %915 : vector<1x32xf32> to vector<8x32xf32>
    %919 = arith.mulf %897, %918 : vector<8x32xf32>
    %920 = vector.broadcast %917 : vector<1x32xf32> to vector<8x32xf32>
    %921 = arith.addf %919, %920 : vector<8x32xf32>
    %922 = arith.addf %921, %869 : vector<8x32xf32>
    %cst_233 = arith.constant 0.000000e+00 : f32
    %923 = vector.broadcast %cst_233 : f32 to vector<8x32xf32>
    %924 = arith.maximumf %922, %923 : vector<8x32xf32>
    %cst_234 = arith.constant dense<0.000000e+00> : vector<8x3xf32>
    %925 = tpu.matmul %924, %7, %cst_234 {dimension_numbers = #tpu.dot_dimension_numbers<[1], [1], [0], [0], [0, 0, 1, 0], [], []>} : vector<8x32xf32>, vector<3x32xf32>, vector<8x3xf32> -> vector<8x3xf32>
    %926 = vector.extract_strided_slice %925 {offsets = [0, 0], sizes = [8, 2], strides = [1, 1]} : vector<8x3xf32> to vector<8x2xf32>
    %927 = vector.broadcast %8 : vector<1x2xf32> to vector<8x2xf32>
    %928 = arith.addf %926, %927 : vector<8x2xf32>
    %cst_235 = arith.constant 0.000000e+00 : f32
    %929 = vector.broadcast %cst_235 : f32 to vector<8x2xf32>
    %930 = arith.maximumf %928, %929 : vector<8x2xf32>
    %931 = vector.extract_strided_slice %925 {offsets = [0, 2], sizes = [8, 1], strides = [1, 1]} : vector<8x3xf32> to vector<8x1xf32>
    %932 = vector.broadcast %9 : vector<1x1xf32> to vector<8x1xf32>
    %933 = arith.addf %931, %932 : vector<8x1xf32>
    %cst_236 = arith.constant 0.000000e+00 : f32
    %934 = vector.broadcast %cst_236 : f32 to vector<8x1xf32>
    %935 = arith.maximumf %933, %934 : vector<8x1xf32>
    %936 = vector.extract_strided_slice %930 {offsets = [0, 0], sizes = [8, 1], strides = [1, 1]} : vector<8x2xf32> to vector<8x1xf32>
    %937 = vector.broadcast %936 : vector<8x1xf32> to vector<8x9xf32>
    %938 = vector.broadcast %13 : vector<1x9xf32> to vector<8x9xf32>
    %939 = arith.mulf %937, %938 : vector<8x9xf32>
    %940 = vector.extract_strided_slice %930 {offsets = [0, 1], sizes = [8, 1], strides = [1, 1]} : vector<8x2xf32> to vector<8x1xf32>
    %941 = vector.broadcast %940 : vector<8x1xf32> to vector<8x9xf32>
    %942 = vector.broadcast %14 : vector<1x9xf32> to vector<8x9xf32>
    %943 = arith.mulf %941, %942 : vector<8x9xf32>
    %944 = arith.addf %939, %943 : vector<8x9xf32>
    %945 = vector.broadcast %12 : vector<1x9xf32> to vector<8x9xf32>
    %946 = arith.addf %944, %945 : vector<8x9xf32>
    %cst_237 = arith.constant dense<0xFF800000> : vector<8xf32>
    %947 = vector.multi_reduction <maximumf>, %946, %cst_237 [1] : vector<8x9xf32> to vector<8xf32>
    %948 = vector.shape_cast %947 : vector<8xf32> to vector<8x1xf32>
    %949 = vector.broadcast %948 : vector<8x1xf32> to vector<8x9xf32>
    %950 = arith.subf %946, %949 : vector<8x9xf32>
    %951 = math.exp %950 : vector<8x9xf32>
    %cst_238 = arith.constant dense<0.000000e+00> : vector<8xf32>
    %952 = vector.multi_reduction <add>, %951, %cst_238 [1] : vector<8x9xf32> to vector<8xf32>
    %953 = vector.shape_cast %952 : vector<8xf32> to vector<8x1xf32>
    %954 = vector.broadcast %953 : vector<8x1xf32> to vector<8x9xf32>
    %955 = arith.divf %951, %954 : vector<8x9xf32>
    %956 = vector.broadcast %10 : vector<1x1xf32> to vector<8x1xf32>
    %957 = arith.mulf %935, %956 : vector<8x1xf32>
    %958 = vector.broadcast %11 : vector<1x1xf32> to vector<8x1xf32>
    %959 = arith.addf %957, %958 : vector<8x1xf32>
    %960 = math.tanh %959 : vector<8x1xf32>
    %cst_239 = arith.constant 0.000000e+00 : f32
    %961 = vector.broadcast %cst_239 : f32 to vector<8x118xf32>
    %962 = tpu.concatenate %955, %960, %961 in 1 : vector<8x9xf32>, vector<8x1xf32>, vector<8x118xf32> -> vector<8x128xf32>
    %c0_240 = arith.constant 0 : index
    %c0_241 = arith.constant 0 : index
    %963 = vector.load %arg3[%c0_240, %c0_241] : memref<8x128xf32, #tpu.memory_space<vmem>>, vector<8x128xf32>
    tpu.vector_store %arg3[%c0_240, %c0_241], %962 {strides = array<i32>} : memref<8x128xf32, #tpu.memory_space<vmem>>, vector<8x128xf32>,
    return
  }
}

</mosaic_0001>

<llo_original>
// kernel: net_forward.1
$region0: #{net_forward.1}
  #allocation0 [shape = 'u32[]', space=smem, size = 0x4, offset = 0x4, fixed_abs, tag = 'smem constant byte address 0x4 - core index']
  #allocation1 [shape = 'u32[144,128]{1,0:T(1,128)}', space=vmem, size = 0x12000, scoped, tag = 'internal scratch']
  %s0 = inlined_call_operand.vmem [shape: f32[8,1], index: 0, kind: input, shape index: {}]
  %s1 = inlined_call_operand.vmem [shape: f32[12,32], index: 1, kind: input, shape index: {}]
  %s2 = inlined_call_operand.hbm [shape: f32[32,32], index: 2, kind: input, shape index: {}]
  %s3 = inlined_call_operand.vmem [shape: f32[8,128], index: 3, kind: output, shape index: {}]
  %s4 = sld [smem:[#allocation0]]
  $region26: #{net_forward.1} parent=0
    _
  %s6 = ssub.s32 1, %s4
  %s7 = scalar_select 0, %s6, %s4
  $region1: #{net_forward.1} parent=0
    #allocation2 [shape = 'u8[16384]{0}', space=vmem, size = 0x4000, scoped, tag = 'input window, operand 2, single buffered']
    #allocation3 [shape = 's32[1]{0}', space=sflag, size = 0x4, scoped, tag = 'scoped memory for net_forward.1']
    %8 = vsyncpa [#allocation3], 0
    // Predicated region
    $region2: #{net_forward.1} parent=1 // pred_check
      _
    $region3: #{net_forward.1} parent=1 // pred_check_branch
      %10 = sbr.rel (0) target = $region5
    $region4: #{net_forward.1} parent=1 // pred_region
      _
    $region5: #{net_forward.1} parent=1 // pred_fallthru
      _
    // Predicated region
    $region6: #{net_forward.1} parent=1 // pred_check
      _
    $region7: #{net_forward.1} parent=1 // pred_check_branch
      %12 = sbr.rel (0) target = $region9
    $region8: #{net_forward.1} parent=1 // pred_region
      _
    $region9: #{net_forward.1} parent=1 // pred_fallthru
      _
    // Predicated region
    $region10: #{net_forward.1} parent=1 // pred_check
      _
    $region11: #{net_forward.1} parent=1 // pred_check_branch
      %14 = sbr.rel (0) target = $region13
    $region12: #{net_forward.1} parent=1 // pred_region
      %s16 = ssub.s32 512, 512
      %17 = vsyncadd [#allocation3], %s16
      %s18 = sshll.u32 [#allocation2], 4
      %s19 = int_to_ptr.vmem [resolvable:$true] %s18
      %24 = dma.hbm_to_vmem [thread:$0]  %s2, 512, %s19, [#allocation3], 128, 128, 8
    $region13: #{net_forward.1} parent=1 // pred_fallthru
      _
    // Predicated region
    $region14: #{net_forward.1} parent=1 // pred_check
      _
    $region15: #{net_forward.1} parent=1 // pred_check_branch
      %26 = sbr.rel (0) target = $region17
    $region16: #{net_forward.1} parent=1 // pred_region
      %27 = dma.done [#allocation3], 512
    $region17: #{net_forward.1} parent=1 // pred_fallthru
      _
    %v28 = vld [vmem:[%s0] sm:$0xff]
    %v29 = vld [vmem:[%s1] sm:$0xff]
    %v30 = vld [vmem:[%s1 + $0x8] sm:$0xf]
    %32 = vset.pattern.permute.xlu0 0
    %33 = vperm.xlu0 %32, %v28
    %v34 = vpop.permute.xlu0 %33
    %v36 = vlaneseq
    %v37 = vshrl.u32 %v36, 7
    %v38 = vsub.s32 0, %v37
    %v39 = vrot.slane %v29, %v38
    %v40 = vmul.f32 %v34, %v39
    %v41 = vmul.f32 %v40, %v40
    %43 = vrot.lane.b32.xlu0 %v41, 32
    %v44 = vpop.permute.xlu0 %43
    %vm46 = vcmask 261120
    %v47 = vsel %vm46, %v40, %v44
    %vm48 = vcmask 523264
    %v49 = vsel %vm48, %v47, 0.0
    %v50 = vrot.slane %v49, 4
    %v51 = vadd.f32 %v49, %v50
    %v52 = vrot.slane %v51, 2
    %v53 = vadd.f32 %v51, %v52
    %v54 = vrot.slane %v53, 1
    %v55 = vadd.f32 %v53, %v54
    %v56 = vmul.f32 %v55, 0.125
    %v57 = vmul.f32 %v56, %v56
    %59 = vrot.lane.b32.xlu0 %v57, 32
    %v60 = vpop.permute.xlu0 %59
    %v62 = vsub.f32 %v56, %v60
    %v63 = vmax.f32 %v62, 0.0
    %v64 = vadd.f32 %v63, 1e-05
    %v65 = vrsqrt.pop %v64
    %v67 = vrot.slane %v65, 7
    %68 = vrot.lane.b32.xlu0 %v67, 96
    %v69 = vpop.permute.xlu0 %68
    %v71 = vmul.f32 %v29, %v69
    %v72 = vmul.f32 %v56, %v71
    %v74 = vrot.slane %v72, 7
    %v76 = vsub.f32 %v29, %v74
    %v77 = vlaneseq
    %v78 = vshrl.u32 %v77, 7
    %v79 = vsub.s32 1, %v78
    %v80 = vrot.slane %v71, %v79
    %v81 = vmul.f32 %v40, %v80
    %v82 = vlaneseq
    %v83 = vshrl.u32 %v82, 7
    %v84 = vsub.s32 2, %v83
    %v85 = vrot.slane %v76, %v84
    %v86 = vadd.f32 %v81, %v85
    %v87 = vmax.f32 %v86, 0.0
    %v88 = vld [vmem:[#allocation2] sm:$0xff]
    %v89 = vld [vmem:[#allocation2 + $0x8] sm:$0xff]
    %v90 = vld [vmem:[#allocation2 + $0x10] sm:$0xff]
    %v91 = vld [vmem:[#allocation2 + $0x18] sm:$0xff]
    %v93 = vsel %vm46, %v87, 0
    %95 = vmatprep.subr.mxu0 0.0
    %96 = vmatpush1.msra.mxu0 %v88
    %97 = vmatprep.subr.mxu0 0.0
    %98 = vmatpush1.msra.mxu0 %v89
    %99 = vmatprep.subr.mxu0 0.0
    %100 = vmatpush1.msra.mxu0 %v90
    %101 = vmatprep.subr.mxu0 0.0
    %102 = vmatpush1.msra.mxu0 %v91
    %103 = vmatprep.subr.mxu0 0.0
    %104 = vmatpush1.msra.mxu0 0.0
    %105 = vmatprep.subr.mxu0 0.0
    %106 = vmatpush1.msra.mxu0 0.0
    %107 = vmatprep.subr.mxu0 0.0
    %108 = vmatpush1.msra.mxu0 0.0
    %109 = vmatprep.subr.mxu0 0.0
    %110 = vmatpush1.msra.mxu0 0.0
    %111 = vmatprep.subr.mxu0 0.0
    %112 = vmatpush1.msra.mxu0 0.0
    %113 = vmatprep.subr.mxu0 0.0
    %114 = vmatpush1.msra.mxu0 0.0
    %115 = vmatprep.subr.mxu0 0.0
    %116 = vmatpush1.msra.mxu0 0.0
    %117 = vmatprep.subr.mxu0 0.0
    %118 = vmatpush1.msra.mxu0 0.0
    %119 = vmatprep.subr.mxu0 0.0
    %120 = vmatpush1.msra.mxu0 0.0
    %121 = vmatprep.subr.mxu0 0.0
    %122 = vmatpush1.msra.mxu0 0.0
    %123 = vmatprep.subr.mxu0 0.0
    %124 = vmatpush1.msra.mxu0 0.0
    %125 = vmatprep.subr.mxu0 0.0
    %126 = vmatpush1.msra.mxu0 0.0
    %127 = vmatprep.subr.mxu0 0.0
    %128 = vmatpush1.msra.mxu0 0.0
    %129 = vmatprep.subr.mxu0 0.0
    %130 = vmatpush1.msra.mxu0 0.0
    %131 = vmatprep.subr.mxu0 0.0
    %132 = vmatpush1.msra.mxu0 0.0
    %133 = vmatprep.subr.mxu0 0.0
    %134 = vmatpush1.msra.mxu0 0.0
    %135 = vmatprep.subr.mxu0 0.0
    %136 = vmatpush1.msra.mxu0 0.0
    %137 = vmatprep.subr.mxu0 0.0
    %138 = vmatpush1.msra.mxu0 0.0
    %139 = vmatprep.subr.mxu0 0.0
    %140 = vmatpush1.msra.mxu0 0.0
    %141 = vmatprep.subr.mxu0 0.0
    %142 = vmatpush1.msra.mxu0 0.0
    %143 = vmatprep.subr.mxu0 0.0
    %144 = vmatpush1.msra.mxu0 0.0
    %145 = vmatprep.subr.mxu0 0.0
    %146 = vmatpush1.msra.mxu0 0.0
    %147 = vmatprep.subr.mxu0 0.0
    %148 = vmatpush1.msra.mxu0 0.0
    %149 = vmatprep.subr.mxu0 0.0
    %150 = vmatpush1.msra.mxu0 0.0
    %151 = vmatprep.subr.mxu0 0.0
    %152 = vmatpush1.msra.mxu0 0.0
    %153 = vmatprep.subr.mxu0 0.0
    %154 = vmatpush1.msra.mxu0 0.0
    %155 = vmatprep.subr.mxu0 0.0
    %156 = vmatpush1.msra.mxu0 0.0
    %157 = vmatprep.subr.mxu0 0.0
    %158 = vmatpush1.msra.mxu0 0.0
    %159 = vmatprep.mubr.f32.mxu0 0.0
    %160 = vmatmul.mubr.f32.gmra.mrb[0].mxu0 %v93
    %v161 = vpop.f32.mrb[0].mxu0
    %v162 = vadd.f32 0.0, %v161
    %v163 = vpop.f32.mrb[0].mxu0
    %164 = vdwg.mxu0
    %v165 = vmul.f32 %v162, %v162
    %167 = vrot.lane.b32.xlu0 %v165, 32
    %v168 = vpop.permute.xlu0 %167
    %v170 = vsel %vm46, %v162, %v168
    %v171 = vsel %vm48, %v170, 0.0
    %v172 = vrot.slane %v171, 4
    %v173 = vadd.f32 %v171, %v172
    %v174 = vrot.slane %v173, 2
    %v175 = vadd.f32 %v173, %v174
    %v176 = vrot.slane %v175, 1
    %v177 = vadd.f32 %v175, %v176
    %v178 = vmul.f32 %v177, 0.125
    %v179 = vmul.f32 %v178, %v178
    %181 = vrot.lane.b32.xlu0 %v179, 32
    %v182 = vpop.permute.xlu0 %181
    %v184 = vsub.f32 %v178, %v182
    %v185 = vmax.f32 %v184, 0.0
    %v186 = vadd.f32 %v185, 1e-05
    %v187 = vrsqrt.pop %v186
    %v189 = vrot.slane %v187, 5
    %190 = vrot.lane.b32.xlu0 %v189, 96
    %v191 = vpop.permute.xlu0 %190
    %v193 = vmul.f32 %v29, %v191
    %v194 = vmul.f32 %v178, %v193
    %v196 = vrot.slane %v194, 7
    %v198 = vsub.f32 %v29, %v196
    %v199 = vlaneseq
    %v200 = vshrl.u32 %v199, 7
    %v201 = vsub.s32 3, %v200
    %v202 = vrot.slane %v193, %v201
    %v203 = vmul.f32 %v162, %v202
    %v204 = vlaneseq
    %v205 = vshrl.u32 %v204, 7
    %v206 = vsub.s32 4, %v205
    %v207 = vrot.slane %v198, %v206
    %v208 = vadd.f32 %v203, %v207
    %v209 = vmax.f32 %v208, 0.0
    %v211 = vsel %vm46, %v209, 0
    %213 = vmatprep.subr.mxu0 0.0
    %214 = vmatpush1.msra.mxu0 %v88
    %215 = vmatprep.subr.mxu0 0.0
    %216 = vmatpush1.msra.mxu0 %v89
    %217 = vmatprep.subr.mxu0 0.0
    %218 = vmatpush1.msra.mxu0 %v90
    %219 = vmatprep.subr.mxu0 0.0
    %220 = vmatpush1.msra.mxu0 %v91
    %221 = vmatprep.subr.mxu0 0.0
    %222 = vmatpush1.msra.mxu0 0.0
    %223 = vmatprep.subr.mxu0 0.0
    %224 = vmatpush1.msra.mxu0 0.0
    %225 = vmatprep.subr.mxu0 0.0
    %226 = vmatpush1.msra.mxu0 0.0
    %227 = vmatprep.subr.mxu0 0.0
    %228 = vmatpush1.msra.mxu0 0.0
    %229 = vmatprep.subr.mxu0 0.0
    %230 = vmatpush1.msra.mxu0 0.0
    %231 = vmatprep.subr.mxu0 0.0
    %232 = vmatpush1.msra.mxu0 0.0
    %233 = vmatprep.subr.mxu0 0.0
    %234 = vmatpush1.msra.mxu0 0.0
    %235 = vmatprep.subr.mxu0 0.0
    %236 = vmatpush1.msra.mxu0 0.0
    %237 = vmatprep.subr.mxu0 0.0
    %238 = vmatpush1.msra.mxu0 0.0
    %239 = vmatprep.subr.mxu0 0.0
    %240 = vmatpush1.msra.mxu0 0.0
    %241 = vmatprep.subr.mxu0 0.0
    %242 = vmatpush1.msra.mxu0 0.0
    %243 = vmatprep.subr.mxu0 0.0
    %244 = vmatpush1.msra.mxu0 0.0
    %245 = vmatprep.subr.mxu0 0.0
    %246 = vmatpush1.msra.mxu0 0.0
    %247 = vmatprep.subr.mxu0 0.0
    %248 = vmatpush1.msra.mxu0 0.0
    %249 = vmatprep.subr.mxu0 0.0
    %250 = vmatpush1.msra.mxu0 0.0
    %251 = vmatprep.subr.mxu0 0.0
    %252 = vmatpush1.msra.mxu0 0.0
    %253 = vmatprep.subr.mxu0 0.0
    %254 = vmatpush1.msra.mxu0 0.0
    %255 = vmatprep.subr.mxu0 0.0
    %256 = vmatpush1.msra.mxu0 0.0
    %257 = vmatprep.subr.mxu0 0.0
    %258 = vmatpush1.msra.mxu0 0.0
    %259 = vmatprep.subr.mxu0 0.0
    %260 = vmatpush1.msra.mxu0 0.0
    %261 = vmatprep.subr.mxu0 0.0
    %262 = vmatpush1.msra.mxu0 0.0
    %263 = vmatprep.subr.mxu0 0.0
    %264 = vmatpush1.msra.mxu0 0.0
    %265 = vmatprep.subr.mxu0 0.0
    %266 = vmatpush1.msra.mxu0 0.0
    %267 = vmatprep.subr.mxu0 0.0
    %268 = vmatpush1.msra.mxu0 0.0
    %269 = vmatprep.subr.mxu0 0.0
    %270 = vmatpush1.msra.mxu0 0.0
    %271 = vmatprep.subr.mxu0 0.0
    %272 = vmatpush1.msra.mxu0 0.0
    %273 = vmatprep.subr.mxu0 0.0
    %274 = vmatpush1.msra.mxu0 0.0
    %275 = vmatprep.subr.mxu0 0.0
    %276 = vmatpush1.msra.mxu0 0.0
    %277 = vmatprep.mubr.f32.mxu0 0.0
    %278 = vmatmul.mubr.f32.gmra.mrb[0].mxu0 %v211
    %v279 = vpop.f32.mrb[0].mxu0
    %v280 = vadd.f32 0.0, %v279
    %v281 = vpop.f32.mrb[0].mxu0
    %282 = vdwg.mxu0
    %v283 = vmul.f32 %v280, %v280
    %285 = vrot.lane.b32.xlu0 %v283, 32
    %v286 = vpop.permute.xlu0 %285
    %v288 = vsel %vm46, %v280, %v286
    %v289 = vsel %vm48, %v288, 0.0
    %v290 = vrot.slane %v289, 4
    %v291 = vadd.f32 %v289, %v290
    %v292 = vrot.slane %v291, 2
    %v293 = vadd.f32 %v291, %v292
    %v294 = vrot.slane %v293, 1
    %v295 = vadd.f32 %v293, %v294
    %v296 = vmul.f32 %v295, 0.125
    %v297 = vmul.f32 %v296, %v296
    %299 = vrot.lane.b32.xlu0 %v297, 32
    %v300 = vpop.permute.xlu0 %299
    %v302 = vsub.f32 %v296, %v300
    %v303 = vmax.f32 %v302, 0.0
    %v304 = vadd.f32 %v303, 1e-05
    %v305 = vrsqrt.pop %v304
    %v307 = vrot.slane %v305, 5
    %308 = vrot.lane.b32.xlu0 %v307, 96
    %v309 = vpop.permute.xlu0 %308
    %v311 = vmul.f32 %v29, %v309
    %v312 = vmul.f32 %v296, %v311
    %v314 = vrot.slane %v312, 7
    %v316 = vsub.f32 %v29, %v314
    %v317 = vlaneseq
    %v318 = vshrl.u32 %v317, 7
    %v319 = vsub.s32 3, %v318
    %v320 = vrot.slane %v311, %v319
    %v321 = vmul.f32 %v280, %v320
    %v322 = vlaneseq
    %v323 = vshrl.u32 %v322, 7
    %v324 = vsub.s32 4, %v323
    %v325 = vrot.slane %v316, %v324
    %v326 = vadd.f32 %v321, %v325
    %v327 = vadd.f32 %v326, %v87
    %v328 = vmax.f32 %v327, 0.0
    %v330 = vsel %vm46, %v328, 0
    %332 = vmatprep.subr.mxu0 0.0
    %333 = vmatpush1.msra.mxu0 %v88
    %334 = vmatprep.subr.mxu0 0.0
    %335 = vmatpush1.msra.mxu0 %v89
    %336 = vmatprep.subr.mxu0 0.0
    %337 = vmatpush1.msra.mxu0 %v90
    %338 = vmatprep.subr.mxu0 0.0
    %339 = vmatpush1.msra.mxu0 %v91
    %340 = vmatprep.subr.mxu0 0.0
    %341 = vmatpush1.msra.mxu0 0.0
    %342 = vmatprep.subr.mxu0 0.0
    %343 = vmatpush1.msra.mxu0 0.0
    %344 = vmatprep.subr.mxu0 0.0
    %345 = vmatpush1.msra.mxu0 0.0
    %346 = vmatprep.subr.mxu0 0.0
    %347 = vmatpush1.msra.mxu0 0.0
    %348 = vmatprep.subr.mxu0 0.0
    %349 = vmatpush1.msra.mxu0 0.0
    %350 = vmatprep.subr.mxu0 0.0
    %351 = vmatpush1.msra.mxu0 0.0
    %352 = vmatprep.subr.mxu0 0.0
    %353 = vmatpush1.msra.mxu0 0.0
    %354 = vmatprep.subr.mxu0 0.0
    %355 = vmatpush1.msra.mxu0 0.0
    %356 = vmatprep.subr.mxu0 0.0
    %357 = vmatpush1.msra.mxu0 0.0
    %358 = vmatprep.subr.mxu0 0.0
    %359 = vmatpush1.msra.mxu0 0.0
    %360 = vmatprep.subr.mxu0 0.0
    %361 = vmatpush1.msra.mxu0 0.0
    %362 = vmatprep.subr.mxu0 0.0
    %363 = vmatpush1.msra.mxu0 0.0
    %364 = vmatprep.subr.mxu0 0.0
    %365 = vmatpush1.msra.mxu0 0.0
    %366 = vmatprep.subr.mxu0 0.0
    %367 = vmatpush1.msra.mxu0 0.0
    %368 = vmatprep.subr.mxu0 0.0
    %369 = vmatpush1.msra.mxu0 0.0
    %370 = vmatprep.subr.mxu0 0.0
    %371 = vmatpush1.msra.mxu0 0.0
    %372 = vmatprep.subr.mxu0 0.0
    %373 = vmatpush1.msra.mxu0 0.0
    %374 = vmatprep.subr.mxu0 0.0
    %375 = vmatpush1.msra.mxu0 0.0
    %376 = vmatprep.subr.mxu0 0.0
    %377 = vmatpush1.msra.mxu0 0.0
    %378 = vmatprep.subr.mxu0 0.0
    %379 = vmatpush1.msra.mxu0 0.0
    %380 = vmatprep.subr.mxu0 0.0
    %381 = vmatpush1.msra.mxu0 0.0
    %382 = vmatprep.subr.mxu0 0.0
    %383 = vmatpush1.msra.mxu0 0.0
    %384 = vmatprep.subr.mxu0 0.0
    %385 = vmatpush1.msra.mxu0 0.0
    %386 = vmatprep.subr.mxu0 0.0
    %387 = vmatpush1.msra.mxu0 0.0
    %388 = vmatprep.subr.mxu0 0.0
    %389 = vmatpush1.msra.mxu0 0.0
    %390 = vmatprep.subr.mxu0 0.0
    %391 = vmatpush1.msra.mxu0 0.0
    %392 = vmatprep.subr.mxu0 0.0
    %393 = vmatpush1.msra.mxu0 0.0
    %394 = vmatprep.subr.mxu0 0.0
    %395 = vmatpush1.msra.mxu0 0.0
    %396 = vmatprep.mubr.f32.mxu0 0.0
    %397 = vmatmul.mubr.f32.gmra.mrb[0].mxu0 %v330
    %v398 = vpop.f32.mrb[0].mxu0
    %v399 = vadd.f32 0.0, %v398
    %v400 = vpop.f32.mrb[0].mxu0
    %401 = vdwg.mxu0
    %v402 = vmul.f32 %v399, %v399
    %404 = vrot.lane.b32.xlu0 %v402, 32
    %v405 = vpop.permute.xlu0 %404
    %v407 = vsel %vm46, %v399, %v405
    %v408 = vsel %vm48, %v407, 0.0
    %v409 = vrot.slane %v408, 4
    %v410 = vadd.f32 %v408, %v409
    %v411 = vrot.slane %v410, 2
    %v412 = vadd.f32 %v410, %v411
    %v413 = vrot.slane %v412, 1
    %v414 = vadd.f32 %v412, %v413
    %v415 = vmul.f32 %v414, 0.125
    %v416 = vmul.f32 %v415, %v415
    %418 = vrot.lane.b32.xlu0 %v416, 32
    %v419 = vpop.permute.xlu0 %418
    %v421 = vsub.f32 %v415, %v419
    %v422 = vmax.f32 %v421, 0.0
    %v423 = vadd.f32 %v422, 1e-05
    %v424 = vrsqrt.pop %v423
    %v426 = vrot.slane %v424, 5
    %427 = vrot.lane.b32.xlu0 %v426, 96
    %v428 = vpop.permute.xlu0 %427
    %v430 = vmul.f32 %v29, %v428
    %v431 = vmul.f32 %v415, %v430
    %v433 = vrot.slane %v431, 7
    %v435 = vsub.f32 %v29, %v433
    %v436 = vlaneseq
    %v437 = vshrl.u32 %v436, 7
    %v438 = vsub.s32 3, %v437
    %v439 = vrot.slane %v430, %v438
    %v440 = vmul.f32 %v399, %v439
    %v441 = vlaneseq
    %v442 = vshrl.u32 %v441, 7
    %v443 = vsub.s32 4, %v442
    %v444 = vrot.slane %v435, %v443
    %v445 = vadd.f32 %v440, %v444
    %v446 = vmax.f32 %v445, 0.0
    %v448 = vsel %vm46, %v446, 0
    %450 = vmatprep.subr.mxu0 0.0
    %451 = vmatpush1.msra.mxu0 %v88
    %452 = vmatprep.subr.mxu0 0.0
    %453 = vmatpush1.msra.mxu0 %v89
    %454 = vmatprep.subr.mxu0 0.0
    %455 = vmatpush1.msra.mxu0 %v90
    %456 = vmatprep.subr.mxu0 0.0
    %457 = vmatpush1.msra.mxu0 %v91
    %458 = vmatprep.subr.mxu0 0.0
    %459 = vmatpush1.msra.mxu0 0.0
    %460 = vmatprep.subr.mxu0 0.0
    %461 = vmatpush1.msra.mxu0 0.0
    %462 = vmatprep.subr.mxu0 0.0
    %463 = vmatpush1.msra.mxu0 0.0
    %464 = vmatprep.subr.mxu0 0.0
    %465 = vmatpush1.msra.mxu0 0.0
    %466 = vmatprep.subr.mxu0 0.0
    %467 = vmatpush1.msra.mxu0 0.0
    %468 = vmatprep.subr.mxu0 0.0
    %469 = vmatpush1.msra.mxu0 0.0
    %470 = vmatprep.subr.mxu0 0.0
    %471 = vmatpush1.msra.mxu0 0.0
    %472 = vmatprep.subr.mxu0 0.0
    %473 = vmatpush1.msra.mxu0 0.0
    %474 = vmatprep.subr.mxu0 0.0
    %475 = vmatpush1.msra.mxu0 0.0
    %476 = vmatprep.subr.mxu0 0.0
    %477 = vmatpush1.msra.mxu0 0.0
    %478 = vmatprep.subr.mxu0 0.0
    %479 = vmatpush1.msra.mxu0 0.0
    %480 = vmatprep.subr.mxu0 0.0
    %481 = vmatpush1.msra.mxu0 0.0
    %482 = vmatprep.subr.mxu0 0.0
    %483 = vmatpush1.msra.mxu0 0.0
    %484 = vmatprep.subr.mxu0 0.0
    %485 = vmatpush1.msra.mxu0 0.0
    %486 = vmatprep.subr.mxu0 0.0
    %487 = vmatpush1.msra.mxu0 0.0
    %488 = vmatprep.subr.mxu0 0.0
    %489 = vmatpush1.msra.mxu0 0.0
    %490 = vmatprep.subr.mxu0 0.0
    %491 = vmatpush1.msra.mxu0 0.0
    %492 = vmatprep.subr.mxu0 0.0
    %493 = vmatpush1.msra.mxu0 0.0
    %494 = vmatprep.subr.mxu0 0.0
    %495 = vmatpush1.msra.mxu0 0.0
    %496 = vmatprep.subr.mxu0 0.0
    %497 = vmatpush1.msra.mxu0 0.0
    %498 = vmatprep.subr.mxu0 0.0
    %499 = vmatpush1.msra.mxu0 0.0
    %500 = vmatprep.subr.mxu0 0.0
    %501 = vmatpush1.msra.mxu0 0.0
    %502 = vmatprep.subr.mxu0 0.0
    %503 = vmatpush1.msra.mxu0 0.0
    %504 = vmatprep.subr.mxu0 0.0
    %505 = vmatpush1.msra.mxu0 0.0
    %506 = vmatprep.subr.mxu0 0.0
    %507 = vmatpush1.msra.mxu0 0.0
    %508 = vmatprep.subr.mxu0 0.0
    %509 = vmatpush1.msra.mxu0 0.0
    %510 = vmatprep.subr.mxu0 0.0
    %511 = vmatpush1.msra.mxu0 0.0
    %512 = vmatprep.subr.mxu0 0.0
    %513 = vmatpush1.msra.mxu0 0.0
    %514 = vmatprep.mubr.f32.mxu0 0.0
    %515 = vmatmul.mubr.f32.gmra.mrb[0].mxu0 %v448
    %v516 = vpop.f32.mrb[0].mxu0
    %v517 = vadd.f32 0.0, %v516
    %v518 = vpop.f32.mrb[0].mxu0
    %519 = vdwg.mxu0
    %v520 = vmul.f32 %v517, %v517
    %522 = vrot.lane.b32.xlu0 %v520, 32
    %v523 = vpop.permute.xlu0 %522
    %v525 = vsel %vm46, %v517, %v523
    %v526 = vsel %vm48, %v525, 0.0
    %v527 = vrot.slane %v526, 4
    %v528 = vadd.f32 %v526, %v527
    %v529 = vrot.slane %v528, 2
    %v530 = vadd.f32 %v528, %v529
    %v531 = vrot.slane %v530, 1
    %v532 = vadd.f32 %v530, %v531
    %v533 = vmul.f32 %v532, 0.125
    %v534 = vmul.f32 %v533, %v533
    %536 = vrot.lane.b32.xlu0 %v534, 32
    %v537 = vpop.permute.xlu0 %536
    %v539 = vsub.f32 %v533, %v537
    %v540 = vmax.f32 %v539, 0.0
    %v541 = vadd.f32 %v540, 1e-05
    %v542 = vrsqrt.pop %v541
    %v544 = vrot.slane %v542, 5
    %545 = vrot.lane.b32.xlu0 %v544, 96
    %v546 = vpop.permute.xlu0 %545
    %v548 = vmul.f32 %v29, %v546
    %v549 = vmul.f32 %v533, %v548
    %v551 = vrot.slane %v549, 7
    %v553 = vsub.f32 %v29, %v551
    %v554 = vlaneseq
    %v555 = vshrl.u32 %v554, 7
    %v556 = vsub.s32 3, %v555
    %v557 = vrot.slane %v548, %v556
    %v558 = vmul.f32 %v517, %v557
    %v559 = vlaneseq
    %v560 = vshrl.u32 %v559, 7
    %v561 = vsub.s32 4, %v560
    %v562 = vrot.slane %v553, %v561
    %v563 = vadd.f32 %v558, %v562
    %v564 = vadd.f32 %v563, %v328
    %v565 = vmax.f32 %v564, 0.0
    %v567 = vsel %vm46, %v565, 0
    %569 = vmatprep.subr.mxu0 0.0
    %570 = vmatpush1.msra.mxu0 %v88
    %571 = vmatprep.subr.mxu0 0.0
    %572 = vmatpush1.msra.mxu0 %v89
    %573 = vmatprep.subr.mxu0 0.0
    %574 = vmatpush1.msra.mxu0 %v90
    %575 = vmatprep.subr.mxu0 0.0
    %576 = vmatpush1.msra.mxu0 %v91
    %577 = vmatprep.subr.mxu0 0.0
    %578 = vmatpush1.msra.mxu0 0.0
    %579 = vmatprep.subr.mxu0 0.0
    %580 = vmatpush1.msra.mxu0 0.0
    %581 = vmatprep.subr.mxu0 0.0
    %582 = vmatpush1.msra.mxu0 0.0
    %583 = vmatprep.subr.mxu0 0.0
    %584 = vmatpush1.msra.mxu0 0.0
    %585 = vmatprep.subr.mxu0 0.0
    %586 = vmatpush1.msra.mxu0 0.0
    %587 = vmatprep.subr.mxu0 0.0
    %588 = vmatpush1.msra.mxu0 0.0
    %589 = vmatprep.subr.mxu0 0.0
    %590 = vmatpush1.msra.mxu0 0.0
    %591 = vmatprep.subr.mxu0 0.0
    %592 = vmatpush1.msra.mxu0 0.0
    %593 = vmatprep.subr.mxu0 0.0
    %594 = vmatpush1.msra.mxu0 0.0
    %595 = vmatprep.subr.mxu0 0.0
    %596 = vmatpush1.msra.mxu0 0.0
    %597 = vmatprep.subr.mxu0 0.0
    %598 = vmatpush1.msra.mxu0 0.0
    %599 = vmatprep.subr.mxu0 0.0
    %600 = vmatpush1.msra.mxu0 0.0
    %601 = vmatprep.subr.mxu0 0.0
    %602 = vmatpush1.msra.mxu0 0.0
    %603 = vmatprep.subr.mxu0 0.0
    %604 = vmatpush1.msra.mxu0 0.0
    %605 = vmatprep.subr.mxu0 0.0
    %606 = vmatpush1.msra.mxu0 0.0
    %607 = vmatprep.subr.mxu0 0.0
    %608 = vmatpush1.msra.mxu0 0.0
    %609 = vmatprep.subr.mxu0 0.0
    %610 = vmatpush1.msra.mxu0 0.0
    %611 = vmatprep.subr.mxu0 0.0
    %612 = vmatpush1.msra.mxu0 0.0
    %613 = vmatprep.subr.mxu0 0.0
    %614 = vmatpush1.msra.mxu0 0.0
    %615 = vmatprep.subr.mxu0 0.0
    %616 = vmatpush1.msra.mxu0 0.0
    %617 = vmatprep.subr.mxu0 0.0
    %618 = vmatpush1.msra.mxu0 0.0
    %619 = vmatprep.subr.mxu0 0.0
    %620 = vmatpush1.msra.mxu0 0.0
    %621 = vmatprep.subr.mxu0 0.0
    %622 = vmatpush1.msra.mxu0 0.0
    %623 = vmatprep.subr.mxu0 0.0
    %624 = vmatpush1.msra.mxu0 0.0
    %625 = vmatprep.subr.mxu0 0.0
    %626 = vmatpush1.msra.mxu0 0.0
    %627 = vmatprep.subr.mxu0 0.0
    %628 = vmatpush1.msra.mxu0 0.0
    %629 = vmatprep.subr.mxu0 0.0
    %630 = vmatpush1.msra.mxu0 0.0
    %631 = vmatprep.subr.mxu0 0.0
    %632 = vmatpush1.msra.mxu0 0.0
    %633 = vmatprep.mubr.f32.mxu0 0.0
    %634 = vmatmul.mubr.f32.gmra.mrb[0].mxu0 %v567
    %v635 = vpop.f32.mrb[0].mxu0
    %v636 = vadd.f32 0.0, %v635
    %v637 = vpop.f32.mrb[0].mxu0
    %638 = vdwg.mxu0
    %v639 = vmul.f32 %v636, %v636
    %641 = vrot.lane.b32.xlu0 %v639, 32
    %v642 = vpop.permute.xlu0 %641
    %v644 = vsel %vm46, %v636, %v642
    %v645 = vsel %vm48, %v644, 0.0
    %v646 = vrot.slane %v645, 4
    %v647 = vadd.f32 %v645, %v646
    %v648 = vrot.slane %v647, 2
    %v649 = vadd.f32 %v647, %v648
    %v650 = vrot.slane %v649, 1
    %v651 = vadd.f32 %v649, %v650
    %v652 = vmul.f32 %v651, 0.125
    %v653 = vmul.f32 %v652, %v652
    %655 = vrot.lane.b32.xlu0 %v653, 32
    %v656 = vpop.permute.xlu0 %655
    %v658 = vsub.f32 %v652, %v656
    %v659 = vmax.f32 %v658, 0.0
    %v660 = vadd.f32 %v659, 1e-05
    %v661 = vrsqrt.pop %v660
    %v663 = vrot.slane %v661, 5
    %664 = vrot.lane.b32.xlu0 %v663, 96
    %v665 = vpop.permute.xlu0 %664
    %v667 = vmul.f32 %v29, %v665
    %v668 = vmul.f32 %v652, %v667
    %v670 = vrot.slane %v668, 7
    %v672 = vsub.f32 %v29, %v670
    %v673 = vlaneseq
    %v674 = vshrl.u32 %v673, 7
    %v675 = vsub.s32 3, %v674
    %v676 = vrot.slane %v667, %v675
    %v677 = vmul.f32 %v636, %v676
    %v678 = vlaneseq
    %v679 = vshrl.u32 %v678, 7
    %v680 = vsub.s32 4, %v679
    %v681 = vrot.slane %v672, %v680
    %v682 = vadd.f32 %v677, %v681
    %v683 = vmax.f32 %v682, 0.0
    %v685 = vsel %vm46, %v683, 0
    %687 = vmatprep.subr.mxu0 0.0
    %688 = vmatpush1.msra.mxu0 %v88
    %689 = vmatprep.subr.mxu0 0.0
    %690 = vmatpush1.msra.mxu0 %v89
    %691 = vmatprep.subr.mxu0 0.0
    %692 = vmatpush1.msra.mxu0 %v90
    %693 = vmatprep.subr.mxu0 0.0
    %694 = vmatpush1.msra.mxu0 %v91
    %695 = vmatprep.subr.mxu0 0.0
    %696 = vmatpush1.msra.mxu0 0.0
    %697 = vmatprep.subr.mxu0 0.0
    %698 = vmatpush1.msra.mxu0 0.0
    %699 = vmatprep.subr.mxu0 0.0
    %700 = vmatpush1.msra.mxu0 0.0
    %701 = vmatprep.subr.mxu0 0.0
    %702 = vmatpush1.msra.mxu0 0.0
    %703 = vmatprep.subr.mxu0 0.0
    %704 = vmatpush1.msra.mxu0 0.0
    %705 = vmatprep.subr.mxu0 0.0
    %706 = vmatpush1.msra.mxu0 0.0
    %707 = vmatprep.subr.mxu0 0.0
    %708 = vmatpush1.msra.mxu0 0.0
    %709 = vmatprep.subr.mxu0 0.0
    %710 = vmatpush1.msra.mxu0 0.0
    %711 = vmatprep.subr.mxu0 0.0
    %712 = vmatpush1.msra.mxu0 0.0
    %713 = vmatprep.subr.mxu0 0.0
    %714 = vmatpush1.msra.mxu0 0.0
    %715 = vmatprep.subr.mxu0 0.0
    %716 = vmatpush1.msra.mxu0 0.0
    %717 = vmatprep.subr.mxu0 0.0
    %718 = vmatpush1.msra.mxu0 0.0
    %719 = vmatprep.subr.mxu0 0.0
    %720 = vmatpush1.msra.mxu0 0.0
    %721 = vmatprep.subr.mxu0 0.0
    %722 = vmatpush1.msra.mxu0 0.0
    %723 = vmatprep.subr.mxu0 0.0
    %724 = vmatpush1.msra.mxu0 0.0
    %725 = vmatprep.subr.mxu0 0.0
    %726 = vmatpush1.msra.mxu0 0.0
    %727 = vmatprep.subr.mxu0 0.0
    %728 = vmatpush1.msra.mxu0 0.0
    %729 = vmatprep.subr.mxu0 0.0
    %730 = vmatpush1.msra.mxu0 0.0
    %731 = vmatprep.subr.mxu0 0.0
    %732 = vmatpush1.msra.mxu0 0.0
    %733 = vmatprep.subr.mxu0 0.0
    %734 = vmatpush1.msra.mxu0 0.0
    %735 = vmatprep.subr.mxu0 0.0
    %736 = vmatpush1.msra.mxu0 0.0
    %737 = vmatprep.subr.mxu0 0.0
    %738 = vmatpush1.msra.mxu0 0.0
    %739 = vmatprep.subr.mxu0 0.0
    %740 = vmatpush1.msra.mxu0 0.0
    %741 = vmatprep.subr.mxu0 0.0
    %742 = vmatpush1.msra.mxu0 0.0
    %743 = vmatprep.subr.mxu0 0.0
    %744 = vmatpush1.msra.mxu0 0.0
    %745 = vmatprep.subr.mxu0 0.0
    %746 = vmatpush1.msra.mxu0 0.0
    %747 = vmatprep.subr.mxu0 0.0
    %748 = vmatpush1.msra.mxu0 0.0
    %749 = vmatprep.subr.mxu0 0.0
    %750 = vmatpush1.msra.mxu0 0.0
    %751 = vmatprep.mubr.f32.mxu0 0.0
    %752 = vmatmul.mubr.f32.gmra.mrb[0].mxu0 %v685
    %v753 = vpop.f32.mrb[0].mxu0
    %v754 = vadd.f32 0.0, %v753
    %v755 = vpop.f32.mrb[0].mxu0
    %756 = vdwg.mxu0
    %v757 = vmul.f32 %v754, %v754
    %759 = vrot.lane.b32.xlu0 %v757, 32
    %v760 = vpop.permute.xlu0 %759
    %v762 = vsel %vm46, %v754, %v760
    %v763 = vsel %vm48, %v762, 0.0
    %v764 = vrot.slane %v763, 4
    %v765 = vadd.f32 %v763, %v764
    %v766 = vrot.slane %v765, 2
    %v767 = vadd.f32 %v765, %v766
    %v768 = vrot.slane %v767, 1
    %v769 = vadd.f32 %v767, %v768
    %v770 = vmul.f32 %v769, 0.125
    %v771 = vmul.f32 %v770, %v770
    %773 = vrot.lane.b32.xlu0 %v771, 32
    %v774 = vpop.permute.xlu0 %773
    %v776 = vsub.f32 %v770, %v774
    %v777 = vmax.f32 %v776, 0.0
    %v778 = vadd.f32 %v777, 1e-05
    %v779 = vrsqrt.pop %v778
    %v781 = vrot.slane %v779, 5
    %782 = vrot.lane.b32.xlu0 %v781, 96
    %v783 = vpop.permute.xlu0 %782
    %v785 = vmul.f32 %v29, %v783
    %v786 = vmul.f32 %v770, %v785
    %v788 = vrot.slane %v786, 7
    %v790 = vsub.f32 %v29, %v788
    %v791 = vlaneseq
    %v792 = vshrl.u32 %v791, 7
    %v793 = vsub.s32 3, %v792
    %v794 = vrot.slane %v785, %v793
    %v795 = vmul.f32 %v754, %v794
    %v796 = vlaneseq
    %v797 = vshrl.u32 %v796, 7
    %v798 = vsub.s32 4, %v797
    %v799 = vrot.slane %v790, %v798
    %v800 = vadd.f32 %v795, %v799
    %v801 = vadd.f32 %v800, %v565
    %v802 = vmax.f32 %v801, 0.0
    %v804 = vsel %vm46, %v802, 0
    %806 = vmatprep.subr.mxu0 0.0
    %807 = vmatpush1.msra.mxu0 %v88
    %808 = vmatprep.subr.mxu0 0.0
    %809 = vmatpush1.msra.mxu0 %v89
    %810 = vmatprep.subr.mxu0 0.0
    %811 = vmatpush1.msra.mxu0 %v90
    %812 = vmatprep.subr.mxu0 0.0
    %813 = vmatpush1.msra.mxu0 %v91
    %814 = vmatprep.subr.mxu0 0.0
    %815 = vmatpush1.msra.mxu0 0.0
    %816 = vmatprep.subr.mxu0 0.0
    %817 = vmatpush1.msra.mxu0 0.0
    %818 = vmatprep.subr.mxu0 0.0
    %819 = vmatpush1.msra.mxu0 0.0
    %820 = vmatprep.subr.mxu0 0.0
    %821 = vmatpush1.msra.mxu0 0.0
    %822 = vmatprep.subr.mxu0 0.0
    %823 = vmatpush1.msra.mxu0 0.0
    %824 = vmatprep.subr.mxu0 0.0
    %825 = vmatpush1.msra.mxu0 0.0
    %826 = vmatprep.subr.mxu0 0.0
    %827 = vmatpush1.msra.mxu0 0.0
    %828 = vmatprep.subr.mxu0 0.0
    %829 = vmatpush1.msra.mxu0 0.0
    %830 = vmatprep.subr.mxu0 0.0
    %831 = vmatpush1.msra.mxu0 0.0
    %832 = vmatprep.subr.mxu0 0.0
    %833 = vmatpush1.msra.mxu0 0.0
    %834 = vmatprep.subr.mxu0 0.0
    %835 = vmatpush1.msra.mxu0 0.0
    %836 = vmatprep.subr.mxu0 0.0
    %837 = vmatpush1.msra.mxu0 0.0
    %838 = vmatprep.subr.mxu0 0.0
    %839 = vmatpush1.msra.mxu0 0.0
    %840 = vmatprep.subr.mxu0 0.0
    %841 = vmatpush1.msra.mxu0 0.0
    %842 = vmatprep.subr.mxu0 0.0
    %843 = vmatpush1.msra.mxu0 0.0
    %844 = vmatprep.subr.mxu0 0.0
    %845 = vmatpush1.msra.mxu0 0.0
    %846 = vmatprep.subr.mxu0 0.0
    %847 = vmatpush1.msra.mxu0 0.0
    %848 = vmatprep.subr.mxu0 0.0
    %849 = vmatpush1.msra.mxu0 0.0
    %850 = vmatprep.subr.mxu0 0.0
    %851 = vmatpush1.msra.mxu0 0.0
    %852 = vmatprep.subr.mxu0 0.0
    %853 = vmatpush1.msra.mxu0 0.0
    %854 = vmatprep.subr.mxu0 0.0
    %855 = vmatpush1.msra.mxu0 0.0
    %856 = vmatprep.subr.mxu0 0.0
    %857 = vmatpush1.msra.mxu0 0.0
    %858 = vmatprep.subr.mxu0 0.0
    %859 = vmatpush1.msra.mxu0 0.0
    %860 = vmatprep.subr.mxu0 0.0
    %861 = vmatpush1.msra.mxu0 0.0
    %862 = vmatprep.subr.mxu0 0.0
    %863 = vmatpush1.msra.mxu0 0.0
    %864 = vmatprep.subr.mxu0 0.0
    %865 = vmatpush1.msra.mxu0 0.0
    %866 = vmatprep.subr.mxu0 0.0
    %867 = vmatpush1.msra.mxu0 0.0
    %868 = vmatprep.subr.mxu0 0.0
    %869 = vmatpush1.msra.mxu0 0.0
    %870 = vmatprep.mubr.f32.mxu0 0.0
    %871 = vmatmul.mubr.f32.gmra.mrb[0].mxu0 %v804
    %v872 = vpop.f32.mrb[0].mxu0
    %v873 = vadd.f32 0.0, %v872
    %v874 = vpop.f32.mrb[0].mxu0
    %875 = vdwg.mxu0
    %v876 = vmul.f32 %v873, %v873
    %878 = vrot.lane.b32.xlu0 %v876, 32
    %v879 = vpop.permute.xlu0 %878
    %v881 = vsel %vm46, %v873, %v879
    %v882 = vsel %vm48, %v881, 0.0
    %v883 = vrot.slane %v882, 4
    %v884 = vadd.f32 %v882, %v883
    %v885 = vrot.slane %v884, 2
    %v886 = vadd.f32 %v884, %v885
    %v887 = vrot.slane %v886, 1
    %v888 = vadd.f32 %v886, %v887
    %v889 = vmul.f32 %v888, 0.125
    %v890 = vmul.f32 %v889, %v889
    %892 = vrot.lane.b32.xlu0 %v890, 32
    %v893 = vpop.permute.xlu0 %892
    %v895 = vsub.f32 %v889, %v893
    %v896 = vmax.f32 %v895, 0.0
    %v897 = vadd.f32 %v896, 1e-05
    %v898 = vrsqrt.pop %v897
    %v900 = vrot.slane %v898, 5
    %901 = vrot.lane.b32.xlu0 %v900, 96
    %v902 = vpop.permute.xlu0 %901
    %v904 = vmul.f32 %v29, %v902
    %v905 = vmul.f32 %v889, %v904
    %v907 = vrot.slane %v905, 7
    %v909 = vsub.f32 %v29, %v907
    %v910 = vlaneseq
    %v911 = vshrl.u32 %v910, 7
    %v912 = vsub.s32 3, %v911
    %v913 = vrot.slane %v904, %v912
    %v914 = vmul.f32 %v873, %v913
    %v915 = vlaneseq
    %v916 = vshrl.u32 %v915, 7
    %v917 = vsub.s32 4, %v916
    %v918 = vrot.slane %v909, %v917
    %v919 = vadd.f32 %v914, %v918
    %v920 = vmax.f32 %v919, 0.0
    %v922 = vsel %vm46, %v920, 0
    %924 = vmatprep.subr.mxu0 0.0
    %925 = vmatpush1.msra.mxu0 %v88
    %926 = vmatprep.subr.mxu0 0.0
    %927 = vmatpush1.msra.mxu0 %v89
    %928 = vmatprep.subr.mxu0 0.0
    %929 = vmatpush1.msra.mxu0 %v90
    %930 = vmatprep.subr.mxu0 0.0
    %931 = vmatpush1.msra.mxu0 %v91
    %932 = vmatprep.subr.mxu0 0.0
    %933 = vmatpush1.msra.mxu0 0.0
    %934 = vmatprep.subr.mxu0 0.0
    %935 = vmatpush1.msra.mxu0 0.0
    %936 = vmatprep.subr.mxu0 0.0
    %937 = vmatpush1.msra.mxu0 0.0
    %938 = vmatprep.subr.mxu0 0.0
    %939 = vmatpush1.msra.mxu0 0.0
    %940 = vmatprep.subr.mxu0 0.0
    %941 = vmatpush1.msra.mxu0 0.0
    %942 = vmatprep.subr.mxu0 0.0
    %943 = vmatpush1.msra.mxu0 0.0
    %944 = vmatprep.subr.mxu0 0.0
    %945 = vmatpush1.msra.mxu0 0.0
    %946 = vmatprep.subr.mxu0 0.0
    %947 = vmatpush1.msra.mxu0 0.0
    %948 = vmatprep.subr.mxu0 0.0
    %949 = vmatpush1.msra.mxu0 0.0
    %950 = vmatprep.subr.mxu0 0.0
    %951 = vmatpush1.msra.mxu0 0.0
    %952 = vmatprep.subr.mxu0 0.0
    %953 = vmatpush1.msra.mxu0 0.0
    %954 = vmatprep.subr.mxu0 0.0
    %955 = vmatpush1.msra.mxu0 0.0
    %956 = vmatprep.subr.mxu0 0.0
    %957 = vmatpush1.msra.mxu0 0.0
    %958 = vmatprep.subr.mxu0 0.0
    %959 = vmatpush1.msra.mxu0 0.0
    %960 = vmatprep.subr.mxu0 0.0
    %961 = vmatpush1.msra.mxu0 0.0
    %962 = vmatprep.subr.mxu0 0.0
    %963 = vmatpush1.msra.mxu0 0.0
    %964 = vmatprep.subr.mxu0 0.0
    %965 = vmatpush1.msra.mxu0 0.0
    %966 = vmatprep.subr.mxu0 0.0
    %967 = vmatpush1.msra.mxu0 0.0
    %968 = vmatprep.subr.mxu0 0.0
    %969 = vmatpush1.msra.mxu0 0.0
    %970 = vmatprep.subr.mxu0 0.0
    %971 = vmatpush1.msra.mxu0 0.0
    %972 = vmatprep.subr.mxu0 0.0
    %973 = vmatpush1.msra.mxu0 0.0
    %974 = vmatprep.subr.mxu0 0.0
    %975 = vmatpush1.msra.mxu0 0.0
    %976 = vmatprep.subr.mxu0 0.0
    %977 = vmatpush1.msra.mxu0 0.0
    %978 = vmatprep.subr.mxu0 0.0
    %979 = vmatpush1.msra.mxu0 0.0
    %980 = vmatprep.subr.mxu0 0.0
    %981 = vmatpush1.msra.mxu0 0.0
    %982 = vmatprep.subr.mxu0 0.0
    %983 = vmatpush1.msra.mxu0 0.0
    %984 = vmatprep.subr.mxu0 0.0
    %985 = vmatpush1.msra.mxu0 0.0
    %986 = vmatprep.subr.mxu0 0.0
    %987 = vmatpush1.msra.mxu0 0.0
    %988 = vmatprep.mubr.f32.mxu0 0.0
    %989 = vmatmul.mubr.f32.gmra.mrb[0].mxu0 %v922
    %v990 = vpop.f32.mrb[0].mxu0
    %v991 = vadd.f32 0.0, %v990
    %v992 = vpop.f32.mrb[0].mxu0
    %993 = vdwg.mxu0
    %v994 = vmul.f32 %v991, %v991
    %996 = vrot.lane.b32.xlu0 %v994, 32
    %v997 = vpop.permute.xlu0 %996
    %v999 = vsel %vm46, %v991, %v997
    %v1000 = vsel %vm48, %v999, 0.0
    %v1001 = vrot.slane %v1000, 4
    %v1002 = vadd.f32 %v1000, %v1001
    %v1003 = vrot.slane %v1002, 2
    %v1004 = vadd.f32 %v1002, %v1003
    %v1005 = vrot.slane %v1004, 1
    %v1006 = vadd.f32 %v1004, %v1005
    %v1007 = vmul.f32 %v1006, 0.125
    %v1008 = vmul.f32 %v1007, %v1007
    %1010 = vrot.lane.b32.xlu0 %v1008, 32
    %v1011 = vpop.permute.xlu0 %1010
    %v1013 = vsub.f32 %v1007, %v1011
    %v1014 = vmax.f32 %v1013, 0.0
    %v1015 = vadd.f32 %v1014, 1e-05
    %v1016 = vrsqrt.pop %v1015
    %v1018 = vrot.slane %v1016, 5
    %1019 = vrot.lane.b32.xlu0 %v1018, 96
    %v1020 = vpop.permute.xlu0 %1019
    %v1022 = vmul.f32 %v29, %v1020
    %v1023 = vmul.f32 %v1007, %v1022
    %v1025 = vrot.slane %v1023, 7
    %v1027 = vsub.f32 %v29, %v1025
    %v1028 = vlaneseq
    %v1029 = vshrl.u32 %v1028, 7
    %v1030 = vsub.s32 3, %v1029
    %v1031 = vrot.slane %v1022, %v1030
    %v1032 = vmul.f32 %v991, %v1031
    %v1033 = vlaneseq
    %v1034 = vshrl.u32 %v1033, 7
    %v1035 = vsub.s32 4, %v1034
    %v1036 = vrot.slane %v1027, %v1035
    %v1037 = vadd.f32 %v1032, %v1036
    %v1038 = vadd.f32 %v1037, %v802
    %v1039 = vmax.f32 %v1038, 0.0
    %v1041 = vsel %vm46, %v1039, 0
    %1043 = vmatprep.subr.mxu0 0.0
    %1044 = vmatpush1.msra.mxu0 %v88
    %1045 = vmatprep.subr.mxu0 0.0
    %1046 = vmatpush1.msra.mxu0 %v89
    %1047 = vmatprep.subr.mxu0 0.0
    %1048 = vmatpush1.msra.mxu0 %v90
    %1049 = vmatprep.subr.mxu0 0.0
    %1050 = vmatpush1.msra.mxu0 %v91
    %1051 = vmatprep.subr.mxu0 0.0
    %1052 = vmatpush1.msra.mxu0 0.0
    %1053 = vmatprep.subr.mxu0 0.0
    %1054 = vmatpush1.msra.mxu0 0.0
    %1055 = vmatprep.subr.mxu0 0.0
    %1056 = vmatpush1.msra.mxu0 0.0
    %1057 = vmatprep.subr.mxu0 0.0
    %1058 = vmatpush1.msra.mxu0 0.0
    %1059 = vmatprep.subr.mxu0 0.0
    %1060 = vmatpush1.msra.mxu0 0.0
    %1061 = vmatprep.subr.mxu0 0.0
    %1062 = vmatpush1.msra.mxu0 0.0
    %1063 = vmatprep.subr.mxu0 0.0
    %1064 = vmatpush1.msra.mxu0 0.0
    %1065 = vmatprep.subr.mxu0 0.0
    %1066 = vmatpush1.msra.mxu0 0.0
    %1067 = vmatprep.subr.mxu0 0.0
    %1068 = vmatpush1.msra.mxu0 0.0
    %1069 = vmatprep.subr.mxu0 0.0
    %1070 = vmatpush1.msra.mxu0 0.0
    %1071 = vmatprep.subr.mxu0 0.0
    %1072 = vmatpush1.msra.mxu0 0.0
    %1073 = vmatprep.subr.mxu0 0.0
    %1074 = vmatpush1.msra.mxu0 0.0
    %1075 = vmatprep.subr.mxu0 0.0
    %1076 = vmatpush1.msra.mxu0 0.0
    %1077 = vmatprep.subr.mxu0 0.0
    %1078 = vmatpush1.msra.mxu0 0.0
    %1079 = vmatprep.subr.mxu0 0.0
    %1080 = vmatpush1.msra.mxu0 0.0
    %1081 = vmatprep.subr.mxu0 0.0
    %1082 = vmatpush1.msra.mxu0 0.0
    %1083 = vmatprep.subr.mxu0 0.0
    %1084 = vmatpush1.msra.mxu0 0.0
    %1085 = vmatprep.subr.mxu0 0.0
    %1086 = vmatpush1.msra.mxu0 0.0
    %1087 = vmatprep.subr.mxu0 0.0
    %1088 = vmatpush1.msra.mxu0 0.0
    %1089 = vmatprep.subr.mxu0 0.0
    %1090 = vmatpush1.msra.mxu0 0.0
    %1091 = vmatprep.subr.mxu0 0.0
    %1092 = vmatpush1.msra.mxu0 0.0
    %1093 = vmatprep.subr.mxu0 0.0
    %1094 = vmatpush1.msra.mxu0 0.0
    %1095 = vmatprep.subr.mxu0 0.0
    %1096 = vmatpush1.msra.mxu0 0.0
    %1097 = vmatprep.subr.mxu0 0.0
    %1098 = vmatpush1.msra.mxu0 0.0
    %1099 = vmatprep.subr.mxu0 0.0
    %1100 = vmatpush1.msra.mxu0 0.0
    %1101 = vmatprep.subr.mxu0 0.0
    %1102 = vmatpush1.msra.mxu0 0.0
    %1103 = vmatprep.subr.mxu0 0.0
    %1104 = vmatpush1.msra.mxu0 0.0
    %1105 = vmatprep.subr.mxu0 0.0
    %1106 = vmatpush1.msra.mxu0 0.0
    %1107 = vmatprep.mubr.f32.mxu0 0.0
    %1108 = vmatmul.mubr.f32.gmra.mrb[0].mxu0 %v1041
    %v1109 = vpop.f32.mrb[0].mxu0
    %v1110 = vadd.f32 0.0, %v1109
    %v1111 = vpop.f32.mrb[0].mxu0
    %1112 = vdwg.mxu0
    %v1113 = vmul.f32 %v1110, %v1110
    %1115 = vrot.lane.b32.xlu0 %v1113, 32
    %v1116 = vpop.permute.xlu0 %1115
    %v1118 = vsel %vm46, %v1110, %v1116
    %v1119 = vsel %vm48, %v1118, 0.0
    %v1120 = vrot.slane %v1119, 4
    %v1121 = vadd.f32 %v1119, %v1120
    %v1122 = vrot.slane %v1121, 2
    %v1123 = vadd.f32 %v1121, %v1122
    %v1124 = vrot.slane %v1123, 1
    %v1125 = vadd.f32 %v1123, %v1124
    %v1126 = vmul.f32 %v1125, 0.125
    %v1127 = vmul.f32 %v1126, %v1126
    %1129 = vrot.lane.b32.xlu0 %v1127, 32
    %v1130 = vpop.permute.xlu0 %1129
    %v1132 = vsub.f32 %v1126, %v1130
    %v1133 = vmax.f32 %v1132, 0.0
    %v1134 = vadd.f32 %v1133, 1e-05
    %v1135 = vrsqrt.pop %v1134
    %v1137 = vrot.slane %v1135, 5
    %1138 = vrot.lane.b32.xlu0 %v1137, 96
    %v1139 = vpop.permute.xlu0 %1138
    %v1141 = vmul.f32 %v29, %v1139
    %v1142 = vmul.f32 %v1126, %v1141
    %v1144 = vrot.slane %v1142, 7
    %v1146 = vsub.f32 %v29, %v1144
    %v1147 = vlaneseq
    %v1148 = vshrl.u32 %v1147, 7
    %v1149 = vsub.s32 3, %v1148
    %v1150 = vrot.slane %v1141, %v1149
    %v1151 = vmul.f32 %v1110, %v1150
    %v1152 = vlaneseq
    %v1153 = vshrl.u32 %v1152, 7
    %v1154 = vsub.s32 4, %v1153
    %v1155 = vrot.slane %v1146, %v1154
    %v1156 = vadd.f32 %v1151, %v1155
    %v1157 = vmax.f32 %v1156, 0.0
    %v1159 = vsel %vm46, %v1157, 0
    %1161 = vmatprep.subr.mxu0 0.0
    %1162 = vmatpush1.msra.mxu0 %v88
    %1163 = vmatprep.subr.mxu0 0.0
    %1164 = vmatpush1.msra.mxu0 %v89
    %1165 = vmatprep.subr.mxu0 0.0
    %1166 = vmatpush1.msra.mxu0 %v90
    %1167 = vmatprep.subr.mxu0 0.0
    %1168 = vmatpush1.msra.mxu0 %v91
    %1169 = vmatprep.subr.mxu0 0.0
    %1170 = vmatpush1.msra.mxu0 0.0
    %1171 = vmatprep.subr.mxu0 0.0
    %1172 = vmatpush1.msra.mxu0 0.0
    %1173 = vmatprep.subr.mxu0 0.0
    %1174 = vmatpush1.msra.mxu0 0.0
    %1175 = vmatprep.subr.mxu0 0.0
    %1176 = vmatpush1.msra.mxu0 0.0
    %1177 = vmatprep.subr.mxu0 0.0
    %1178 = vmatpush1.msra.mxu0 0.0
    %1179 = vmatprep.subr.mxu0 0.0
    %1180 = vmatpush1.msra.mxu0 0.0
    %1181 = vmatprep.subr.mxu0 0.0
    %1182 = vmatpush1.msra.mxu0 0.0
    %1183 = vmatprep.subr.mxu0 0.0
    %1184 = vmatpush1.msra.mxu0 0.0
    %1185 = vmatprep.subr.mxu0 0.0
    %1186 = vmatpush1.msra.mxu0 0.0
    %1187 = vmatprep.subr.mxu0 0.0
    %1188 = vmatpush1.msra.mxu0 0.0
    %1189 = vmatprep.subr.mxu0 0.0
    %1190 = vmatpush1.msra.mxu0 0.0
    %1191 = vmatprep.subr.mxu0 0.0
    %1192 = vmatpush1.msra.mxu0 0.0
    %1193 = vmatprep.subr.mxu0 0.0
    %1194 = vmatpush1.msra.mxu0 0.0
    %1195 = vmatprep.subr.mxu0 0.0
    %1196 = vmatpush1.msra.mxu0 0.0
    %1197 = vmatprep.subr.mxu0 0.0
    %1198 = vmatpush1.msra.mxu0 0.0
    %1199 = vmatprep.subr.mxu0 0.0
    %1200 = vmatpush1.msra.mxu0 0.0
    %1201 = vmatprep.subr.mxu0 0.0
    %1202 = vmatpush1.msra.mxu0 0.0
    %1203 = vmatprep.subr.mxu0 0.0
    %1204 = vmatpush1.msra.mxu0 0.0
    %1205 = vmatprep.subr.mxu0 0.0
    %1206 = vmatpush1.msra.mxu0 0.0
    %1207 = vmatprep.subr.mxu0 0.0
    %1208 = vmatpush1.msra.mxu0 0.0
    %1209 = vmatprep.subr.mxu0 0.0
    %1210 = vmatpush1.msra.mxu0 0.0
    %1211 = vmatprep.subr.mxu0 0.0
    %1212 = vmatpush1.msra.mxu0 0.0
    %1213 = vmatprep.subr.mxu0 0.0
    %1214 = vmatpush1.msra.mxu0 0.0
    %1215 = vmatprep.subr.mxu0 0.0
    %1216 = vmatpush1.msra.mxu0 0.0
    %1217 = vmatprep.subr.mxu0 0.0
    %1218 = vmatpush1.msra.mxu0 0.0
    %1219 = vmatprep.subr.mxu0 0.0
    %1220 = vmatpush1.msra.mxu0 0.0
    %1221 = vmatprep.subr.mxu0 0.0
    %1222 = vmatpush1.msra.mxu0 0.0
    %1223 = vmatprep.subr.mxu0 0.0
    %1224 = vmatpush1.msra.mxu0 0.0
    %1225 = vmatprep.mubr.f32.mxu0 0.0
    %1226 = vmatmul.mubr.f32.gmra.mrb[0].mxu0 %v1159
    %v1227 = vpop.f32.mrb[0].mxu0
    %v1228 = vadd.f32 0.0, %v1227
    %v1229 = vpop.f32.mrb[0].mxu0
    %1230 = vdwg.mxu0
    %v1231 = vmul.f32 %v1228, %v1228
    %1233 = vrot.lane.b32.xlu0 %v1231, 32
    %v1234 = vpop.permute.xlu0 %1233
    %v1236 = vsel %vm46, %v1228, %v1234
    %v1237 = vsel %vm48, %v1236, 0.0
    %v1238 = vrot.slane %v1237, 4
    %v1239 = vadd.f32 %v1237, %v1238
    %v1240 = vrot.slane %v1239, 2
    %v1241 = vadd.f32 %v1239, %v1240
    %v1242 = vrot.slane %v1241, 1
    %v1243 = vadd.f32 %v1241, %v1242
    %v1244 = vmul.f32 %v1243, 0.125
    %v1245 = vmul.f32 %v1244, %v1244
    %1247 = vrot.lane.b32.xlu0 %v1245, 32
    %v1248 = vpop.permute.xlu0 %1247
    %v1250 = vsub.f32 %v1244, %v1248
    %v1251 = vmax.f32 %v1250, 0.0
    %v1252 = vadd.f32 %v1251, 1e-05
    %v1253 = vrsqrt.pop %v1252
    %v1255 = vrot.slane %v1253, 5
    %1256 = vrot.lane.b32.xlu0 %v1255, 96
    %v1257 = vpop.permute.xlu0 %1256
    %v1259 = vmul.f32 %v29, %v1257
    %v1260 = vmul.f32 %v1244, %v1259
    %v1262 = vrot.slane %v1260, 7
    %v1264 = vsub.f32 %v29, %v1262
    %v1265 = vlaneseq
    %v1266 = vshrl.u32 %v1265, 7
    %v1267 = vsub.s32 3, %v1266
    %v1268 = vrot.slane %v1259, %v1267
    %v1269 = vmul.f32 %v1228, %v1268
    %v1270 = vlaneseq
    %v1271 = vshrl.u32 %v1270, 7
    %v1272 = vsub.s32 4, %v1271
    %v1273 = vrot.slane %v1264, %v1272
    %v1274 = vadd.f32 %v1269, %v1273
    %v1275 = vadd.f32 %v1274, %v1039
    %v1276 = vmax.f32 %v1275, 0.0
    %v1278 = vsel %vm46, %v1276, 0
    %1280 = vmatprep.subr.mxu0 0.0
    %1281 = vmatpush1.msra.mxu0 %v88
    %1282 = vmatprep.subr.mxu0 0.0
    %1283 = vmatpush1.msra.mxu0 %v89
    %1284 = vmatprep.subr.mxu0 0.0
    %1285 = vmatpush1.msra.mxu0 %v90
    %1286 = vmatprep.subr.mxu0 0.0
    %1287 = vmatpush1.msra.mxu0 %v91
    %1288 = vmatprep.subr.mxu0 0.0
    %1289 = vmatpush1.msra.mxu0 0.0
    %1290 = vmatprep.subr.mxu0 0.0
    %1291 = vmatpush1.msra.mxu0 0.0
    %1292 = vmatprep.subr.mxu0 0.0
    %1293 = vmatpush1.msra.mxu0 0.0
    %1294 = vmatprep.subr.mxu0 0.0
    %1295 = vmatpush1.msra.mxu0 0.0
    %1296 = vmatprep.subr.mxu0 0.0
    %1297 = vmatpush1.msra.mxu0 0.0
    %1298 = vmatprep.subr.mxu0 0.0
    %1299 = vmatpush1.msra.mxu0 0.0
    %1300 = vmatprep.subr.mxu0 0.0
    %1301 = vmatpush1.msra.mxu0 0.0
    %1302 = vmatprep.subr.mxu0 0.0
    %1303 = vmatpush1.msra.mxu0 0.0
    %1304 = vmatprep.subr.mxu0 0.0
    %1305 = vmatpush1.msra.mxu0 0.0
    %1306 = vmatprep.subr.mxu0 0.0
    %1307 = vmatpush1.msra.mxu0 0.0
    %1308 = vmatprep.subr.mxu0 0.0
    %1309 = vmatpush1.msra.mxu0 0.0
    %1310 = vmatprep.subr.mxu0 0.0
    %1311 = vmatpush1.msra.mxu0 0.0
    %1312 = vmatprep.subr.mxu0 0.0
    %1313 = vmatpush1.msra.mxu0 0.0
    %1314 = vmatprep.subr.mxu0 0.0
    %1315 = vmatpush1.msra.mxu0 0.0
    %1316 = vmatprep.subr.mxu0 0.0
    %1317 = vmatpush1.msra.mxu0 0.0
    %1318 = vmatprep.subr.mxu0 0.0
    %1319 = vmatpush1.msra.mxu0 0.0
    %1320 = vmatprep.subr.mxu0 0.0
    %1321 = vmatpush1.msra.mxu0 0.0
    %1322 = vmatprep.subr.mxu0 0.0
    %1323 = vmatpush1.msra.mxu0 0.0
    %1324 = vmatprep.subr.mxu0 0.0
    %1325 = vmatpush1.msra.mxu0 0.0
    %1326 = vmatprep.subr.mxu0 0.0
    %1327 = vmatpush1.msra.mxu0 0.0
    %1328 = vmatprep.subr.mxu0 0.0
    %1329 = vmatpush1.msra.mxu0 0.0
    %1330 = vmatprep.subr.mxu0 0.0
    %1331 = vmatpush1.msra.mxu0 0.0
    %1332 = vmatprep.subr.mxu0 0.0
    %1333 = vmatpush1.msra.mxu0 0.0
    %1334 = vmatprep.subr.mxu0 0.0
    %1335 = vmatpush1.msra.mxu0 0.0
    %1336 = vmatprep.subr.mxu0 0.0
    %1337 = vmatpush1.msra.mxu0 0.0
    %1338 = vmatprep.subr.mxu0 0.0
    %1339 = vmatpush1.msra.mxu0 0.0
    %1340 = vmatprep.subr.mxu0 0.0
    %1341 = vmatpush1.msra.mxu0 0.0
    %1342 = vmatprep.subr.mxu0 0.0
    %1343 = vmatpush1.msra.mxu0 0.0
    %1344 = vmatprep.mubr.f32.mxu0 0.0
    %1345 = vmatmul.mubr.f32.gmra.mrb[0].mxu0 %v1278
    %v1346 = vpop.f32.mrb[0].mxu0
    %v1347 = vadd.f32 0.0, %v1346
    %v1348 = vpop.f32.mrb[0].mxu0
    %1349 = vdwg.mxu0
    %v1350 = vmul.f32 %v1347, %v1347
    %1352 = vrot.lane.b32.xlu0 %v1350, 32
    %v1353 = vpop.permute.xlu0 %1352
    %v1355 = vsel %vm46, %v1347, %v1353
    %v1356 = vsel %vm48, %v1355, 0.0
    %v1357 = vrot.slane %v1356, 4
    %v1358 = vadd.f32 %v1356, %v1357
    %v1359 = vrot.slane %v1358, 2
    %v1360 = vadd.f32 %v1358, %v1359
    %v1361 = vrot.slane %v1360, 1
    %v1362 = vadd.f32 %v1360, %v1361
    %v1363 = vmul.f32 %v1362, 0.125
    %v1364 = vmul.f32 %v1363, %v1363
    %1366 = vrot.lane.b32.xlu0 %v1364, 32
    %v1367 = vpop.permute.xlu0 %1366
    %v1369 = vsub.f32 %v1363, %v1367
    %v1370 = vmax.f32 %v1369, 0.0
    %v1371 = vadd.f32 %v1370, 1e-05
    %v1372 = vrsqrt.pop %v1371
    %v1374 = vrot.slane %v1372, 5
    %1375 = vrot.lane.b32.xlu0 %v1374, 96
    %v1376 = vpop.permute.xlu0 %1375
    %v1378 = vmul.f32 %v29, %v1376
    %v1379 = vmul.f32 %v1363, %v1378
    %v1381 = vrot.slane %v1379, 7
    %v1383 = vsub.f32 %v29, %v1381
    %v1384 = vlaneseq
    %v1385 = vshrl.u32 %v1384, 7
    %v1386 = vsub.s32 3, %v1385
    %v1387 = vrot.slane %v1378, %v1386
    %v1388 = vmul.f32 %v1347, %v1387
    %v1389 = vlaneseq
    %v1390 = vshrl.u32 %v1389, 7
    %v1391 = vsub.s32 4, %v1390
    %v1392 = vrot.slane %v1383, %v1391
    %v1393 = vadd.f32 %v1388, %v1392
    %v1394 = vmax.f32 %v1393, 0.0
    %v1396 = vsel %vm46, %v1394, 0
    %1398 = vmatprep.subr.mxu0 0.0
    %1399 = vmatpush1.msra.mxu0 %v88
    %1400 = vmatprep.subr.mxu0 0.0
    %1401 = vmatpush1.msra.mxu0 %v89
    %1402 = vmatprep.subr.mxu0 0.0
    %1403 = vmatpush1.msra.mxu0 %v90
    %1404 = vmatprep.subr.mxu0 0.0
    %1405 = vmatpush1.msra.mxu0 %v91
    %1406 = vmatprep.subr.mxu0 0.0
    %1407 = vmatpush1.msra.mxu0 0.0
    %1408 = vmatprep.subr.mxu0 0.0
    %1409 = vmatpush1.msra.mxu0 0.0
    %1410 = vmatprep.subr.mxu0 0.0
    %1411 = vmatpush1.msra.mxu0 0.0
    %1412 = vmatprep.subr.mxu0 0.0
    %1413 = vmatpush1.msra.mxu0 0.0
    %1414 = vmatprep.subr.mxu0 0.0
    %1415 = vmatpush1.msra.mxu0 0.0
    %1416 = vmatprep.subr.mxu0 0.0
    %1417 = vmatpush1.msra.mxu0 0.0
    %1418 = vmatprep.subr.mxu0 0.0
    %1419 = vmatpush1.msra.mxu0 0.0
    %1420 = vmatprep.subr.mxu0 0.0
    %1421 = vmatpush1.msra.mxu0 0.0
    %1422 = vmatprep.subr.mxu0 0.0
    %1423 = vmatpush1.msra.mxu0 0.0
    %1424 = vmatprep.subr.mxu0 0.0
    %1425 = vmatpush1.msra.mxu0 0.0
    %1426 = vmatprep.subr.mxu0 0.0
    %1427 = vmatpush1.msra.mxu0 0.0
    %1428 = vmatprep.subr.mxu0 0.0
    %1429 = vmatpush1.msra.mxu0 0.0
    %1430 = vmatprep.subr.mxu0 0.0
    %1431 = vmatpush1.msra.mxu0 0.0
    %1432 = vmatprep.subr.mxu0 0.0
    %1433 = vmatpush1.msra.mxu0 0.0
    %1434 = vmatprep.subr.mxu0 0.0
    %1435 = vmatpush1.msra.mxu0 0.0
    %1436 = vmatprep.subr.mxu0 0.0
    %1437 = vmatpush1.msra.mxu0 0.0
    %1438 = vmatprep.subr.mxu0 0.0
    %1439 = vmatpush1.msra.mxu0 0.0
    %1440 = vmatprep.subr.mxu0 0.0
    %1441 = vmatpush1.msra.mxu0 0.0
    %1442 = vmatprep.subr.mxu0 0.0
    %1443 = vmatpush1.msra.mxu0 0.0
    %1444 = vmatprep.subr.mxu0 0.0
    %1445 = vmatpush1.msra.mxu0 0.0
    %1446 = vmatprep.subr.mxu0 0.0
    %1447 = vmatpush1.msra.mxu0 0.0
    %1448 = vmatprep.subr.mxu0 0.0
    %1449 = vmatpush1.msra.mxu0 0.0
    %1450 = vmatprep.subr.mxu0 0.0
    %1451 = vmatpush1.msra.mxu0 0.0
    %1452 = vmatprep.subr.mxu0 0.0
    %1453 = vmatpush1.msra.mxu0 0.0
    %1454 = vmatprep.subr.mxu0 0.0
    %1455 = vmatpush1.msra.mxu0 0.0
    %1456 = vmatprep.subr.mxu0 0.0
    %1457 = vmatpush1.msra.mxu0 0.0
    %1458 = vmatprep.subr.mxu0 0.0
    %1459 = vmatpush1.msra.mxu0 0.0
    %1460 = vmatprep.subr.mxu0 0.0
    %1461 = vmatpush1.msra.mxu0 0.0
    %1462 = vmatprep.mubr.f32.mxu0 0.0
    %1463 = vmatmul.mubr.f32.gmra.mrb[0].mxu0 %v1396
    %v1464 = vpop.f32.mrb[0].mxu0
    %v1465 = vadd.f32 0.0, %v1464
    %v1466 = vpop.f32.mrb[0].mxu0
    %1467 = vdwg.mxu0
    %v1468 = vmul.f32 %v1465, %v1465
    %1470 = vrot.lane.b32.xlu0 %v1468, 32
    %v1471 = vpop.permute.xlu0 %1470
    %v1473 = vsel %vm46, %v1465, %v1471
    %v1474 = vsel %vm48, %v1473, 0.0
    %v1475 = vrot.slane %v1474, 4
    %v1476 = vadd.f32 %v1474, %v1475
    %v1477 = vrot.slane %v1476, 2
    %v1478 = vadd.f32 %v1476, %v1477
    %v1479 = vrot.slane %v1478, 1
    %v1480 = vadd.f32 %v1478, %v1479
    %v1481 = vmul.f32 %v1480, 0.125
    %v1482 = vmul.f32 %v1481, %v1481
    %1484 = vrot.lane.b32.xlu0 %v1482, 32
    %v1485 = vpop.permute.xlu0 %1484
    %v1487 = vsub.f32 %v1481, %v1485
    %v1488 = vmax.f32 %v1487, 0.0
    %v1489 = vadd.f32 %v1488, 1e-05
    %v1490 = vrsqrt.pop %v1489
    %v1492 = vrot.slane %v1490, 5
    %1493 = vrot.lane.b32.xlu0 %v1492, 96
    %v1494 = vpop.permute.xlu0 %1493
    %v1496 = vmul.f32 %v29, %v1494
    %v1497 = vmul.f32 %v1481, %v1496
    %v1499 = vrot.slane %v1497, 7
    %v1501 = vsub.f32 %v29, %v1499
    %v1502 = vlaneseq
    %v1503 = vshrl.u32 %v1502, 7
    %v1504 = vsub.s32 3, %v1503
    %v1505 = vrot.slane %v1496, %v1504
    %v1506 = vmul.f32 %v1465, %v1505
    %v1507 = vlaneseq
    %v1508 = vshrl.u32 %v1507, 7
    %v1509 = vsub.s32 4, %v1508
    %v1510 = vrot.slane %v1501, %v1509
    %v1511 = vadd.f32 %v1506, %v1510
    %v1512 = vadd.f32 %v1511, %v1276
    %v1513 = vmax.f32 %v1512, 0.0
    %v1515 = vsel %vm46, %v1513, 0
    %1517 = vmatprep.subr.mxu0 0.0
    %1518 = vmatpush1.msra.mxu0 %v88
    %1519 = vmatprep.subr.mxu0 0.0
    %1520 = vmatpush1.msra.mxu0 %v89
    %1521 = vmatprep.subr.mxu0 0.0
    %1522 = vmatpush1.msra.mxu0 %v90
    %1523 = vmatprep.subr.mxu0 0.0
    %1524 = vmatpush1.msra.mxu0 %v91
    %1525 = vmatprep.subr.mxu0 0.0
    %1526 = vmatpush1.msra.mxu0 0.0
    %1527 = vmatprep.subr.mxu0 0.0
    %1528 = vmatpush1.msra.mxu0 0.0
    %1529 = vmatprep.subr.mxu0 0.0
    %1530 = vmatpush1.msra.mxu0 0.0
    %1531 = vmatprep.subr.mxu0 0.0
    %1532 = vmatpush1.msra.mxu0 0.0
    %1533 = vmatprep.subr.mxu0 0.0
    %1534 = vmatpush1.msra.mxu0 0.0
    %1535 = vmatprep.subr.mxu0 0.0
    %1536 = vmatpush1.msra.mxu0 0.0
    %1537 = vmatprep.subr.mxu0 0.0
    %1538 = vmatpush1.msra.mxu0 0.0
    %1539 = vmatprep.subr.mxu0 0.0
    %1540 = vmatpush1.msra.mxu0 0.0
    %1541 = vmatprep.subr.mxu0 0.0
    %1542 = vmatpush1.msra.mxu0 0.0
    %1543 = vmatprep.subr.mxu0 0.0
    %1544 = vmatpush1.msra.mxu0 0.0
    %1545 = vmatprep.subr.mxu0 0.0
    %1546 = vmatpush1.msra.mxu0 0.0
    %1547 = vmatprep.subr.mxu0 0.0
    %1548 = vmatpush1.msra.mxu0 0.0
    %1549 = vmatprep.subr.mxu0 0.0
    %1550 = vmatpush1.msra.mxu0 0.0
    %1551 = vmatprep.subr.mxu0 0.0
    %1552 = vmatpush1.msra.mxu0 0.0
    %1553 = vmatprep.subr.mxu0 0.0
    %1554 = vmatpush1.msra.mxu0 0.0
    %1555 = vmatprep.subr.mxu0 0.0
    %1556 = vmatpush1.msra.mxu0 0.0
    %1557 = vmatprep.subr.mxu0 0.0
    %1558 = vmatpush1.msra.mxu0 0.0
    %1559 = vmatprep.subr.mxu0 0.0
    %1560 = vmatpush1.msra.mxu0 0.0
    %1561 = vmatprep.subr.mxu0 0.0
    %1562 = vmatpush1.msra.mxu0 0.0
    %1563 = vmatprep.subr.mxu0 0.0
    %1564 = vmatpush1.msra.mxu0 0.0
    %1565 = vmatprep.subr.mxu0 0.0
    %1566 = vmatpush1.msra.mxu0 0.0
    %1567 = vmatprep.subr.mxu0 0.0
    %1568 = vmatpush1.msra.mxu0 0.0
    %1569 = vmatprep.subr.mxu0 0.0
    %1570 = vmatpush1.msra.mxu0 0.0
    %1571 = vmatprep.subr.mxu0 0.0
    %1572 = vmatpush1.msra.mxu0 0.0
    %1573 = vmatprep.subr.mxu0 0.0
    %1574 = vmatpush1.msra.mxu0 0.0
    %1575 = vmatprep.subr.mxu0 0.0
    %1576 = vmatpush1.msra.mxu0 0.0
    %1577 = vmatprep.subr.mxu0 0.0
    %1578 = vmatpush1.msra.mxu0 0.0
    %1579 = vmatprep.subr.mxu0 0.0
    %1580 = vmatpush1.msra.mxu0 0.0
    %1581 = vmatprep.mubr.f32.mxu0 0.0
    %1582 = vmatmul.mubr.f32.gmra.mrb[0].mxu0 %v1515
    %v1583 = vpop.f32.mrb[0].mxu0
    %v1584 = vadd.f32 0.0, %v1583
    %v1585 = vpop.f32.mrb[0].mxu0
    %1586 = vdwg.mxu0
    %v1587 = vmul.f32 %v1584, %v1584
    %1589 = vrot.lane.b32.xlu0 %v1587, 32
    %v1590 = vpop.permute.xlu0 %1589
    %v1592 = vsel %vm46, %v1584, %v1590
    %v1593 = vsel %vm48, %v1592, 0.0
    %v1594 = vrot.slane %v1593, 4
    %v1595 = vadd.f32 %v1593, %v1594
    %v1596 = vrot.slane %v1595, 2
    %v1597 = vadd.f32 %v1595, %v1596
    %v1598 = vrot.slane %v1597, 1
    %v1599 = vadd.f32 %v1597, %v1598
    %v1600 = vmul.f32 %v1599, 0.125
    %v1601 = vmul.f32 %v1600, %v1600
    %1603 = vrot.lane.b32.xlu0 %v1601, 32
    %v1604 = vpop.permute.xlu0 %1603
    %v1606 = vsub.f32 %v1600, %v1604
    %v1607 = vmax.f32 %v1606, 0.0
    %v1608 = vadd.f32 %v1607, 1e-05
    %v1609 = vrsqrt.pop %v1608
    %v1611 = vrot.slane %v1609, 5
    %1612 = vrot.lane.b32.xlu0 %v1611, 96
    %v1613 = vpop.permute.xlu0 %1612
    %v1615 = vmul.f32 %v29, %v1613
    %v1616 = vmul.f32 %v1600, %v1615
    %v1618 = vrot.slane %v1616, 7
    %v1620 = vsub.f32 %v29, %v1618
    %v1621 = vlaneseq
    %v1622 = vshrl.u32 %v1621, 7
    %v1623 = vsub.s32 3, %v1622
    %v1624 = vrot.slane %v1615, %v1623
    %v1625 = vmul.f32 %v1584, %v1624
    %v1626 = vlaneseq
    %v1627 = vshrl.u32 %v1626, 7
    %v1628 = vsub.s32 4, %v1627
    %v1629 = vrot.slane %v1620, %v1628
    %v1630 = vadd.f32 %v1625, %v1629
    %v1631 = vmax.f32 %v1630, 0.0
    %v1633 = vsel %vm46, %v1631, 0
    %1635 = vmatprep.subr.mxu0 0.0
    %1636 = vmatpush1.msra.mxu0 %v88
    %1637 = vmatprep.subr.mxu0 0.0
    %1638 = vmatpush1.msra.mxu0 %v89
    %1639 = vmatprep.subr.mxu0 0.0
    %1640 = vmatpush1.msra.mxu0 %v90
    %1641 = vmatprep.subr.mxu0 0.0
    %1642 = vmatpush1.msra.mxu0 %v91
    %1643 = vmatprep.subr.mxu0 0.0
    %1644 = vmatpush1.msra.mxu0 0.0
    %1645 = vmatprep.subr.mxu0 0.0
    %1646 = vmatpush1.msra.mxu0 0.0
    %1647 = vmatprep.subr.mxu0 0.0
    %1648 = vmatpush1.msra.mxu0 0.0
    %1649 = vmatprep.subr.mxu0 0.0
    %1650 = vmatpush1.msra.mxu0 0.0
    %1651 = vmatprep.subr.mxu0 0.0
    %1652 = vmatpush1.msra.mxu0 0.0
    %1653 = vmatprep.subr.mxu0 0.0
    %1654 = vmatpush1.msra.mxu0 0.0
    %1655 = vmatprep.subr.mxu0 0.0
    %1656 = vmatpush1.msra.mxu0 0.0
    %1657 = vmatprep.subr.mxu0 0.0
    %1658 = vmatpush1.msra.mxu0 0.0
    %1659 = vmatprep.subr.mxu0 0.0
    %1660 = vmatpush1.msra.mxu0 0.0
    %1661 = vmatprep.subr.mxu0 0.0
    %1662 = vmatpush1.msra.mxu0 0.0
    %1663 = vmatprep.subr.mxu0 0.0
    %1664 = vmatpush1.msra.mxu0 0.0
    %1665 = vmatprep.subr.mxu0 0.0
    %1666 = vmatpush1.msra.mxu0 0.0
    %1667 = vmatprep.subr.mxu0 0.0
    %1668 = vmatpush1.msra.mxu0 0.0
    %1669 = vmatprep.subr.mxu0 0.0
    %1670 = vmatpush1.msra.mxu0 0.0
    %1671 = vmatprep.subr.mxu0 0.0
    %1672 = vmatpush1.msra.mxu0 0.0
    %1673 = vmatprep.subr.mxu0 0.0
    %1674 = vmatpush1.msra.mxu0 0.0
    %1675 = vmatprep.subr.mxu0 0.0
    %1676 = vmatpush1.msra.mxu0 0.0
    %1677 = vmatprep.subr.mxu0 0.0
    %1678 = vmatpush1.msra.mxu0 0.0
    %1679 = vmatprep.subr.mxu0 0.0
    %1680 = vmatpush1.msra.mxu0 0.0
    %1681 = vmatprep.subr.mxu0 0.0
    %1682 = vmatpush1.msra.mxu0 0.0
    %1683 = vmatprep.subr.mxu0 0.0
    %1684 = vmatpush1.msra.mxu0 0.0
    %1685 = vmatprep.subr.mxu0 0.0
    %1686 = vmatpush1.msra.mxu0 0.0
    %1687 = vmatprep.subr.mxu0 0.0
    %1688 = vmatpush1.msra.mxu0 0.0
    %1689 = vmatprep.subr.mxu0 0.0
    %1690 = vmatpush1.msra.mxu0 0.0
    %1691 = vmatprep.subr.mxu0 0.0
    %1692 = vmatpush1.msra.mxu0 0.0
    %1693 = vmatprep.subr.mxu0 0.0
    %1694 = vmatpush1.msra.mxu0 0.0
    %1695 = vmatprep.subr.mxu0 0.0
    %1696 = vmatpush1.msra.mxu0 0.0
    %1697 = vmatprep.subr.mxu0 0.0
    %1698 = vmatpush1.msra.mxu0 0.0
    %1699 = vmatprep.mubr.f32.mxu0 0.0
    %1700 = vmatmul.mubr.f32.gmra.mrb[0].mxu0 %v1633
    %v1701 = vpop.f32.mrb[0].mxu0
    %v1702 = vadd.f32 0.0, %v1701
    %v1703 = vpop.f32.mrb[0].mxu0
    %1704 = vdwg.mxu0
    %v1705 = vmul.f32 %v1702, %v1702
    %1707 = vrot.lane.b32.xlu0 %v1705, 32
    %v1708 = vpop.permute.xlu0 %1707
    %v1710 = vsel %vm46, %v1702, %v1708
    %v1711 = vsel %vm48, %v1710, 0.0
    %v1712 = vrot.slane %v1711, 4
    %v1713 = vadd.f32 %v1711, %v1712
    %v1714 = vrot.slane %v1713, 2
    %v1715 = vadd.f32 %v1713, %v1714
    %v1716 = vrot.slane %v1715, 1
    %v1717 = vadd.f32 %v1715, %v1716
    %v1718 = vmul.f32 %v1717, 0.125
    %v1719 = vmul.f32 %v1718, %v1718
    %1721 = vrot.lane.b32.xlu0 %v1719, 32
    %v1722 = vpop.permute.xlu0 %1721
    %v1724 = vsub.f32 %v1718, %v1722
    %v1725 = vmax.f32 %v1724, 0.0
    %v1726 = vadd.f32 %v1725, 1e-05
    %v1727 = vrsqrt.pop %v1726
    %v1729 = vrot.slane %v1727, 5
    %1730 = vrot.lane.b32.xlu0 %v1729, 96
    %v1731 = vpop.permute.xlu0 %1730
    %v1733 = vmul.f32 %v29, %v1731
    %v1734 = vmul.f32 %v1718, %v1733
    %v1736 = vrot.slane %v1734, 7
    %v1738 = vsub.f32 %v29, %v1736
    %v1739 = vlaneseq
    %v1740 = vshrl.u32 %v1739, 7
    %v1741 = vsub.s32 3, %v1740
    %v1742 = vrot.slane %v1733, %v1741
    %v1743 = vmul.f32 %v1702, %v1742
    %v1744 = vlaneseq
    %v1745 = vshrl.u32 %v1744, 7
    %v1746 = vsub.s32 4, %v1745
    %v1747 = vrot.slane %v1738, %v1746
    %v1748 = vadd.f32 %v1743, %v1747
    %v1749 = vadd.f32 %v1748, %v1513
    %v1750 = vmax.f32 %v1749, 0.0
    %v1752 = vsel %vm46, %v1750, 0
    %1754 = vmatprep.subr.mxu0 0.0
    %1755 = vmatpush1.msra.mxu0 %v88
    %1756 = vmatprep.subr.mxu0 0.0
    %1757 = vmatpush1.msra.mxu0 %v89
    %1758 = vmatprep.subr.mxu0 0.0
    %1759 = vmatpush1.msra.mxu0 %v90
    %1760 = vmatprep.subr.mxu0 0.0
    %1761 = vmatpush1.msra.mxu0 %v91
    %1762 = vmatprep.subr.mxu0 0.0
    %1763 = vmatpush1.msra.mxu0 0.0
    %1764 = vmatprep.subr.mxu0 0.0
    %1765 = vmatpush1.msra.mxu0 0.0
    %1766 = vmatprep.subr.mxu0 0.0
    %1767 = vmatpush1.msra.mxu0 0.0
    %1768 = vmatprep.subr.mxu0 0.0
    %1769 = vmatpush1.msra.mxu0 0.0
    %1770 = vmatprep.subr.mxu0 0.0
    %1771 = vmatpush1.msra.mxu0 0.0
    %1772 = vmatprep.subr.mxu0 0.0
    %1773 = vmatpush1.msra.mxu0 0.0
    %1774 = vmatprep.subr.mxu0 0.0
    %1775 = vmatpush1.msra.mxu0 0.0
    %1776 = vmatprep.subr.mxu0 0.0
    %1777 = vmatpush1.msra.mxu0 0.0
    %1778 = vmatprep.subr.mxu0 0.0
    %1779 = vmatpush1.msra.mxu0 0.0
    %1780 = vmatprep.subr.mxu0 0.0
    %1781 = vmatpush1.msra.mxu0 0.0
    %1782 = vmatprep.subr.mxu0 0.0
    %1783 = vmatpush1.msra.mxu0 0.0
    %1784 = vmatprep.subr.mxu0 0.0
    %1785 = vmatpush1.msra.mxu0 0.0
    %1786 = vmatprep.subr.mxu0 0.0
    %1787 = vmatpush1.msra.mxu0 0.0
    %1788 = vmatprep.subr.mxu0 0.0
    %1789 = vmatpush1.msra.mxu0 0.0
    %1790 = vmatprep.subr.mxu0 0.0
    %1791 = vmatpush1.msra.mxu0 0.0
    %1792 = vmatprep.subr.mxu0 0.0
    %1793 = vmatpush1.msra.mxu0 0.0
    %1794 = vmatprep.subr.mxu0 0.0
    %1795 = vmatpush1.msra.mxu0 0.0
    %1796 = vmatprep.subr.mxu0 0.0
    %1797 = vmatpush1.msra.mxu0 0.0
    %1798 = vmatprep.subr.mxu0 0.0
    %1799 = vmatpush1.msra.mxu0 0.0
    %1800 = vmatprep.subr.mxu0 0.0
    %1801 = vmatpush1.msra.mxu0 0.0
    %1802 = vmatprep.subr.mxu0 0.0
    %1803 = vmatpush1.msra.mxu0 0.0
    %1804 = vmatprep.subr.mxu0 0.0
    %1805 = vmatpush1.msra.mxu0 0.0
    %1806 = vmatprep.subr.mxu0 0.0
    %1807 = vmatpush1.msra.mxu0 0.0
    %1808 = vmatprep.subr.mxu0 0.0
    %1809 = vmatpush1.msra.mxu0 0.0
    %1810 = vmatprep.subr.mxu0 0.0
    %1811 = vmatpush1.msra.mxu0 0.0
    %1812 = vmatprep.subr.mxu0 0.0
    %1813 = vmatpush1.msra.mxu0 0.0
    %1814 = vmatprep.subr.mxu0 0.0
    %1815 = vmatpush1.msra.mxu0 0.0
    %1816 = vmatprep.subr.mxu0 0.0
    %1817 = vmatpush1.msra.mxu0 0.0
    %1818 = vmatprep.mubr.f32.mxu0 0.0
    %1819 = vmatmul.mubr.f32.gmra.mrb[0].mxu0 %v1752
    %v1820 = vpop.f32.mrb[0].mxu0
    %v1821 = vadd.f32 0.0, %v1820
    %v1822 = vpop.f32.mrb[0].mxu0
    %1823 = vdwg.mxu0
    %v1824 = vmul.f32 %v1821, %v1821
    %1826 = vrot.lane.b32.xlu0 %v1824, 32
    %v1827 = vpop.permute.xlu0 %1826
    %v1829 = vsel %vm46, %v1821, %v1827
    %v1830 = vsel %vm48, %v1829, 0.0
    %v1831 = vrot.slane %v1830, 4
    %v1832 = vadd.f32 %v1830, %v1831
    %v1833 = vrot.slane %v1832, 2
    %v1834 = vadd.f32 %v1832, %v1833
    %v1835 = vrot.slane %v1834, 1
    %v1836 = vadd.f32 %v1834, %v1835
    %v1837 = vmul.f32 %v1836, 0.125
    %v1838 = vmul.f32 %v1837, %v1837
    %1840 = vrot.lane.b32.xlu0 %v1838, 32
    %v1841 = vpop.permute.xlu0 %1840
    %v1843 = vsub.f32 %v1837, %v1841
    %v1844 = vmax.f32 %v1843, 0.0
    %v1845 = vadd.f32 %v1844, 1e-05
    %v1846 = vrsqrt.pop %v1845
    %v1848 = vrot.slane %v1846, 5
    %1849 = vrot.lane.b32.xlu0 %v1848, 96
    %v1850 = vpop.permute.xlu0 %1849
    %v1852 = vmul.f32 %v29, %v1850
    %v1853 = vmul.f32 %v1837, %v1852
    %v1855 = vrot.slane %v1853, 7
    %v1857 = vsub.f32 %v29, %v1855
    %v1858 = vlaneseq
    %v1859 = vshrl.u32 %v1858, 7
    %v1860 = vsub.s32 3, %v1859
    %v1861 = vrot.slane %v1852, %v1860
    %v1862 = vmul.f32 %v1821, %v1861
    %v1863 = vlaneseq
    %v1864 = vshrl.u32 %v1863, 7
    %v1865 = vsub.s32 4, %v1864
    %v1866 = vrot.slane %v1857, %v1865
    %v1867 = vadd.f32 %v1862, %v1866
    %v1868 = vmax.f32 %v1867, 0.0
    %v1870 = vsel %vm46, %v1868, 0
    %1872 = vmatprep.subr.mxu0 0.0
    %1873 = vmatpush1.msra.mxu0 %v88
    %1874 = vmatprep.subr.mxu0 0.0
    %1875 = vmatpush1.msra.mxu0 %v89
    %1876 = vmatprep.subr.mxu0 0.0
    %1877 = vmatpush1.msra.mxu0 %v90
    %1878 = vmatprep.subr.mxu0 0.0
    %1879 = vmatpush1.msra.mxu0 %v91
    %1880 = vmatprep.subr.mxu0 0.0
    %1881 = vmatpush1.msra.mxu0 0.0
    %1882 = vmatprep.subr.mxu0 0.0
    %1883 = vmatpush1.msra.mxu0 0.0
    %1884 = vmatprep.subr.mxu0 0.0
    %1885 = vmatpush1.msra.mxu0 0.0
    %1886 = vmatprep.subr.mxu0 0.0
    %1887 = vmatpush1.msra.mxu0 0.0
    %1888 = vmatprep.subr.mxu0 0.0
    %1889 = vmatpush1.msra.mxu0 0.0
    %1890 = vmatprep.subr.mxu0 0.0
    %1891 = vmatpush1.msra.mxu0 0.0
    %1892 = vmatprep.subr.mxu0 0.0
    %1893 = vmatpush1.msra.mxu0 0.0
    %1894 = vmatprep.subr.mxu0 0.0
    %1895 = vmatpush1.msra.mxu0 0.0
    %1896 = vmatprep.subr.mxu0 0.0
    %1897 = vmatpush1.msra.mxu0 0.0
    %1898 = vmatprep.subr.mxu0 0.0
    %1899 = vmatpush1.msra.mxu0 0.0
    %1900 = vmatprep.subr.mxu0 0.0
    %1901 = vmatpush1.msra.mxu0 0.0
    %1902 = vmatprep.subr.mxu0 0.0
    %1903 = vmatpush1.msra.mxu0 0.0
    %1904 = vmatprep.subr.mxu0 0.0
    %1905 = vmatpush1.msra.mxu0 0.0
    %1906 = vmatprep.subr.mxu0 0.0
    %1907 = vmatpush1.msra.mxu0 0.0
    %1908 = vmatprep.subr.mxu0 0.0
    %1909 = vmatpush1.msra.mxu0 0.0
    %1910 = vmatprep.subr.mxu0 0.0
    %1911 = vmatpush1.msra.mxu0 0.0
    %1912 = vmatprep.subr.mxu0 0.0
    %1913 = vmatpush1.msra.mxu0 0.0
    %1914 = vmatprep.subr.mxu0 0.0
    %1915 = vmatpush1.msra.mxu0 0.0
    %1916 = vmatprep.subr.mxu0 0.0
    %1917 = vmatpush1.msra.mxu0 0.0
    %1918 = vmatprep.subr.mxu0 0.0
    %1919 = vmatpush1.msra.mxu0 0.0
    %1920 = vmatprep.subr.mxu0 0.0
    %1921 = vmatpush1.msra.mxu0 0.0
    %1922 = vmatprep.subr.mxu0 0.0
    %1923 = vmatpush1.msra.mxu0 0.0
    %1924 = vmatprep.subr.mxu0 0.0
    %1925 = vmatpush1.msra.mxu0 0.0
    %1926 = vmatprep.subr.mxu0 0.0
    %1927 = vmatpush1.msra.mxu0 0.0
    %1928 = vmatprep.subr.mxu0 0.0
    %1929 = vmatpush1.msra.mxu0 0.0
    %1930 = vmatprep.subr.mxu0 0.0
    %1931 = vmatpush1.msra.mxu0 0.0
    %1932 = vmatprep.subr.mxu0 0.0
    %1933 = vmatpush1.msra.mxu0 0.0
    %1934 = vmatprep.subr.mxu0 0.0
    %1935 = vmatpush1.msra.mxu0 0.0
    %1936 = vmatprep.mubr.f32.mxu0 0.0
    %1937 = vmatmul.mubr.f32.gmra.mrb[0].mxu0 %v1870
    %v1938 = vpop.f32.mrb[0].mxu0
    %v1939 = vadd.f32 0.0, %v1938
    %v1940 = vpop.f32.mrb[0].mxu0
    %1941 = vdwg.mxu0
    %v1942 = vmul.f32 %v1939, %v1939
    %1944 = vrot.lane.b32.xlu0 %v1942, 32
    %v1945 = vpop.permute.xlu0 %1944
    %v1947 = vsel %vm46, %v1939, %v1945
    %v1948 = vsel %vm48, %v1947, 0.0
    %v1949 = vrot.slane %v1948, 4
    %v1950 = vadd.f32 %v1948, %v1949
    %v1951 = vrot.slane %v1950, 2
    %v1952 = vadd.f32 %v1950, %v1951
    %v1953 = vrot.slane %v1952, 1
    %v1954 = vadd.f32 %v1952, %v1953
    %v1955 = vmul.f32 %v1954, 0.125
    %v1956 = vmul.f32 %v1955, %v1955
    %1958 = vrot.lane.b32.xlu0 %v1956, 32
    %v1959 = vpop.permute.xlu0 %1958
    %v1961 = vsub.f32 %v1955, %v1959
    %v1962 = vmax.f32 %v1961, 0.0
    %v1963 = vadd.f32 %v1962, 1e-05
    %v1964 = vrsqrt.pop %v1963
    %v1966 = vrot.slane %v1964, 5
    %1967 = vrot.lane.b32.xlu0 %v1966, 96
    %v1968 = vpop.permute.xlu0 %1967
    %v1970 = vmul.f32 %v29, %v1968
    %v1971 = vmul.f32 %v1955, %v1970
    %v1973 = vrot.slane %v1971, 7
    %v1975 = vsub.f32 %v29, %v1973
    %v1976 = vlaneseq
    %v1977 = vshrl.u32 %v1976, 7
    %v1978 = vsub.s32 3, %v1977
    %v1979 = vrot.slane %v1970, %v1978
    %v1980 = vmul.f32 %v1939, %v1979
    %v1981 = vlaneseq
    %v1982 = vshrl.u32 %v1981, 7
    %v1983 = vsub.s32 4, %v1982
    %v1984 = vrot.slane %v1975, %v1983
    %v1985 = vadd.f32 %v1980, %v1984
    %v1986 = vadd.f32 %v1985, %v1750
    %v1987 = vmax.f32 %v1986, 0.0
    %v1989 = vsel %vm46, %v1987, 0
    %1991 = vmatprep.subr.mxu0 0.0
    %1992 = vmatpush1.msra.mxu0 %v88
    %1993 = vmatprep.subr.mxu0 0.0
    %1994 = vmatpush1.msra.mxu0 %v89
    %1995 = vmatprep.subr.mxu0 0.0
    %1996 = vmatpush1.msra.mxu0 %v90
    %1997 = vmatprep.subr.mxu0 0.0
    %1998 = vmatpush1.msra.mxu0 %v91
    %1999 = vmatprep.subr.mxu0 0.0
    %2000 = vmatpush1.msra.mxu0 0.0
    %2001 = vmatprep.subr.mxu0 0.0
    %2002 = vmatpush1.msra.mxu0 0.0
    %2003 = vmatprep.subr.mxu0 0.0
    %2004 = vmatpush1.msra.mxu0 0.0
    %2005 = vmatprep.subr.mxu0 0.0
    %2006 = vmatpush1.msra.mxu0 0.0
    %2007 = vmatprep.subr.mxu0 0.0
    %2008 = vmatpush1.msra.mxu0 0.0
    %2009 = vmatprep.subr.mxu0 0.0
    %2010 = vmatpush1.msra.mxu0 0.0
    %2011 = vmatprep.subr.mxu0 0.0
    %2012 = vmatpush1.msra.mxu0 0.0
    %2013 = vmatprep.subr.mxu0 0.0
    %2014 = vmatpush1.msra.mxu0 0.0
    %2015 = vmatprep.subr.mxu0 0.0
    %2016 = vmatpush1.msra.mxu0 0.0
    %2017 = vmatprep.subr.mxu0 0.0
    %2018 = vmatpush1.msra.mxu0 0.0
    %2019 = vmatprep.subr.mxu0 0.0
    %2020 = vmatpush1.msra.mxu0 0.0
    %2021 = vmatprep.subr.mxu0 0.0
    %2022 = vmatpush1.msra.mxu0 0.0
    %2023 = vmatprep.subr.mxu0 0.0
    %2024 = vmatpush1.msra.mxu0 0.0
    %2025 = vmatprep.subr.mxu0 0.0
    %2026 = vmatpush1.msra.mxu0 0.0
    %2027 = vmatprep.subr.mxu0 0.0
    %2028 = vmatpush1.msra.mxu0 0.0
    %2029 = vmatprep.subr.mxu0 0.0
    %2030 = vmatpush1.msra.mxu0 0.0
    %2031 = vmatprep.subr.mxu0 0.0
    %2032 = vmatpush1.msra.mxu0 0.0
    %2033 = vmatprep.subr.mxu0 0.0
    %2034 = vmatpush1.msra.mxu0 0.0
    %2035 = vmatprep.subr.mxu0 0.0
    %2036 = vmatpush1.msra.mxu0 0.0
    %2037 = vmatprep.subr.mxu0 0.0
    %2038 = vmatpush1.msra.mxu0 0.0
    %2039 = vmatprep.subr.mxu0 0.0
    %2040 = vmatpush1.msra.mxu0 0.0
    %2041 = vmatprep.subr.mxu0 0.0
    %2042 = vmatpush1.msra.mxu0 0.0
    %2043 = vmatprep.subr.mxu0 0.0
    %2044 = vmatpush1.msra.mxu0 0.0
    %2045 = vmatprep.subr.mxu0 0.0
    %2046 = vmatpush1.msra.mxu0 0.0
    %2047 = vmatprep.subr.mxu0 0.0
    %2048 = vmatpush1.msra.mxu0 0.0
    %2049 = vmatprep.subr.mxu0 0.0
    %2050 = vmatpush1.msra.mxu0 0.0
    %2051 = vmatprep.subr.mxu0 0.0
    %2052 = vmatpush1.msra.mxu0 0.0
    %2053 = vmatprep.subr.mxu0 0.0
    %2054 = vmatpush1.msra.mxu0 0.0
    %2055 = vmatprep.mubr.f32.mxu0 0.0
    %2056 = vmatmul.mubr.f32.gmra.mrb[0].mxu0 %v1989
    %v2057 = vpop.f32.mrb[0].mxu0
    %v2058 = vadd.f32 0.0, %v2057
    %v2059 = vpop.f32.mrb[0].mxu0
    %2060 = vdwg.mxu0
    %v2061 = vmul.f32 %v2058, %v2058
    %2063 = vrot.lane.b32.xlu0 %v2061, 32
    %v2064 = vpop.permute.xlu0 %2063
    %v2066 = vsel %vm46, %v2058, %v2064
    %v2067 = vsel %vm48, %v2066, 0.0
    %v2068 = vrot.slane %v2067, 4
    %v2069 = vadd.f32 %v2067, %v2068
    %v2070 = vrot.slane %v2069, 2
    %v2071 = vadd.f32 %v2069, %v2070
    %v2072 = vrot.slane %v2071, 1
    %v2073 = vadd.f32 %v2071, %v2072
    %v2074 = vmul.f32 %v2073, 0.125
    %v2075 = vmul.f32 %v2074, %v2074
    %2077 = vrot.lane.b32.xlu0 %v2075, 32
    %v2078 = vpop.permute.xlu0 %2077
    %v2080 = vsub.f32 %v2074, %v2078
    %v2081 = vmax.f32 %v2080, 0.0
    %v2082 = vadd.f32 %v2081, 1e-05
    %v2083 = vrsqrt.pop %v2082
    %v2085 = vrot.slane %v2083, 5
    %2086 = vrot.lane.b32.xlu0 %v2085, 96
    %v2087 = vpop.permute.xlu0 %2086
    %v2089 = vmul.f32 %v29, %v2087
    %v2090 = vmul.f32 %v2074, %v2089
    %v2092 = vrot.slane %v2090, 7
    %v2094 = vsub.f32 %v29, %v2092
    %v2095 = vlaneseq
    %v2096 = vshrl.u32 %v2095, 7
    %v2097 = vsub.s32 3, %v2096
    %v2098 = vrot.slane %v2089, %v2097
    %v2099 = vmul.f32 %v2058, %v2098
    %v2100 = vlaneseq
    %v2101 = vshrl.u32 %v2100, 7
    %v2102 = vsub.s32 4, %v2101
    %v2103 = vrot.slane %v2094, %v2102
    %v2104 = vadd.f32 %v2099, %v2103
    %v2105 = vmax.f32 %v2104, 0.0
    %v2107 = vsel %vm46, %v2105, 0
    %2109 = vmatprep.subr.mxu0 0.0
    %2110 = vmatpush1.msra.mxu0 %v88
    %2111 = vmatprep.subr.mxu0 0.0
    %2112 = vmatpush1.msra.mxu0 %v89
    %2113 = vmatprep.subr.mxu0 0.0
    %2114 = vmatpush1.msra.mxu0 %v90
    %2115 = vmatprep.subr.mxu0 0.0
    %2116 = vmatpush1.msra.mxu0 %v91
    %2117 = vmatprep.subr.mxu0 0.0
    %2118 = vmatpush1.msra.mxu0 0.0
    %2119 = vmatprep.subr.mxu0 0.0
    %2120 = vmatpush1.msra.mxu0 0.0
    %2121 = vmatprep.subr.mxu0 0.0
    %2122 = vmatpush1.msra.mxu0 0.0
    %2123 = vmatprep.subr.mxu0 0.0
    %2124 = vmatpush1.msra.mxu0 0.0
    %2125 = vmatprep.subr.mxu0 0.0
    %2126 = vmatpush1.msra.mxu0 0.0
    %2127 = vmatprep.subr.mxu0 0.0
    %2128 = vmatpush1.msra.mxu0 0.0
    %2129 = vmatprep.subr.mxu0 0.0
    %2130 = vmatpush1.msra.mxu0 0.0
    %2131 = vmatprep.subr.mxu0 0.0
    %2132 = vmatpush1.msra.mxu0 0.0
    %2133 = vmatprep.subr.mxu0 0.0
    %2134 = vmatpush1.msra.mxu0 0.0
    %2135 = vmatprep.subr.mxu0 0.0
    %2136 = vmatpush1.msra.mxu0 0.0
    %2137 = vmatprep.subr.mxu0 0.0
    %2138 = vmatpush1.msra.mxu0 0.0
    %2139 = vmatprep.subr.mxu0 0.0
    %2140 = vmatpush1.msra.mxu0 0.0
    %2141 = vmatprep.subr.mxu0 0.0
    %2142 = vmatpush1.msra.mxu0 0.0
    %2143 = vmatprep.subr.mxu0 0.0
    %2144 = vmatpush1.msra.mxu0 0.0
    %2145 = vmatprep.subr.mxu0 0.0
    %2146 = vmatpush1.msra.mxu0 0.0
    %2147 = vmatprep.subr.mxu0 0.0
    %2148 = vmatpush1.msra.mxu0 0.0
    %2149 = vmatprep.subr.mxu0 0.0
    %2150 = vmatpush1.msra.mxu0 0.0
    %2151 = vmatprep.subr.mxu0 0.0
    %2152 = vmatpush1.msra.mxu0 0.0
    %2153 = vmatprep.subr.mxu0 0.0
    %2154 = vmatpush1.msra.mxu0 0.0
    %2155 = vmatprep.subr.mxu0 0.0
    %2156 = vmatpush1.msra.mxu0 0.0
    %2157 = vmatprep.subr.mxu0 0.0
    %2158 = vmatpush1.msra.mxu0 0.0
    %2159 = vmatprep.subr.mxu0 0.0
    %2160 = vmatpush1.msra.mxu0 0.0
    %2161 = vmatprep.subr.mxu0 0.0
    %2162 = vmatpush1.msra.mxu0 0.0
    %2163 = vmatprep.subr.mxu0 0.0
    %2164 = vmatpush1.msra.mxu0 0.0
    %2165 = vmatprep.subr.mxu0 0.0
    %2166 = vmatpush1.msra.mxu0 0.0
    %2167 = vmatprep.subr.mxu0 0.0
    %2168 = vmatpush1.msra.mxu0 0.0
    %2169 = vmatprep.subr.mxu0 0.0
    %2170 = vmatpush1.msra.mxu0 0.0
    %2171 = vmatprep.subr.mxu0 0.0
    %2172 = vmatpush1.msra.mxu0 0.0
    %2173 = vmatprep.mubr.f32.mxu0 0.0
    %2174 = vmatmul.mubr.f32.gmra.mrb[0].mxu0 %v2107
    %v2175 = vpop.f32.mrb[0].mxu0
    %v2176 = vadd.f32 0.0, %v2175
    %v2177 = vpop.f32.mrb[0].mxu0
    %2178 = vdwg.mxu0
    %v2179 = vmul.f32 %v2176, %v2176
    %2181 = vrot.lane.b32.xlu0 %v2179, 32
    %v2182 = vpop.permute.xlu0 %2181
    %v2184 = vsel %vm46, %v2176, %v2182
    %v2185 = vsel %vm48, %v2184, 0.0
    %v2186 = vrot.slane %v2185, 4
    %v2187 = vadd.f32 %v2185, %v2186
    %v2188 = vrot.slane %v2187, 2
    %v2189 = vadd.f32 %v2187, %v2188
    %v2190 = vrot.slane %v2189, 1
    %v2191 = vadd.f32 %v2189, %v2190
    %v2192 = vmul.f32 %v2191, 0.125
    %v2193 = vmul.f32 %v2192, %v2192
    %2195 = vrot.lane.b32.xlu0 %v2193, 32
    %v2196 = vpop.permute.xlu0 %2195
    %v2198 = vsub.f32 %v2192, %v2196
    %v2199 = vmax.f32 %v2198, 0.0
    %v2200 = vadd.f32 %v2199, 1e-05
    %v2201 = vrsqrt.pop %v2200
    %v2203 = vrot.slane %v2201, 5
    %2204 = vrot.lane.b32.xlu0 %v2203, 96
    %v2205 = vpop.permute.xlu0 %2204
    %v2207 = vmul.f32 %v29, %v2205
    %v2208 = vmul.f32 %v2192, %v2207
    %v2210 = vrot.slane %v2208, 7
    %v2212 = vsub.f32 %v29, %v2210
    %v2213 = vlaneseq
    %v2214 = vshrl.u32 %v2213, 7
    %v2215 = vsub.s32 3, %v2214
    %v2216 = vrot.slane %v2207, %v2215
    %v2217 = vmul.f32 %v2176, %v2216
    %v2218 = vlaneseq
    %v2219 = vshrl.u32 %v2218, 7
    %v2220 = vsub.s32 4, %v2219
    %v2221 = vrot.slane %v2212, %v2220
    %v2222 = vadd.f32 %v2217, %v2221
    %v2223 = vadd.f32 %v2222, %v1987
    %v2224 = vmax.f32 %v2223, 0.0
    %v2226 = vsel %vm46, %v2224, 0
    %2228 = vmatprep.subr.mxu0 0.0
    %2229 = vmatpush1.msra.mxu0 %v88
    %2230 = vmatprep.subr.mxu0 0.0
    %2231 = vmatpush1.msra.mxu0 %v89
    %2232 = vmatprep.subr.mxu0 0.0
    %2233 = vmatpush1.msra.mxu0 %v90
    %2234 = vmatprep.subr.mxu0 0.0
    %2235 = vmatpush1.msra.mxu0 %v91
    %2236 = vmatprep.subr.mxu0 0.0
    %2237 = vmatpush1.msra.mxu0 0.0
    %2238 = vmatprep.subr.mxu0 0.0
    %2239 = vmatpush1.msra.mxu0 0.0
    %2240 = vmatprep.subr.mxu0 0.0
    %2241 = vmatpush1.msra.mxu0 0.0
    %2242 = vmatprep.subr.mxu0 0.0
    %2243 = vmatpush1.msra.mxu0 0.0
    %2244 = vmatprep.subr.mxu0 0.0
    %2245 = vmatpush1.msra.mxu0 0.0
    %2246 = vmatprep.subr.mxu0 0.0
    %2247 = vmatpush1.msra.mxu0 0.0
    %2248 = vmatprep.subr.mxu0 0.0
    %2249 = vmatpush1.msra.mxu0 0.0
    %2250 = vmatprep.subr.mxu0 0.0
    %2251 = vmatpush1.msra.mxu0 0.0
    %2252 = vmatprep.subr.mxu0 0.0
    %2253 = vmatpush1.msra.mxu0 0.0
    %2254 = vmatprep.subr.mxu0 0.0
    %2255 = vmatpush1.msra.mxu0 0.0
    %2256 = vmatprep.subr.mxu0 0.0
    %2257 = vmatpush1.msra.mxu0 0.0
    %2258 = vmatprep.subr.mxu0 0.0
    %2259 = vmatpush1.msra.mxu0 0.0
    %2260 = vmatprep.subr.mxu0 0.0
    %2261 = vmatpush1.msra.mxu0 0.0
    %2262 = vmatprep.subr.mxu0 0.0
    %2263 = vmatpush1.msra.mxu0 0.0
    %2264 = vmatprep.subr.mxu0 0.0
    %2265 = vmatpush1.msra.mxu0 0.0
    %2266 = vmatprep.subr.mxu0 0.0
    %2267 = vmatpush1.msra.mxu0 0.0
    %2268 = vmatprep.subr.mxu0 0.0
    %2269 = vmatpush1.msra.mxu0 0.0
    %2270 = vmatprep.subr.mxu0 0.0
    %2271 = vmatpush1.msra.mxu0 0.0
    %2272 = vmatprep.subr.mxu0 0.0
    %2273 = vmatpush1.msra.mxu0 0.0
    %2274 = vmatprep.subr.mxu0 0.0
    %2275 = vmatpush1.msra.mxu0 0.0
    %2276 = vmatprep.subr.mxu0 0.0
    %2277 = vmatpush1.msra.mxu0 0.0
    %2278 = vmatprep.subr.mxu0 0.0
    %2279 = vmatpush1.msra.mxu0 0.0
    %2280 = vmatprep.subr.mxu0 0.0
    %2281 = vmatpush1.msra.mxu0 0.0
    %2282 = vmatprep.subr.mxu0 0.0
    %2283 = vmatpush1.msra.mxu0 0.0
    %2284 = vmatprep.subr.mxu0 0.0
    %2285 = vmatpush1.msra.mxu0 0.0
    %2286 = vmatprep.subr.mxu0 0.0
    %2287 = vmatpush1.msra.mxu0 0.0
    %2288 = vmatprep.subr.mxu0 0.0
    %2289 = vmatpush1.msra.mxu0 0.0
    %2290 = vmatprep.subr.mxu0 0.0
    %2291 = vmatpush1.msra.mxu0 0.0
    %2292 = vmatprep.mubr.f32.mxu0 0.0
    %2293 = vmatmul.mubr.f32.gmra.mrb[0].mxu0 %v2226
    %v2294 = vpop.f32.mrb[0].mxu0
    %v2295 = vadd.f32 0.0, %v2294
    %v2296 = vpop.f32.mrb[0].mxu0
    %2297 = vdwg.mxu0
    %v2298 = vmul.f32 %v2295, %v2295
    %2300 = vrot.lane.b32.xlu0 %v2298, 32
    %v2301 = vpop.permute.xlu0 %2300
    %v2303 = vsel %vm46, %v2295, %v2301
    %v2304 = vsel %vm48, %v2303, 0.0
    %v2305 = vrot.slane %v2304, 4
    %v2306 = vadd.f32 %v2304, %v2305
    %v2307 = vrot.slane %v2306, 2
    %v2308 = vadd.f32 %v2306, %v2307
    %v2309 = vrot.slane %v2308, 1
    %v2310 = vadd.f32 %v2308, %v2309
    %v2311 = vmul.f32 %v2310, 0.125
    %v2312 = vmul.f32 %v2311, %v2311
    %2314 = vrot.lane.b32.xlu0 %v2312, 32
    %v2315 = vpop.permute.xlu0 %2314
    %v2317 = vsub.f32 %v2311, %v2315
    %v2318 = vmax.f32 %v2317, 0.0
    %v2319 = vadd.f32 %v2318, 1e-05
    %v2320 = vrsqrt.pop %v2319
    %v2322 = vrot.slane %v2320, 5
    %2323 = vrot.lane.b32.xlu0 %v2322, 96
    %v2324 = vpop.permute.xlu0 %2323
    %v2326 = vmul.f32 %v29, %v2324
    %v2327 = vmul.f32 %v2311, %v2326
    %v2329 = vrot.slane %v2327, 7
    %v2331 = vsub.f32 %v29, %v2329
    %v2332 = vlaneseq
    %v2333 = vshrl.u32 %v2332, 7
    %v2334 = vsub.s32 3, %v2333
    %v2335 = vrot.slane %v2326, %v2334
    %v2336 = vmul.f32 %v2295, %v2335
    %v2337 = vlaneseq
    %v2338 = vshrl.u32 %v2337, 7
    %v2339 = vsub.s32 4, %v2338
    %v2340 = vrot.slane %v2331, %v2339
    %v2341 = vadd.f32 %v2336, %v2340
    %v2342 = vmax.f32 %v2341, 0.0
    %v2344 = vsel %vm46, %v2342, 0
    %2346 = vmatprep.subr.mxu0 0.0
    %2347 = vmatpush1.msra.mxu0 %v88
    %2348 = vmatprep.subr.mxu0 0.0
    %2349 = vmatpush1.msra.mxu0 %v89
    %2350 = vmatprep.subr.mxu0 0.0
    %2351 = vmatpush1.msra.mxu0 %v90
    %2352 = vmatprep.subr.mxu0 0.0
    %2353 = vmatpush1.msra.mxu0 %v91
    %2354 = vmatprep.subr.mxu0 0.0
    %2355 = vmatpush1.msra.mxu0 0.0
    %2356 = vmatprep.subr.mxu0 0.0
    %2357 = vmatpush1.msra.mxu0 0.0
    %2358 = vmatprep.subr.mxu0 0.0
    %2359 = vmatpush1.msra.mxu0 0.0
    %2360 = vmatprep.subr.mxu0 0.0
    %2361 = vmatpush1.msra.mxu0 0.0
    %2362 = vmatprep.subr.mxu0 0.0
    %2363 = vmatpush1.msra.mxu0 0.0
    %2364 = vmatprep.subr.mxu0 0.0
    %2365 = vmatpush1.msra.mxu0 0.0
    %2366 = vmatprep.subr.mxu0 0.0
    %2367 = vmatpush1.msra.mxu0 0.0
    %2368 = vmatprep.subr.mxu0 0.0
    %2369 = vmatpush1.msra.mxu0 0.0
    %2370 = vmatprep.subr.mxu0 0.0
    %2371 = vmatpush1.msra.mxu0 0.0
    %2372 = vmatprep.subr.mxu0 0.0
    %2373 = vmatpush1.msra.mxu0 0.0
    %2374 = vmatprep.subr.mxu0 0.0
    %2375 = vmatpush1.msra.mxu0 0.0
    %2376 = vmatprep.subr.mxu0 0.0
    %2377 = vmatpush1.msra.mxu0 0.0
    %2378 = vmatprep.subr.mxu0 0.0
    %2379 = vmatpush1.msra.mxu0 0.0
    %2380 = vmatprep.subr.mxu0 0.0
    %2381 = vmatpush1.msra.mxu0 0.0
    %2382 = vmatprep.subr.mxu0 0.0
    %2383 = vmatpush1.msra.mxu0 0.0
    %2384 = vmatprep.subr.mxu0 0.0
    %2385 = vmatpush1.msra.mxu0 0.0
    %2386 = vmatprep.subr.mxu0 0.0
    %2387 = vmatpush1.msra.mxu0 0.0
    %2388 = vmatprep.subr.mxu0 0.0
    %2389 = vmatpush1.msra.mxu0 0.0
    %2390 = vmatprep.subr.mxu0 0.0
    %2391 = vmatpush1.msra.mxu0 0.0
    %2392 = vmatprep.subr.mxu0 0.0
    %2393 = vmatpush1.msra.mxu0 0.0
    %2394 = vmatprep.subr.mxu0 0.0
    %2395 = vmatpush1.msra.mxu0 0.0
    %2396 = vmatprep.subr.mxu0 0.0
    %2397 = vmatpush1.msra.mxu0 0.0
    %2398 = vmatprep.subr.mxu0 0.0
    %2399 = vmatpush1.msra.mxu0 0.0
    %2400 = vmatprep.subr.mxu0 0.0
    %2401 = vmatpush1.msra.mxu0 0.0
    %2402 = vmatprep.subr.mxu0 0.0
    %2403 = vmatpush1.msra.mxu0 0.0
    %2404 = vmatprep.subr.mxu0 0.0
    %2405 = vmatpush1.msra.mxu0 0.0
    %2406 = vmatprep.subr.mxu0 0.0
    %2407 = vmatpush1.msra.mxu0 0.0
    %2408 = vmatprep.subr.mxu0 0.0
    %2409 = vmatpush1.msra.mxu0 0.0
    %2410 = vmatprep.mubr.f32.mxu0 0.0
    %2411 = vmatmul.mubr.f32.gmra.mrb[0].mxu0 %v2344
    %v2412 = vpop.f32.mrb[0].mxu0
    %v2413 = vadd.f32 0.0, %v2412
    %v2414 = vpop.f32.mrb[0].mxu0
    %2415 = vdwg.mxu0
    %v2416 = vmul.f32 %v2413, %v2413
    %2418 = vrot.lane.b32.xlu0 %v2416, 32
    %v2419 = vpop.permute.xlu0 %2418
    %v2421 = vsel %vm46, %v2413, %v2419
    %v2422 = vsel %vm48, %v2421, 0.0
    %v2423 = vrot.slane %v2422, 4
    %v2424 = vadd.f32 %v2422, %v2423
    %v2425 = vrot.slane %v2424, 2
    %v2426 = vadd.f32 %v2424, %v2425
    %v2427 = vrot.slane %v2426, 1
    %v2428 = vadd.f32 %v2426, %v2427
    %v2429 = vmul.f32 %v2428, 0.125
    %v2430 = vmul.f32 %v2429, %v2429
    %2432 = vrot.lane.b32.xlu0 %v2430, 32
    %v2433 = vpop.permute.xlu0 %2432
    %v2435 = vsub.f32 %v2429, %v2433
    %v2436 = vmax.f32 %v2435, 0.0
    %v2437 = vadd.f32 %v2436, 1e-05
    %v2438 = vrsqrt.pop %v2437
    %v2440 = vrot.slane %v2438, 5
    %2441 = vrot.lane.b32.xlu0 %v2440, 96
    %v2442 = vpop.permute.xlu0 %2441
    %v2444 = vmul.f32 %v29, %v2442
    %v2445 = vmul.f32 %v2429, %v2444
    %v2447 = vrot.slane %v2445, 7
    %v2449 = vsub.f32 %v29, %v2447
    %v2450 = vlaneseq
    %v2451 = vshrl.u32 %v2450, 7
    %v2452 = vsub.s32 3, %v2451
    %v2453 = vrot.slane %v2444, %v2452
    %v2454 = vmul.f32 %v2413, %v2453
    %v2455 = vlaneseq
    %v2456 = vshrl.u32 %v2455, 7
    %v2457 = vsub.s32 4, %v2456
    %v2458 = vrot.slane %v2449, %v2457
    %v2459 = vadd.f32 %v2454, %v2458
    %v2460 = vadd.f32 %v2459, %v2224
    %v2461 = vmax.f32 %v2460, 0.0
    %v2463 = vsel %vm46, %v2461, 0
    %2465 = vmatprep.subr.mxu0 0.0
    %2466 = vmatpush1.msra.mxu0 %v88
    %2467 = vmatprep.subr.mxu0 0.0
    %2468 = vmatpush1.msra.mxu0 %v89
    %2469 = vmatprep.subr.mxu0 0.0
    %2470 = vmatpush1.msra.mxu0 %v90
    %2471 = vmatprep.subr.mxu0 0.0
    %2472 = vmatpush1.msra.mxu0 %v91
    %2473 = vmatprep.subr.mxu0 0.0
    %2474 = vmatpush1.msra.mxu0 0.0
    %2475 = vmatprep.subr.mxu0 0.0
    %2476 = vmatpush1.msra.mxu0 0.0
    %2477 = vmatprep.subr.mxu0 0.0
    %2478 = vmatpush1.msra.mxu0 0.0
    %2479 = vmatprep.subr.mxu0 0.0
    %2480 = vmatpush1.msra.mxu0 0.0
    %2481 = vmatprep.subr.mxu0 0.0
    %2482 = vmatpush1.msra.mxu0 0.0
    %2483 = vmatprep.subr.mxu0 0.0
    %2484 = vmatpush1.msra.mxu0 0.0
    %2485 = vmatprep.subr.mxu0 0.0
    %2486 = vmatpush1.msra.mxu0 0.0
    %2487 = vmatprep.subr.mxu0 0.0
    %2488 = vmatpush1.msra.mxu0 0.0
    %2489 = vmatprep.subr.mxu0 0.0
    %2490 = vmatpush1.msra.mxu0 0.0
    %2491 = vmatprep.subr.mxu0 0.0
    %2492 = vmatpush1.msra.mxu0 0.0
    %2493 = vmatprep.subr.mxu0 0.0
    %2494 = vmatpush1.msra.mxu0 0.0
    %2495 = vmatprep.subr.mxu0 0.0
    %2496 = vmatpush1.msra.mxu0 0.0
    %2497 = vmatprep.subr.mxu0 0.0
    %2498 = vmatpush1.msra.mxu0 0.0
    %2499 = vmatprep.subr.mxu0 0.0
    %2500 = vmatpush1.msra.mxu0 0.0
    %2501 = vmatprep.subr.mxu0 0.0
    %2502 = vmatpush1.msra.mxu0 0.0
    %2503 = vmatprep.subr.mxu0 0.0
    %2504 = vmatpush1.msra.mxu0 0.0
    %2505 = vmatprep.subr.mxu0 0.0
    %2506 = vmatpush1.msra.mxu0 0.0
    %2507 = vmatprep.subr.mxu0 0.0
    %2508 = vmatpush1.msra.mxu0 0.0
    %2509 = vmatprep.subr.mxu0 0.0
    %2510 = vmatpush1.msra.mxu0 0.0
    %2511 = vmatprep.subr.mxu0 0.0
    %2512 = vmatpush1.msra.mxu0 0.0
    %2513 = vmatprep.subr.mxu0 0.0
    %2514 = vmatpush1.msra.mxu0 0.0
    %2515 = vmatprep.subr.mxu0 0.0
    %2516 = vmatpush1.msra.mxu0 0.0
    %2517 = vmatprep.subr.mxu0 0.0
    %2518 = vmatpush1.msra.mxu0 0.0
    %2519 = vmatprep.subr.mxu0 0.0
    %2520 = vmatpush1.msra.mxu0 0.0
    %2521 = vmatprep.subr.mxu0 0.0
    %2522 = vmatpush1.msra.mxu0 0.0
    %2523 = vmatprep.subr.mxu0 0.0
    %2524 = vmatpush1.msra.mxu0 0.0
    %2525 = vmatprep.subr.mxu0 0.0
    %2526 = vmatpush1.msra.mxu0 0.0
    %2527 = vmatprep.subr.mxu0 0.0
    %2528 = vmatpush1.msra.mxu0 0.0
    %2529 = vmatprep.mubr.f32.mxu0 0.0
    %2530 = vmatmul.mubr.f32.gmra.mrb[0].mxu0 %v2463
    %v2531 = vpop.f32.mrb[0].mxu0
    %v2532 = vadd.f32 0.0, %v2531
    %v2533 = vpop.f32.mrb[0].mxu0
    %2534 = vdwg.mxu0
    %v2535 = vmul.f32 %v2532, %v2532
    %2537 = vrot.lane.b32.xlu0 %v2535, 32
    %v2538 = vpop.permute.xlu0 %2537
    %v2540 = vsel %vm46, %v2532, %v2538
    %v2541 = vsel %vm48, %v2540, 0.0
    %v2542 = vrot.slane %v2541, 4
    %v2543 = vadd.f32 %v2541, %v2542
    %v2544 = vrot.slane %v2543, 2
    %v2545 = vadd.f32 %v2543, %v2544
    %v2546 = vrot.slane %v2545, 1
    %v2547 = vadd.f32 %v2545, %v2546
    %v2548 = vmul.f32 %v2547, 0.125
    %v2549 = vmul.f32 %v2548, %v2548
    %2551 = vrot.lane.b32.xlu0 %v2549, 32
    %v2552 = vpop.permute.xlu0 %2551
    %v2554 = vsub.f32 %v2548, %v2552
    %v2555 = vmax.f32 %v2554, 0.0
    %v2556 = vadd.f32 %v2555, 1e-05
    %v2557 = vrsqrt.pop %v2556
    %v2559 = vrot.slane %v2557, 5
    %2560 = vrot.lane.b32.xlu0 %v2559, 96
    %v2561 = vpop.permute.xlu0 %2560
    %v2563 = vmul.f32 %v29, %v2561
    %v2564 = vmul.f32 %v2548, %v2563
    %v2566 = vrot.slane %v2564, 7
    %v2568 = vsub.f32 %v29, %v2566
    %v2569 = vlaneseq
    %v2570 = vshrl.u32 %v2569, 7
    %v2571 = vsub.s32 3, %v2570
    %v2572 = vrot.slane %v2563, %v2571
    %v2573 = vmul.f32 %v2532, %v2572
    %v2574 = vlaneseq
    %v2575 = vshrl.u32 %v2574, 7
    %v2576 = vsub.s32 4, %v2575
    %v2577 = vrot.slane %v2568, %v2576
    %v2578 = vadd.f32 %v2573, %v2577
    %v2579 = vmax.f32 %v2578, 0.0
    %v2581 = vsel %vm46, %v2579, 0
    %2583 = vmatprep.subr.mxu0 0.0
    %2584 = vmatpush1.msra.mxu0 %v88
    %2585 = vmatprep.subr.mxu0 0.0
    %2586 = vmatpush1.msra.mxu0 %v89
    %2587 = vmatprep.subr.mxu0 0.0
    %2588 = vmatpush1.msra.mxu0 %v90
    %2589 = vmatprep.subr.mxu0 0.0
    %2590 = vmatpush1.msra.mxu0 %v91
    %2591 = vmatprep.subr.mxu0 0.0
    %2592 = vmatpush1.msra.mxu0 0.0
    %2593 = vmatprep.subr.mxu0 0.0
    %2594 = vmatpush1.msra.mxu0 0.0
    %2595 = vmatprep.subr.mxu0 0.0
    %2596 = vmatpush1.msra.mxu0 0.0
    %2597 = vmatprep.subr.mxu0 0.0
    %2598 = vmatpush1.msra.mxu0 0.0
    %2599 = vmatprep.subr.mxu0 0.0
    %2600 = vmatpush1.msra.mxu0 0.0
    %2601 = vmatprep.subr.mxu0 0.0
    %2602 = vmatpush1.msra.mxu0 0.0
    %2603 = vmatprep.subr.mxu0 0.0
    %2604 = vmatpush1.msra.mxu0 0.0
    %2605 = vmatprep.subr.mxu0 0.0
    %2606 = vmatpush1.msra.mxu0 0.0
    %2607 = vmatprep.subr.mxu0 0.0
    %2608 = vmatpush1.msra.mxu0 0.0
    %2609 = vmatprep.subr.mxu0 0.0
    %2610 = vmatpush1.msra.mxu0 0.0
    %2611 = vmatprep.subr.mxu0 0.0
    %2612 = vmatpush1.msra.mxu0 0.0
    %2613 = vmatprep.subr.mxu0 0.0
    %2614 = vmatpush1.msra.mxu0 0.0
    %2615 = vmatprep.subr.mxu0 0.0
    %2616 = vmatpush1.msra.mxu0 0.0
    %2617 = vmatprep.subr.mxu0 0.0
    %2618 = vmatpush1.msra.mxu0 0.0
    %2619 = vmatprep.subr.mxu0 0.0
    %2620 = vmatpush1.msra.mxu0 0.0
    %2621 = vmatprep.subr.mxu0 0.0
    %2622 = vmatpush1.msra.mxu0 0.0
    %2623 = vmatprep.subr.mxu0 0.0
    %2624 = vmatpush1.msra.mxu0 0.0
    %2625 = vmatprep.subr.mxu0 0.0
    %2626 = vmatpush1.msra.mxu0 0.0
    %2627 = vmatprep.subr.mxu0 0.0
    %2628 = vmatpush1.msra.mxu0 0.0
    %2629 = vmatprep.subr.mxu0 0.0
    %2630 = vmatpush1.msra.mxu0 0.0
    %2631 = vmatprep.subr.mxu0 0.0
    %2632 = vmatpush1.msra.mxu0 0.0
    %2633 = vmatprep.subr.mxu0 0.0
    %2634 = vmatpush1.msra.mxu0 0.0
    %2635 = vmatprep.subr.mxu0 0.0
    %2636 = vmatpush1.msra.mxu0 0.0
    %2637 = vmatprep.subr.mxu0 0.0
    %2638 = vmatpush1.msra.mxu0 0.0
    %2639 = vmatprep.subr.mxu0 0.0
    %2640 = vmatpush1.msra.mxu0 0.0
    %2641 = vmatprep.subr.mxu0 0.0
    %2642 = vmatpush1.msra.mxu0 0.0
    %2643 = vmatprep.subr.mxu0 0.0
    %2644 = vmatpush1.msra.mxu0 0.0
    %2645 = vmatprep.subr.mxu0 0.0
    %2646 = vmatpush1.msra.mxu0 0.0
    %2647 = vmatprep.mubr.f32.mxu0 0.0
    %2648 = vmatmul.mubr.f32.gmra.mrb[0].mxu0 %v2581
    %v2649 = vpop.f32.mrb[0].mxu0
    %v2650 = vadd.f32 0.0, %v2649
    %v2651 = vpop.f32.mrb[0].mxu0
    %2652 = vdwg.mxu0
    %v2653 = vmul.f32 %v2650, %v2650
    %2655 = vrot.lane.b32.xlu0 %v2653, 32
    %v2656 = vpop.permute.xlu0 %2655
    %v2658 = vsel %vm46, %v2650, %v2656
    %v2659 = vsel %vm48, %v2658, 0.0
    %v2660 = vrot.slane %v2659, 4
    %v2661 = vadd.f32 %v2659, %v2660
    %v2662 = vrot.slane %v2661, 2
    %v2663 = vadd.f32 %v2661, %v2662
    %v2664 = vrot.slane %v2663, 1
    %v2665 = vadd.f32 %v2663, %v2664
    %v2666 = vmul.f32 %v2665, 0.125
    %v2667 = vmul.f32 %v2666, %v2666
    %2669 = vrot.lane.b32.xlu0 %v2667, 32
    %v2670 = vpop.permute.xlu0 %2669
    %v2672 = vsub.f32 %v2666, %v2670
    %v2673 = vmax.f32 %v2672, 0.0
    %v2674 = vadd.f32 %v2673, 1e-05
    %v2675 = vrsqrt.pop %v2674
    %v2677 = vrot.slane %v2675, 5
    %2678 = vrot.lane.b32.xlu0 %v2677, 96
    %v2679 = vpop.permute.xlu0 %2678
    %v2681 = vmul.f32 %v29, %v2679
    %v2682 = vmul.f32 %v2666, %v2681
    %v2684 = vrot.slane %v2682, 7
    %v2686 = vsub.f32 %v29, %v2684
    %v2687 = vlaneseq
    %v2688 = vshrl.u32 %v2687, 7
    %v2689 = vsub.s32 3, %v2688
    %v2690 = vrot.slane %v2681, %v2689
    %v2691 = vmul.f32 %v2650, %v2690
    %v2692 = vlaneseq
    %v2693 = vshrl.u32 %v2692, 7
    %v2694 = vsub.s32 4, %v2693
    %v2695 = vrot.slane %v2686, %v2694
    %v2696 = vadd.f32 %v2691, %v2695
    %v2697 = vadd.f32 %v2696, %v2461
    %v2698 = vmax.f32 %v2697, 0.0
    %v2700 = vsel %vm46, %v2698, 0
    %2702 = vmatprep.subr.mxu0 0.0
    %2703 = vmatpush1.msra.mxu0 %v88
    %2704 = vmatprep.subr.mxu0 0.0
    %2705 = vmatpush1.msra.mxu0 %v89
    %2706 = vmatprep.subr.mxu0 0.0
    %2707 = vmatpush1.msra.mxu0 %v90
    %2708 = vmatprep.subr.mxu0 0.0
    %2709 = vmatpush1.msra.mxu0 %v91
    %2710 = vmatprep.subr.mxu0 0.0
    %2711 = vmatpush1.msra.mxu0 0.0
    %2712 = vmatprep.subr.mxu0 0.0
    %2713 = vmatpush1.msra.mxu0 0.0
    %2714 = vmatprep.subr.mxu0 0.0
    %2715 = vmatpush1.msra.mxu0 0.0
    %2716 = vmatprep.subr.mxu0 0.0
    %2717 = vmatpush1.msra.mxu0 0.0
    %2718 = vmatprep.subr.mxu0 0.0
    %2719 = vmatpush1.msra.mxu0 0.0
    %2720 = vmatprep.subr.mxu0 0.0
    %2721 = vmatpush1.msra.mxu0 0.0
    %2722 = vmatprep.subr.mxu0 0.0
    %2723 = vmatpush1.msra.mxu0 0.0
    %2724 = vmatprep.subr.mxu0 0.0
    %2725 = vmatpush1.msra.mxu0 0.0
    %2726 = vmatprep.subr.mxu0 0.0
    %2727 = vmatpush1.msra.mxu0 0.0
    %2728 = vmatprep.subr.mxu0 0.0
    %2729 = vmatpush1.msra.mxu0 0.0
    %2730 = vmatprep.subr.mxu0 0.0
    %2731 = vmatpush1.msra.mxu0 0.0
    %2732 = vmatprep.subr.mxu0 0.0
    %2733 = vmatpush1.msra.mxu0 0.0
    %2734 = vmatprep.subr.mxu0 0.0
    %2735 = vmatpush1.msra.mxu0 0.0
    %2736 = vmatprep.subr.mxu0 0.0
    %2737 = vmatpush1.msra.mxu0 0.0
    %2738 = vmatprep.subr.mxu0 0.0
    %2739 = vmatpush1.msra.mxu0 0.0
    %2740 = vmatprep.subr.mxu0 0.0
    %2741 = vmatpush1.msra.mxu0 0.0
    %2742 = vmatprep.subr.mxu0 0.0
    %2743 = vmatpush1.msra.mxu0 0.0
    %2744 = vmatprep.subr.mxu0 0.0
    %2745 = vmatpush1.msra.mxu0 0.0
    %2746 = vmatprep.subr.mxu0 0.0
    %2747 = vmatpush1.msra.mxu0 0.0
    %2748 = vmatprep.subr.mxu0 0.0
    %2749 = vmatpush1.msra.mxu0 0.0
    %2750 = vmatprep.subr.mxu0 0.0
    %2751 = vmatpush1.msra.mxu0 0.0
    %2752 = vmatprep.subr.mxu0 0.0
    %2753 = vmatpush1.msra.mxu0 0.0
    %2754 = vmatprep.subr.mxu0 0.0
    %2755 = vmatpush1.msra.mxu0 0.0
    %2756 = vmatprep.subr.mxu0 0.0
    %2757 = vmatpush1.msra.mxu0 0.0
    %2758 = vmatprep.subr.mxu0 0.0
    %2759 = vmatpush1.msra.mxu0 0.0
    %2760 = vmatprep.subr.mxu0 0.0
    %2761 = vmatpush1.msra.mxu0 0.0
    %2762 = vmatprep.subr.mxu0 0.0
    %2763 = vmatpush1.msra.mxu0 0.0
    %2764 = vmatprep.subr.mxu0 0.0
    %2765 = vmatpush1.msra.mxu0 0.0
    %2766 = vmatprep.mubr.f32.mxu0 0.0
    %2767 = vmatmul.mubr.f32.gmra.mrb[0].mxu0 %v2700
    %v2768 = vpop.f32.mrb[0].mxu0
    %v2769 = vadd.f32 0.0, %v2768
    %v2770 = vpop.f32.mrb[0].mxu0
    %2771 = vdwg.mxu0
    %v2772 = vmul.f32 %v2769, %v2769
    %2774 = vrot.lane.b32.xlu0 %v2772, 32
    %v2775 = vpop.permute.xlu0 %2774
    %v2777 = vsel %vm46, %v2769, %v2775
    %v2778 = vsel %vm48, %v2777, 0.0
    %v2779 = vrot.slane %v2778, 4
    %v2780 = vadd.f32 %v2778, %v2779
    %v2781 = vrot.slane %v2780, 2
    %v2782 = vadd.f32 %v2780, %v2781
    %v2783 = vrot.slane %v2782, 1
    %v2784 = vadd.f32 %v2782, %v2783
    %v2785 = vmul.f32 %v2784, 0.125
    %v2786 = vmul.f32 %v2785, %v2785
    %2788 = vrot.lane.b32.xlu0 %v2786, 32
    %v2789 = vpop.permute.xlu0 %2788
    %v2791 = vsub.f32 %v2785, %v2789
    %v2792 = vmax.f32 %v2791, 0.0
    %v2793 = vadd.f32 %v2792, 1e-05
    %v2794 = vrsqrt.pop %v2793
    %v2796 = vrot.slane %v2794, 5
    %2797 = vrot.lane.b32.xlu0 %v2796, 96
    %v2798 = vpop.permute.xlu0 %2797
    %v2800 = vmul.f32 %v29, %v2798
    %v2801 = vmul.f32 %v2785, %v2800
    %v2803 = vrot.slane %v2801, 7
    %v2805 = vsub.f32 %v29, %v2803
    %v2806 = vlaneseq
    %v2807 = vshrl.u32 %v2806, 7
    %v2808 = vsub.s32 3, %v2807
    %v2809 = vrot.slane %v2800, %v2808
    %v2810 = vmul.f32 %v2769, %v2809
    %v2811 = vlaneseq
    %v2812 = vshrl.u32 %v2811, 7
    %v2813 = vsub.s32 4, %v2812
    %v2814 = vrot.slane %v2805, %v2813
    %v2815 = vadd.f32 %v2810, %v2814
    %v2816 = vmax.f32 %v2815, 0.0
    %v2818 = vsel %vm46, %v2816, 0
    %2820 = vmatprep.subr.mxu0 0.0
    %2821 = vmatpush1.msra.mxu0 %v88
    %2822 = vmatprep.subr.mxu0 0.0
    %2823 = vmatpush1.msra.mxu0 %v89
    %2824 = vmatprep.subr.mxu0 0.0
    %2825 = vmatpush1.msra.mxu0 %v90
    %2826 = vmatprep.subr.mxu0 0.0
    %2827 = vmatpush1.msra.mxu0 %v91
    %2828 = vmatprep.subr.mxu0 0.0
    %2829 = vmatpush1.msra.mxu0 0.0
    %2830 = vmatprep.subr.mxu0 0.0
    %2831 = vmatpush1.msra.mxu0 0.0
    %2832 = vmatprep.subr.mxu0 0.0
    %2833 = vmatpush1.msra.mxu0 0.0
    %2834 = vmatprep.subr.mxu0 0.0
    %2835 = vmatpush1.msra.mxu0 0.0
    %2836 = vmatprep.subr.mxu0 0.0
    %2837 = vmatpush1.msra.mxu0 0.0
    %2838 = vmatprep.subr.mxu0 0.0
    %2839 = vmatpush1.msra.mxu0 0.0
    %2840 = vmatprep.subr.mxu0 0.0
    %2841 = vmatpush1.msra.mxu0 0.0
    %2842 = vmatprep.subr.mxu0 0.0
    %2843 = vmatpush1.msra.mxu0 0.0
    %2844 = vmatprep.subr.mxu0 0.0
    %2845 = vmatpush1.msra.mxu0 0.0
    %2846 = vmatprep.subr.mxu0 0.0
    %2847 = vmatpush1.msra.mxu0 0.0
    %2848 = vmatprep.subr.mxu0 0.0
    %2849 = vmatpush1.msra.mxu0 0.0
    %2850 = vmatprep.subr.mxu0 0.0
    %2851 = vmatpush1.msra.mxu0 0.0
    %2852 = vmatprep.subr.mxu0 0.0
    %2853 = vmatpush1.msra.mxu0 0.0
    %2854 = vmatprep.subr.mxu0 0.0
    %2855 = vmatpush1.msra.mxu0 0.0
    %2856 = vmatprep.subr.mxu0 0.0
    %2857 = vmatpush1.msra.mxu0 0.0
    %2858 = vmatprep.subr.mxu0 0.0
    %2859 = vmatpush1.msra.mxu0 0.0
    %2860 = vmatprep.subr.mxu0 0.0
    %2861 = vmatpush1.msra.mxu0 0.0
    %2862 = vmatprep.subr.mxu0 0.0
    %2863 = vmatpush1.msra.mxu0 0.0
    %2864 = vmatprep.subr.mxu0 0.0
    %2865 = vmatpush1.msra.mxu0 0.0
    %2866 = vmatprep.subr.mxu0 0.0
    %2867 = vmatpush1.msra.mxu0 0.0
    %2868 = vmatprep.subr.mxu0 0.0
    %2869 = vmatpush1.msra.mxu0 0.0
    %2870 = vmatprep.subr.mxu0 0.0
    %2871 = vmatpush1.msra.mxu0 0.0
    %2872 = vmatprep.subr.mxu0 0.0
    %2873 = vmatpush1.msra.mxu0 0.0
    %2874 = vmatprep.subr.mxu0 0.0
    %2875 = vmatpush1.msra.mxu0 0.0
    %2876 = vmatprep.subr.mxu0 0.0
    %2877 = vmatpush1.msra.mxu0 0.0
    %2878 = vmatprep.subr.mxu0 0.0
    %2879 = vmatpush1.msra.mxu0 0.0
    %2880 = vmatprep.subr.mxu0 0.0
    %2881 = vmatpush1.msra.mxu0 0.0
    %2882 = vmatprep.subr.mxu0 0.0
    %2883 = vmatpush1.msra.mxu0 0.0
    %2884 = vmatprep.mubr.f32.mxu0 0.0
    %2885 = vmatmul.mubr.f32.gmra.mrb[0].mxu0 %v2818
    %v2886 = vpop.f32.mrb[0].mxu0
    %v2887 = vadd.f32 0.0, %v2886
    %v2888 = vpop.f32.mrb[0].mxu0
    %2889 = vdwg.mxu0
    %v2890 = vmul.f32 %v2887, %v2887
    %2892 = vrot.lane.b32.xlu0 %v2890, 32
    %v2893 = vpop.permute.xlu0 %2892
    %v2895 = vsel %vm46, %v2887, %v2893
    %v2896 = vsel %vm48, %v2895, 0.0
    %v2897 = vrot.slane %v2896, 4
    %v2898 = vadd.f32 %v2896, %v2897
    %v2899 = vrot.slane %v2898, 2
    %v2900 = vadd.f32 %v2898, %v2899
    %v2901 = vrot.slane %v2900, 1
    %v2902 = vadd.f32 %v2900, %v2901
    %v2903 = vmul.f32 %v2902, 0.125
    %v2904 = vmul.f32 %v2903, %v2903
    %2906 = vrot.lane.b32.xlu0 %v2904, 32
    %v2907 = vpop.permute.xlu0 %2906
    %v2909 = vsub.f32 %v2903, %v2907
    %v2910 = vmax.f32 %v2909, 0.0
    %v2911 = vadd.f32 %v2910, 1e-05
    %v2912 = vrsqrt.pop %v2911
    %v2914 = vrot.slane %v2912, 5
    %2915 = vrot.lane.b32.xlu0 %v2914, 96
    %v2916 = vpop.permute.xlu0 %2915
    %v2918 = vmul.f32 %v29, %v2916
    %v2919 = vmul.f32 %v2903, %v2918
    %v2921 = vrot.slane %v2919, 7
    %v2923 = vsub.f32 %v29, %v2921
    %v2924 = vlaneseq
    %v2925 = vshrl.u32 %v2924, 7
    %v2926 = vsub.s32 3, %v2925
    %v2927 = vrot.slane %v2918, %v2926
    %v2928 = vmul.f32 %v2887, %v2927
    %v2929 = vlaneseq
    %v2930 = vshrl.u32 %v2929, 7
    %v2931 = vsub.s32 4, %v2930
    %v2932 = vrot.slane %v2923, %v2931
    %v2933 = vadd.f32 %v2928, %v2932
    %v2934 = vadd.f32 %v2933, %v2698
    %v2935 = vmax.f32 %v2934, 0.0
    %v2937 = vsel %vm46, %v2935, 0
    %2939 = vmatprep.subr.mxu0 0.0
    %2940 = vmatpush1.msra.mxu0 %v88
    %2941 = vmatprep.subr.mxu0 0.0
    %2942 = vmatpush1.msra.mxu0 %v89
    %2943 = vmatprep.subr.mxu0 0.0
    %2944 = vmatpush1.msra.mxu0 %v90
    %2945 = vmatprep.subr.mxu0 0.0
    %2946 = vmatpush1.msra.mxu0 %v91
    %2947 = vmatprep.subr.mxu0 0.0
    %2948 = vmatpush1.msra.mxu0 0.0
    %2949 = vmatprep.subr.mxu0 0.0
    %2950 = vmatpush1.msra.mxu0 0.0
    %2951 = vmatprep.subr.mxu0 0.0
    %2952 = vmatpush1.msra.mxu0 0.0
    %2953 = vmatprep.subr.mxu0 0.0
    %2954 = vmatpush1.msra.mxu0 0.0
    %2955 = vmatprep.subr.mxu0 0.0
    %2956 = vmatpush1.msra.mxu0 0.0
    %2957 = vmatprep.subr.mxu0 0.0
    %2958 = vmatpush1.msra.mxu0 0.0
    %2959 = vmatprep.subr.mxu0 0.0
    %2960 = vmatpush1.msra.mxu0 0.0
    %2961 = vmatprep.subr.mxu0 0.0
    %2962 = vmatpush1.msra.mxu0 0.0
    %2963 = vmatprep.subr.mxu0 0.0
    %2964 = vmatpush1.msra.mxu0 0.0
    %2965 = vmatprep.subr.mxu0 0.0
    %2966 = vmatpush1.msra.mxu0 0.0
    %2967 = vmatprep.subr.mxu0 0.0
    %2968 = vmatpush1.msra.mxu0 0.0
    %2969 = vmatprep.subr.mxu0 0.0
    %2970 = vmatpush1.msra.mxu0 0.0
    %2971 = vmatprep.subr.mxu0 0.0
    %2972 = vmatpush1.msra.mxu0 0.0
    %2973 = vmatprep.subr.mxu0 0.0
    %2974 = vmatpush1.msra.mxu0 0.0
    %2975 = vmatprep.subr.mxu0 0.0
    %2976 = vmatpush1.msra.mxu0 0.0
    %2977 = vmatprep.subr.mxu0 0.0
    %2978 = vmatpush1.msra.mxu0 0.0
    %2979 = vmatprep.subr.mxu0 0.0
    %2980 = vmatpush1.msra.mxu0 0.0
    %2981 = vmatprep.subr.mxu0 0.0
    %2982 = vmatpush1.msra.mxu0 0.0
    %2983 = vmatprep.subr.mxu0 0.0
    %2984 = vmatpush1.msra.mxu0 0.0
    %2985 = vmatprep.subr.mxu0 0.0
    %2986 = vmatpush1.msra.mxu0 0.0
    %2987 = vmatprep.subr.mxu0 0.0
    %2988 = vmatpush1.msra.mxu0 0.0
    %2989 = vmatprep.subr.mxu0 0.0
    %2990 = vmatpush1.msra.mxu0 0.0
    %2991 = vmatprep.subr.mxu0 0.0
    %2992 = vmatpush1.msra.mxu0 0.0
    %2993 = vmatprep.subr.mxu0 0.0
    %2994 = vmatpush1.msra.mxu0 0.0
    %2995 = vmatprep.subr.mxu0 0.0
    %2996 = vmatpush1.msra.mxu0 0.0
    %2997 = vmatprep.subr.mxu0 0.0
    %2998 = vmatpush1.msra.mxu0 0.0
    %2999 = vmatprep.subr.mxu0 0.0
    %3000 = vmatpush1.msra.mxu0 0.0
    %3001 = vmatprep.subr.mxu0 0.0
    %3002 = vmatpush1.msra.mxu0 0.0
    %3003 = vmatprep.mubr.f32.mxu0 0.0
    %3004 = vmatmul.mubr.f32.gmra.mrb[0].mxu0 %v2937
    %v3005 = vpop.f32.mrb[0].mxu0
    %v3006 = vadd.f32 0.0, %v3005
    %v3007 = vpop.f32.mrb[0].mxu0
    %3008 = vdwg.mxu0
    %v3009 = vmul.f32 %v3006, %v3006
    %3011 = vrot.lane.b32.xlu0 %v3009, 32
    %v3012 = vpop.permute.xlu0 %3011
    %v3014 = vsel %vm46, %v3006, %v3012
    %v3015 = vsel %vm48, %v3014, 0.0
    %v3016 = vrot.slane %v3015, 4
    %v3017 = vadd.f32 %v3015, %v3016
    %v3018 = vrot.slane %v3017, 2
    %v3019 = vadd.f32 %v3017, %v3018
    %v3020 = vrot.slane %v3019, 1
    %v3021 = vadd.f32 %v3019, %v3020
    %v3022 = vmul.f32 %v3021, 0.125
    %v3023 = vmul.f32 %v3022, %v3022
    %3025 = vrot.lane.b32.xlu0 %v3023, 32
    %v3026 = vpop.permute.xlu0 %3025
    %v3028 = vsub.f32 %v3022, %v3026
    %v3029 = vmax.f32 %v3028, 0.0
    %v3030 = vadd.f32 %v3029, 1e-05
    %v3031 = vrsqrt.pop %v3030
    %v3033 = vrot.slane %v3031, 5
    %3034 = vrot.lane.b32.xlu0 %v3033, 96
    %v3035 = vpop.permute.xlu0 %3034
    %v3037 = vmul.f32 %v29, %v3035
    %v3038 = vmul.f32 %v3022, %v3037
    %v3040 = vrot.slane %v3038, 7
    %v3042 = vsub.f32 %v29, %v3040
    %v3043 = vlaneseq
    %v3044 = vshrl.u32 %v3043, 7
    %v3045 = vsub.s32 3, %v3044
    %v3046 = vrot.slane %v3037, %v3045
    %v3047 = vmul.f32 %v3006, %v3046
    %v3048 = vlaneseq
    %v3049 = vshrl.u32 %v3048, 7
    %v3050 = vsub.s32 4, %v3049
    %v3051 = vrot.slane %v3042, %v3050
    %v3052 = vadd.f32 %v3047, %v3051
    %v3053 = vmax.f32 %v3052, 0.0
    %v3055 = vsel %vm46, %v3053, 0
    %3057 = vmatprep.subr.mxu0 0.0
    %3058 = vmatpush1.msra.mxu0 %v88
    %3059 = vmatprep.subr.mxu0 0.0
    %3060 = vmatpush1.msra.mxu0 %v89
    %3061 = vmatprep.subr.mxu0 0.0
    %3062 = vmatpush1.msra.mxu0 %v90
    %3063 = vmatprep.subr.mxu0 0.0
    %3064 = vmatpush1.msra.mxu0 %v91
    %3065 = vmatprep.subr.mxu0 0.0
    %3066 = vmatpush1.msra.mxu0 0.0
    %3067 = vmatprep.subr.mxu0 0.0
    %3068 = vmatpush1.msra.mxu0 0.0
    %3069 = vmatprep.subr.mxu0 0.0
    %3070 = vmatpush1.msra.mxu0 0.0
    %3071 = vmatprep.subr.mxu0 0.0
    %3072 = vmatpush1.msra.mxu0 0.0
    %3073 = vmatprep.subr.mxu0 0.0
    %3074 = vmatpush1.msra.mxu0 0.0
    %3075 = vmatprep.subr.mxu0 0.0
    %3076 = vmatpush1.msra.mxu0 0.0
    %3077 = vmatprep.subr.mxu0 0.0
    %3078 = vmatpush1.msra.mxu0 0.0
    %3079 = vmatprep.subr.mxu0 0.0
    %3080 = vmatpush1.msra.mxu0 0.0
    %3081 = vmatprep.subr.mxu0 0.0
    %3082 = vmatpush1.msra.mxu0 0.0
    %3083 = vmatprep.subr.mxu0 0.0
    %3084 = vmatpush1.msra.mxu0 0.0
    %3085 = vmatprep.subr.mxu0 0.0
    %3086 = vmatpush1.msra.mxu0 0.0
    %3087 = vmatprep.subr.mxu0 0.0
    %3088 = vmatpush1.msra.mxu0 0.0
    %3089 = vmatprep.subr.mxu0 0.0
    %3090 = vmatpush1.msra.mxu0 0.0
    %3091 = vmatprep.subr.mxu0 0.0
    %3092 = vmatpush1.msra.mxu0 0.0
    %3093 = vmatprep.subr.mxu0 0.0
    %3094 = vmatpush1.msra.mxu0 0.0
    %3095 = vmatprep.subr.mxu0 0.0
    %3096 = vmatpush1.msra.mxu0 0.0
    %3097 = vmatprep.subr.mxu0 0.0
    %3098 = vmatpush1.msra.mxu0 0.0
    %3099 = vmatprep.subr.mxu0 0.0
    %3100 = vmatpush1.msra.mxu0 0.0
    %3101 = vmatprep.subr.mxu0 0.0
    %3102 = vmatpush1.msra.mxu0 0.0
    %3103 = vmatprep.subr.mxu0 0.0
    %3104 = vmatpush1.msra.mxu0 0.0
    %3105 = vmatprep.subr.mxu0 0.0
    %3106 = vmatpush1.msra.mxu0 0.0
    %3107 = vmatprep.subr.mxu0 0.0
    %3108 = vmatpush1.msra.mxu0 0.0
    %3109 = vmatprep.subr.mxu0 0.0
    %3110 = vmatpush1.msra.mxu0 0.0
    %3111 = vmatprep.subr.mxu0 0.0
    %3112 = vmatpush1.msra.mxu0 0.0
    %3113 = vmatprep.subr.mxu0 0.0
    %3114 = vmatpush1.msra.mxu0 0.0
    %3115 = vmatprep.subr.mxu0 0.0
    %3116 = vmatpush1.msra.mxu0 0.0
    %3117 = vmatprep.subr.mxu0 0.0
    %3118 = vmatpush1.msra.mxu0 0.0
    %3119 = vmatprep.subr.mxu0 0.0
    %3120 = vmatpush1.msra.mxu0 0.0
    %3121 = vmatprep.mubr.f32.mxu0 0.0
    %3122 = vmatmul.mubr.f32.gmra.mrb[0].mxu0 %v3055
    %v3123 = vpop.f32.mrb[0].mxu0
    %v3124 = vadd.f32 0.0, %v3123
    %v3125 = vpop.f32.mrb[0].mxu0
    %3126 = vdwg.mxu0
    %v3127 = vmul.f32 %v3124, %v3124
    %3129 = vrot.lane.b32.xlu0 %v3127, 32
    %v3130 = vpop.permute.xlu0 %3129
    %v3132 = vsel %vm46, %v3124, %v3130
    %v3133 = vsel %vm48, %v3132, 0.0
    %v3134 = vrot.slane %v3133, 4
    %v3135 = vadd.f32 %v3133, %v3134
    %v3136 = vrot.slane %v3135, 2
    %v3137 = vadd.f32 %v3135, %v3136
    %v3138 = vrot.slane %v3137, 1
    %v3139 = vadd.f32 %v3137, %v3138
    %v3140 = vmul.f32 %v3139, 0.125
    %v3141 = vmul.f32 %v3140, %v3140
    %3143 = vrot.lane.b32.xlu0 %v3141, 32
    %v3144 = vpop.permute.xlu0 %3143
    %v3146 = vsub.f32 %v3140, %v3144
    %v3147 = vmax.f32 %v3146, 0.0
    %v3148 = vadd.f32 %v3147, 1e-05
    %v3149 = vrsqrt.pop %v3148
    %v3151 = vrot.slane %v3149, 5
    %3152 = vrot.lane.b32.xlu0 %v3151, 96
    %v3153 = vpop.permute.xlu0 %3152
    %v3155 = vmul.f32 %v29, %v3153
    %v3156 = vmul.f32 %v3140, %v3155
    %v3158 = vrot.slane %v3156, 7
    %v3160 = vsub.f32 %v29, %v3158
    %v3161 = vlaneseq
    %v3162 = vshrl.u32 %v3161, 7
    %v3163 = vsub.s32 3, %v3162
    %v3164 = vrot.slane %v3155, %v3163
    %v3165 = vmul.f32 %v3124, %v3164
    %v3166 = vlaneseq
    %v3167 = vshrl.u32 %v3166, 7
    %v3168 = vsub.s32 4, %v3167
    %v3169 = vrot.slane %v3160, %v3168
    %v3170 = vadd.f32 %v3165, %v3169
    %v3171 = vadd.f32 %v3170, %v2935
    %v3172 = vmax.f32 %v3171, 0.0
    %v3174 = vsel %vm46, %v3172, 0
    %3176 = vmatprep.subr.mxu0 0.0
    %3177 = vmatpush1.msra.mxu0 %v88
    %3178 = vmatprep.subr.mxu0 0.0
    %3179 = vmatpush1.msra.mxu0 %v89
    %3180 = vmatprep.subr.mxu0 0.0
    %3181 = vmatpush1.msra.mxu0 %v90
    %3182 = vmatprep.subr.mxu0 0.0
    %3183 = vmatpush1.msra.mxu0 %v91
    %3184 = vmatprep.subr.mxu0 0.0
    %3185 = vmatpush1.msra.mxu0 0.0
    %3186 = vmatprep.subr.mxu0 0.0
    %3187 = vmatpush1.msra.mxu0 0.0
    %3188 = vmatprep.subr.mxu0 0.0
    %3189 = vmatpush1.msra.mxu0 0.0
    %3190 = vmatprep.subr.mxu0 0.0
    %3191 = vmatpush1.msra.mxu0 0.0
    %3192 = vmatprep.subr.mxu0 0.0
    %3193 = vmatpush1.msra.mxu0 0.0
    %3194 = vmatprep.subr.mxu0 0.0
    %3195 = vmatpush1.msra.mxu0 0.0
    %3196 = vmatprep.subr.mxu0 0.0
    %3197 = vmatpush1.msra.mxu0 0.0
    %3198 = vmatprep.subr.mxu0 0.0
    %3199 = vmatpush1.msra.mxu0 0.0
    %3200 = vmatprep.subr.mxu0 0.0
    %3201 = vmatpush1.msra.mxu0 0.0
    %3202 = vmatprep.subr.mxu0 0.0
    %3203 = vmatpush1.msra.mxu0 0.0
    %3204 = vmatprep.subr.mxu0 0.0
    %3205 = vmatpush1.msra.mxu0 0.0
    %3206 = vmatprep.subr.mxu0 0.0
    %3207 = vmatpush1.msra.mxu0 0.0
    %3208 = vmatprep.subr.mxu0 0.0
    %3209 = vmatpush1.msra.mxu0 0.0
    %3210 = vmatprep.subr.mxu0 0.0
    %3211 = vmatpush1.msra.mxu0 0.0
    %3212 = vmatprep.subr.mxu0 0.0
    %3213 = vmatpush1.msra.mxu0 0.0
    %3214 = vmatprep.subr.mxu0 0.0
    %3215 = vmatpush1.msra.mxu0 0.0
    %3216 = vmatprep.subr.mxu0 0.0
    %3217 = vmatpush1.msra.mxu0 0.0
    %3218 = vmatprep.subr.mxu0 0.0
    %3219 = vmatpush1.msra.mxu0 0.0
    %3220 = vmatprep.subr.mxu0 0.0
    %3221 = vmatpush1.msra.mxu0 0.0
    %3222 = vmatprep.subr.mxu0 0.0
    %3223 = vmatpush1.msra.mxu0 0.0
    %3224 = vmatprep.subr.mxu0 0.0
    %3225 = vmatpush1.msra.mxu0 0.0
    %3226 = vmatprep.subr.mxu0 0.0
    %3227 = vmatpush1.msra.mxu0 0.0
    %3228 = vmatprep.subr.mxu0 0.0
    %3229 = vmatpush1.msra.mxu0 0.0
    %3230 = vmatprep.subr.mxu0 0.0
    %3231 = vmatpush1.msra.mxu0 0.0
    %3232 = vmatprep.subr.mxu0 0.0
    %3233 = vmatpush1.msra.mxu0 0.0
    %3234 = vmatprep.subr.mxu0 0.0
    %3235 = vmatpush1.msra.mxu0 0.0
    %3236 = vmatprep.subr.mxu0 0.0
    %3237 = vmatpush1.msra.mxu0 0.0
    %3238 = vmatprep.subr.mxu0 0.0
    %3239 = vmatpush1.msra.mxu0 0.0
    %3240 = vmatprep.mubr.f32.mxu0 0.0
    %3241 = vmatmul.mubr.f32.gmra.mrb[0].mxu0 %v3174
    %v3242 = vpop.f32.mrb[0].mxu0
    %v3243 = vadd.f32 0.0, %v3242
    %v3244 = vpop.f32.mrb[0].mxu0
    %3245 = vdwg.mxu0
    %v3246 = vmul.f32 %v3243, %v3243
    %3248 = vrot.lane.b32.xlu0 %v3246, 32
    %v3249 = vpop.permute.xlu0 %3248
    %v3251 = vsel %vm46, %v3243, %v3249
    %v3252 = vsel %vm48, %v3251, 0.0
    %v3253 = vrot.slane %v3252, 4
    %v3254 = vadd.f32 %v3252, %v3253
    %v3255 = vrot.slane %v3254, 2
    %v3256 = vadd.f32 %v3254, %v3255
    %v3257 = vrot.slane %v3256, 1
    %v3258 = vadd.f32 %v3256, %v3257
    %v3259 = vmul.f32 %v3258, 0.125
    %v3260 = vmul.f32 %v3259, %v3259
    %3262 = vrot.lane.b32.xlu0 %v3260, 32
    %v3263 = vpop.permute.xlu0 %3262
    %v3265 = vsub.f32 %v3259, %v3263
    %v3266 = vmax.f32 %v3265, 0.0
    %v3267 = vadd.f32 %v3266, 1e-05
    %v3268 = vrsqrt.pop %v3267
    %v3270 = vrot.slane %v3268, 5
    %3271 = vrot.lane.b32.xlu0 %v3270, 96
    %v3272 = vpop.permute.xlu0 %3271
    %v3274 = vmul.f32 %v29, %v3272
    %v3275 = vmul.f32 %v3259, %v3274
    %v3277 = vrot.slane %v3275, 7
    %v3279 = vsub.f32 %v29, %v3277
    %v3280 = vlaneseq
    %v3281 = vshrl.u32 %v3280, 7
    %v3282 = vsub.s32 3, %v3281
    %v3283 = vrot.slane %v3274, %v3282
    %v3284 = vmul.f32 %v3243, %v3283
    %v3285 = vlaneseq
    %v3286 = vshrl.u32 %v3285, 7
    %v3287 = vsub.s32 4, %v3286
    %v3288 = vrot.slane %v3279, %v3287
    %v3289 = vadd.f32 %v3284, %v3288
    %v3290 = vmax.f32 %v3289, 0.0
    %v3292 = vsel %vm46, %v3290, 0
    %3294 = vmatprep.subr.mxu0 0.0
    %3295 = vmatpush1.msra.mxu0 %v88
    %3296 = vmatprep.subr.mxu0 0.0
    %3297 = vmatpush1.msra.mxu0 %v89
    %3298 = vmatprep.subr.mxu0 0.0
    %3299 = vmatpush1.msra.mxu0 %v90
    %3300 = vmatprep.subr.mxu0 0.0
    %3301 = vmatpush1.msra.mxu0 %v91
    %3302 = vmatprep.subr.mxu0 0.0
    %3303 = vmatpush1.msra.mxu0 0.0
    %3304 = vmatprep.subr.mxu0 0.0
    %3305 = vmatpush1.msra.mxu0 0.0
    %3306 = vmatprep.subr.mxu0 0.0
    %3307 = vmatpush1.msra.mxu0 0.0
    %3308 = vmatprep.subr.mxu0 0.0
    %3309 = vmatpush1.msra.mxu0 0.0
    %3310 = vmatprep.subr.mxu0 0.0
    %3311 = vmatpush1.msra.mxu0 0.0
    %3312 = vmatprep.subr.mxu0 0.0
    %3313 = vmatpush1.msra.mxu0 0.0
    %3314 = vmatprep.subr.mxu0 0.0
    %3315 = vmatpush1.msra.mxu0 0.0
    %3316 = vmatprep.subr.mxu0 0.0
    %3317 = vmatpush1.msra.mxu0 0.0
    %3318 = vmatprep.subr.mxu0 0.0
    %3319 = vmatpush1.msra.mxu0 0.0
    %3320 = vmatprep.subr.mxu0 0.0
    %3321 = vmatpush1.msra.mxu0 0.0
    %3322 = vmatprep.subr.mxu0 0.0
    %3323 = vmatpush1.msra.mxu0 0.0
    %3324 = vmatprep.subr.mxu0 0.0
    %3325 = vmatpush1.msra.mxu0 0.0
    %3326 = vmatprep.subr.mxu0 0.0
    %3327 = vmatpush1.msra.mxu0 0.0
    %3328 = vmatprep.subr.mxu0 0.0
    %3329 = vmatpush1.msra.mxu0 0.0
    %3330 = vmatprep.subr.mxu0 0.0
    %3331 = vmatpush1.msra.mxu0 0.0
    %3332 = vmatprep.subr.mxu0 0.0
    %3333 = vmatpush1.msra.mxu0 0.0
    %3334 = vmatprep.subr.mxu0 0.0
    %3335 = vmatpush1.msra.mxu0 0.0
    %3336 = vmatprep.subr.mxu0 0.0
    %3337 = vmatpush1.msra.mxu0 0.0
    %3338 = vmatprep.subr.mxu0 0.0
    %3339 = vmatpush1.msra.mxu0 0.0
    %3340 = vmatprep.subr.mxu0 0.0
    %3341 = vmatpush1.msra.mxu0 0.0
    %3342 = vmatprep.subr.mxu0 0.0
    %3343 = vmatpush1.msra.mxu0 0.0
    %3344 = vmatprep.subr.mxu0 0.0
    %3345 = vmatpush1.msra.mxu0 0.0
    %3346 = vmatprep.subr.mxu0 0.0
    %3347 = vmatpush1.msra.mxu0 0.0
    %3348 = vmatprep.subr.mxu0 0.0
    %3349 = vmatpush1.msra.mxu0 0.0
    %3350 = vmatprep.subr.mxu0 0.0
    %3351 = vmatpush1.msra.mxu0 0.0
    %3352 = vmatprep.subr.mxu0 0.0
    %3353 = vmatpush1.msra.mxu0 0.0
    %3354 = vmatprep.subr.mxu0 0.0
    %3355 = vmatpush1.msra.mxu0 0.0
    %3356 = vmatprep.subr.mxu0 0.0
    %3357 = vmatpush1.msra.mxu0 0.0
    %3358 = vmatprep.mubr.f32.mxu0 0.0
    %3359 = vmatmul.mubr.f32.gmra.mrb[0].mxu0 %v3292
    %v3360 = vpop.f32.mrb[0].mxu0
    %v3361 = vadd.f32 0.0, %v3360
    %v3362 = vpop.f32.mrb[0].mxu0
    %3363 = vdwg.mxu0
    %v3364 = vmul.f32 %v3361, %v3361
    %3366 = vrot.lane.b32.xlu0 %v3364, 32
    %v3367 = vpop.permute.xlu0 %3366
    %v3369 = vsel %vm46, %v3361, %v3367
    %v3370 = vsel %vm48, %v3369, 0.0
    %v3371 = vrot.slane %v3370, 4
    %v3372 = vadd.f32 %v3370, %v3371
    %v3373 = vrot.slane %v3372, 2
    %v3374 = vadd.f32 %v3372, %v3373
    %v3375 = vrot.slane %v3374, 1
    %v3376 = vadd.f32 %v3374, %v3375
    %v3377 = vmul.f32 %v3376, 0.125
    %v3378 = vmul.f32 %v3377, %v3377
    %3380 = vrot.lane.b32.xlu0 %v3378, 32
    %v3381 = vpop.permute.xlu0 %3380
    %v3383 = vsub.f32 %v3377, %v3381
    %v3384 = vmax.f32 %v3383, 0.0
    %v3385 = vadd.f32 %v3384, 1e-05
    %v3386 = vrsqrt.pop %v3385
    %v3388 = vrot.slane %v3386, 5
    %3389 = vrot.lane.b32.xlu0 %v3388, 96
    %v3390 = vpop.permute.xlu0 %3389
    %v3392 = vmul.f32 %v29, %v3390
    %v3393 = vmul.f32 %v3377, %v3392
    %v3395 = vrot.slane %v3393, 7
    %v3397 = vsub.f32 %v29, %v3395
    %v3398 = vlaneseq
    %v3399 = vshrl.u32 %v3398, 7
    %v3400 = vsub.s32 3, %v3399
    %v3401 = vrot.slane %v3392, %v3400
    %v3402 = vmul.f32 %v3361, %v3401
    %v3403 = vlaneseq
    %v3404 = vshrl.u32 %v3403, 7
    %v3405 = vsub.s32 4, %v3404
    %v3406 = vrot.slane %v3397, %v3405
    %v3407 = vadd.f32 %v3402, %v3406
    %v3408 = vadd.f32 %v3407, %v3172
    %v3409 = vmax.f32 %v3408, 0.0
    %v3411 = vsel %vm46, %v3409, 0
    %3413 = vmatprep.subr.mxu0 0.0
    %3414 = vmatpush1.msra.mxu0 %v88
    %3415 = vmatprep.subr.mxu0 0.0
    %3416 = vmatpush1.msra.mxu0 %v89
    %3417 = vmatprep.subr.mxu0 0.0
    %3418 = vmatpush1.msra.mxu0 %v90
    %3419 = vmatprep.subr.mxu0 0.0
    %3420 = vmatpush1.msra.mxu0 %v91
    %3421 = vmatprep.subr.mxu0 0.0
    %3422 = vmatpush1.msra.mxu0 0.0
    %3423 = vmatprep.subr.mxu0 0.0
    %3424 = vmatpush1.msra.mxu0 0.0
    %3425 = vmatprep.subr.mxu0 0.0
    %3426 = vmatpush1.msra.mxu0 0.0
    %3427 = vmatprep.subr.mxu0 0.0
    %3428 = vmatpush1.msra.mxu0 0.0
    %3429 = vmatprep.subr.mxu0 0.0
    %3430 = vmatpush1.msra.mxu0 0.0
    %3431 = vmatprep.subr.mxu0 0.0
    %3432 = vmatpush1.msra.mxu0 0.0
    %3433 = vmatprep.subr.mxu0 0.0
    %3434 = vmatpush1.msra.mxu0 0.0
    %3435 = vmatprep.subr.mxu0 0.0
    %3436 = vmatpush1.msra.mxu0 0.0
    %3437 = vmatprep.subr.mxu0 0.0
    %3438 = vmatpush1.msra.mxu0 0.0
    %3439 = vmatprep.subr.mxu0 0.0
    %3440 = vmatpush1.msra.mxu0 0.0
    %3441 = vmatprep.subr.mxu0 0.0
    %3442 = vmatpush1.msra.mxu0 0.0
    %3443 = vmatprep.subr.mxu0 0.0
    %3444 = vmatpush1.msra.mxu0 0.0
    %3445 = vmatprep.subr.mxu0 0.0
    %3446 = vmatpush1.msra.mxu0 0.0
    %3447 = vmatprep.subr.mxu0 0.0
    %3448 = vmatpush1.msra.mxu0 0.0
    %3449 = vmatprep.subr.mxu0 0.0
    %3450 = vmatpush1.msra.mxu0 0.0
    %3451 = vmatprep.subr.mxu0 0.0
    %3452 = vmatpush1.msra.mxu0 0.0
    %3453 = vmatprep.subr.mxu0 0.0
    %3454 = vmatpush1.msra.mxu0 0.0
    %3455 = vmatprep.subr.mxu0 0.0
    %3456 = vmatpush1.msra.mxu0 0.0
    %3457 = vmatprep.subr.mxu0 0.0
    %3458 = vmatpush1.msra.mxu0 0.0
    %3459 = vmatprep.subr.mxu0 0.0
    %3460 = vmatpush1.msra.mxu0 0.0
    %3461 = vmatprep.subr.mxu0 0.0
    %3462 = vmatpush1.msra.mxu0 0.0
    %3463 = vmatprep.subr.mxu0 0.0
    %3464 = vmatpush1.msra.mxu0 0.0
    %3465 = vmatprep.subr.mxu0 0.0
    %3466 = vmatpush1.msra.mxu0 0.0
    %3467 = vmatprep.subr.mxu0 0.0
    %3468 = vmatpush1.msra.mxu0 0.0
    %3469 = vmatprep.subr.mxu0 0.0
    %3470 = vmatpush1.msra.mxu0 0.0
    %3471 = vmatprep.subr.mxu0 0.0
    %3472 = vmatpush1.msra.mxu0 0.0
    %3473 = vmatprep.subr.mxu0 0.0
    %3474 = vmatpush1.msra.mxu0 0.0
    %3475 = vmatprep.subr.mxu0 0.0
    %3476 = vmatpush1.msra.mxu0 0.0
    %3477 = vmatprep.mubr.f32.mxu0 0.0
    %3478 = vmatmul.mubr.f32.gmra.mrb[0].mxu0 %v3411
    %v3479 = vpop.f32.mrb[0].mxu0
    %v3480 = vadd.f32 0.0, %v3479
    %v3481 = vpop.f32.mrb[0].mxu0
    %3482 = vdwg.mxu0
    %v3483 = vmul.f32 %v3480, %v3480
    %3485 = vrot.lane.b32.xlu0 %v3483, 32
    %v3486 = vpop.permute.xlu0 %3485
    %v3488 = vsel %vm46, %v3480, %v3486
    %v3489 = vsel %vm48, %v3488, 0.0
    %v3490 = vrot.slane %v3489, 4
    %v3491 = vadd.f32 %v3489, %v3490
    %v3492 = vrot.slane %v3491, 2
    %v3493 = vadd.f32 %v3491, %v3492
    %v3494 = vrot.slane %v3493, 1
    %v3495 = vadd.f32 %v3493, %v3494
    %v3496 = vmul.f32 %v3495, 0.125
    %v3497 = vmul.f32 %v3496, %v3496
    %3499 = vrot.lane.b32.xlu0 %v3497, 32
    %v3500 = vpop.permute.xlu0 %3499
    %v3502 = vsub.f32 %v3496, %v3500
    %v3503 = vmax.f32 %v3502, 0.0
    %v3504 = vadd.f32 %v3503, 1e-05
    %v3505 = vrsqrt.pop %v3504
    %v3507 = vrot.slane %v3505, 5
    %3508 = vrot.lane.b32.xlu0 %v3507, 96
    %v3509 = vpop.permute.xlu0 %3508
    %v3511 = vmul.f32 %v29, %v3509
    %v3512 = vmul.f32 %v3496, %v3511
    %v3514 = vrot.slane %v3512, 7
    %v3516 = vsub.f32 %v29, %v3514
    %v3517 = vlaneseq
    %v3518 = vshrl.u32 %v3517, 7
    %v3519 = vsub.s32 3, %v3518
    %v3520 = vrot.slane %v3511, %v3519
    %v3521 = vmul.f32 %v3480, %v3520
    %v3522 = vlaneseq
    %v3523 = vshrl.u32 %v3522, 7
    %v3524 = vsub.s32 4, %v3523
    %v3525 = vrot.slane %v3516, %v3524
    %v3526 = vadd.f32 %v3521, %v3525
    %v3527 = vmax.f32 %v3526, 0.0
    %v3529 = vsel %vm46, %v3527, 0
    %3531 = vmatprep.subr.mxu0 0.0
    %3532 = vmatpush1.msra.mxu0 %v88
    %3533 = vmatprep.subr.mxu0 0.0
    %3534 = vmatpush1.msra.mxu0 %v89
    %3535 = vmatprep.subr.mxu0 0.0
    %3536 = vmatpush1.msra.mxu0 %v90
    %3537 = vmatprep.subr.mxu0 0.0
    %3538 = vmatpush1.msra.mxu0 %v91
    %3539 = vmatprep.subr.mxu0 0.0
    %3540 = vmatpush1.msra.mxu0 0.0
    %3541 = vmatprep.subr.mxu0 0.0
    %3542 = vmatpush1.msra.mxu0 0.0
    %3543 = vmatprep.subr.mxu0 0.0
    %3544 = vmatpush1.msra.mxu0 0.0
    %3545 = vmatprep.subr.mxu0 0.0
    %3546 = vmatpush1.msra.mxu0 0.0
    %3547 = vmatprep.subr.mxu0 0.0
    %3548 = vmatpush1.msra.mxu0 0.0
    %3549 = vmatprep.subr.mxu0 0.0
    %3550 = vmatpush1.msra.mxu0 0.0
    %3551 = vmatprep.subr.mxu0 0.0
    %3552 = vmatpush1.msra.mxu0 0.0
    %3553 = vmatprep.subr.mxu0 0.0
    %3554 = vmatpush1.msra.mxu0 0.0
    %3555 = vmatprep.subr.mxu0 0.0
    %3556 = vmatpush1.msra.mxu0 0.0
    %3557 = vmatprep.subr.mxu0 0.0
    %3558 = vmatpush1.msra.mxu0 0.0
    %3559 = vmatprep.subr.mxu0 0.0
    %3560 = vmatpush1.msra.mxu0 0.0
    %3561 = vmatprep.subr.mxu0 0.0
    %3562 = vmatpush1.msra.mxu0 0.0
    %3563 = vmatprep.subr.mxu0 0.0
    %3564 = vmatpush1.msra.mxu0 0.0
    %3565 = vmatprep.subr.mxu0 0.0
    %3566 = vmatpush1.msra.mxu0 0.0
    %3567 = vmatprep.subr.mxu0 0.0
    %3568 = vmatpush1.msra.mxu0 0.0
    %3569 = vmatprep.subr.mxu0 0.0
    %3570 = vmatpush1.msra.mxu0 0.0
    %3571 = vmatprep.subr.mxu0 0.0
    %3572 = vmatpush1.msra.mxu0 0.0
    %3573 = vmatprep.subr.mxu0 0.0
    %3574 = vmatpush1.msra.mxu0 0.0
    %3575 = vmatprep.subr.mxu0 0.0
    %3576 = vmatpush1.msra.mxu0 0.0
    %3577 = vmatprep.subr.mxu0 0.0
    %3578 = vmatpush1.msra.mxu0 0.0
    %3579 = vmatprep.subr.mxu0 0.0
    %3580 = vmatpush1.msra.mxu0 0.0
    %3581 = vmatprep.subr.mxu0 0.0
    %3582 = vmatpush1.msra.mxu0 0.0
    %3583 = vmatprep.subr.mxu0 0.0
    %3584 = vmatpush1.msra.mxu0 0.0
    %3585 = vmatprep.subr.mxu0 0.0
    %3586 = vmatpush1.msra.mxu0 0.0
    %3587 = vmatprep.subr.mxu0 0.0
    %3588 = vmatpush1.msra.mxu0 0.0
    %3589 = vmatprep.subr.mxu0 0.0
    %3590 = vmatpush1.msra.mxu0 0.0
    %3591 = vmatprep.subr.mxu0 0.0
    %3592 = vmatpush1.msra.mxu0 0.0
    %3593 = vmatprep.subr.mxu0 0.0
    %3594 = vmatpush1.msra.mxu0 0.0
    %3595 = vmatprep.mubr.f32.mxu0 0.0
    %3596 = vmatmul.mubr.f32.gmra.mrb[0].mxu0 %v3529
    %v3597 = vpop.f32.mrb[0].mxu0
    %v3598 = vadd.f32 0.0, %v3597
    %v3599 = vpop.f32.mrb[0].mxu0
    %3600 = vdwg.mxu0
    %v3601 = vmul.f32 %v3598, %v3598
    %3603 = vrot.lane.b32.xlu0 %v3601, 32
    %v3604 = vpop.permute.xlu0 %3603
    %v3606 = vsel %vm46, %v3598, %v3604
    %v3607 = vsel %vm48, %v3606, 0.0
    %v3608 = vrot.slane %v3607, 4
    %v3609 = vadd.f32 %v3607, %v3608
    %v3610 = vrot.slane %v3609, 2
    %v3611 = vadd.f32 %v3609, %v3610
    %v3612 = vrot.slane %v3611, 1
    %v3613 = vadd.f32 %v3611, %v3612
    %v3614 = vmul.f32 %v3613, 0.125
    %v3615 = vmul.f32 %v3614, %v3614
    %3617 = vrot.lane.b32.xlu0 %v3615, 32
    %v3618 = vpop.permute.xlu0 %3617
    %v3620 = vsub.f32 %v3614, %v3618
    %v3621 = vmax.f32 %v3620, 0.0
    %v3622 = vadd.f32 %v3621, 1e-05
    %v3623 = vrsqrt.pop %v3622
    %v3625 = vrot.slane %v3623, 5
    %3626 = vrot.lane.b32.xlu0 %v3625, 96
    %v3627 = vpop.permute.xlu0 %3626
    %v3629 = vmul.f32 %v29, %v3627
    %v3630 = vmul.f32 %v3614, %v3629
    %v3632 = vrot.slane %v3630, 7
    %v3634 = vsub.f32 %v29, %v3632
    %v3635 = vlaneseq
    %v3636 = vshrl.u32 %v3635, 7
    %v3637 = vsub.s32 3, %v3636
    %v3638 = vrot.slane %v3629, %v3637
    %v3639 = vmul.f32 %v3598, %v3638
    %v3640 = vlaneseq
    %v3641 = vshrl.u32 %v3640, 7
    %v3642 = vsub.s32 4, %v3641
    %v3643 = vrot.slane %v3634, %v3642
    %v3644 = vadd.f32 %v3639, %v3643
    %v3645 = vadd.f32 %v3644, %v3409
    %v3646 = vmax.f32 %v3645, 0.0
    %v3648 = vsel %vm46, %v3646, 0
    %3650 = vmatprep.subr.mxu0 0.0
    %3651 = vmatpush1.msra.mxu0 %v88
    %3652 = vmatprep.subr.mxu0 0.0
    %3653 = vmatpush1.msra.mxu0 %v89
    %3654 = vmatprep.subr.mxu0 0.0
    %3655 = vmatpush1.msra.mxu0 %v90
    %3656 = vmatprep.subr.mxu0 0.0
    %3657 = vmatpush1.msra.mxu0 %v91
    %3658 = vmatprep.subr.mxu0 0.0
    %3659 = vmatpush1.msra.mxu0 0.0
    %3660 = vmatprep.subr.mxu0 0.0
    %3661 = vmatpush1.msra.mxu0 0.0
    %3662 = vmatprep.subr.mxu0 0.0
    %3663 = vmatpush1.msra.mxu0 0.0
    %3664 = vmatprep.subr.mxu0 0.0
    %3665 = vmatpush1.msra.mxu0 0.0
    %3666 = vmatprep.subr.mxu0 0.0
    %3667 = vmatpush1.msra.mxu0 0.0
    %3668 = vmatprep.subr.mxu0 0.0
    %3669 = vmatpush1.msra.mxu0 0.0
    %3670 = vmatprep.subr.mxu0 0.0
    %3671 = vmatpush1.msra.mxu0 0.0
    %3672 = vmatprep.subr.mxu0 0.0
    %3673 = vmatpush1.msra.mxu0 0.0
    %3674 = vmatprep.subr.mxu0 0.0
    %3675 = vmatpush1.msra.mxu0 0.0
    %3676 = vmatprep.subr.mxu0 0.0
    %3677 = vmatpush1.msra.mxu0 0.0
    %3678 = vmatprep.subr.mxu0 0.0
    %3679 = vmatpush1.msra.mxu0 0.0
    %3680 = vmatprep.subr.mxu0 0.0
    %3681 = vmatpush1.msra.mxu0 0.0
    %3682 = vmatprep.subr.mxu0 0.0
    %3683 = vmatpush1.msra.mxu0 0.0
    %3684 = vmatprep.subr.mxu0 0.0
    %3685 = vmatpush1.msra.mxu0 0.0
    %3686 = vmatprep.subr.mxu0 0.0
    %3687 = vmatpush1.msra.mxu0 0.0
    %3688 = vmatprep.subr.mxu0 0.0
    %3689 = vmatpush1.msra.mxu0 0.0
    %3690 = vmatprep.subr.mxu0 0.0
    %3691 = vmatpush1.msra.mxu0 0.0
    %3692 = vmatprep.subr.mxu0 0.0
    %3693 = vmatpush1.msra.mxu0 0.0
    %3694 = vmatprep.subr.mxu0 0.0
    %3695 = vmatpush1.msra.mxu0 0.0
    %3696 = vmatprep.subr.mxu0 0.0
    %3697 = vmatpush1.msra.mxu0 0.0
    %3698 = vmatprep.subr.mxu0 0.0
    %3699 = vmatpush1.msra.mxu0 0.0
    %3700 = vmatprep.subr.mxu0 0.0
    %3701 = vmatpush1.msra.mxu0 0.0
    %3702 = vmatprep.subr.mxu0 0.0
    %3703 = vmatpush1.msra.mxu0 0.0
    %3704 = vmatprep.subr.mxu0 0.0
    %3705 = vmatpush1.msra.mxu0 0.0
    %3706 = vmatprep.subr.mxu0 0.0
    %3707 = vmatpush1.msra.mxu0 0.0
    %3708 = vmatprep.subr.mxu0 0.0
    %3709 = vmatpush1.msra.mxu0 0.0
    %3710 = vmatprep.subr.mxu0 0.0
    %3711 = vmatpush1.msra.mxu0 0.0
    %3712 = vmatprep.subr.mxu0 0.0
    %3713 = vmatpush1.msra.mxu0 0.0
    %3714 = vmatprep.mubr.f32.mxu0 0.0
    %3715 = vmatmul.mubr.f32.gmra.mrb[0].mxu0 %v3648
    %v3716 = vpop.f32.mrb[0].mxu0
    %v3717 = vadd.f32 0.0, %v3716
    %v3718 = vpop.f32.mrb[0].mxu0
    %3719 = vdwg.mxu0
    %v3720 = vmul.f32 %v3717, %v3717
    %3722 = vrot.lane.b32.xlu0 %v3720, 32
    %v3723 = vpop.permute.xlu0 %3722
    %v3725 = vsel %vm46, %v3717, %v3723
    %v3726 = vsel %vm48, %v3725, 0.0
    %v3727 = vrot.slane %v3726, 4
    %v3728 = vadd.f32 %v3726, %v3727
    %v3729 = vrot.slane %v3728, 2
    %v3730 = vadd.f32 %v3728, %v3729
    %v3731 = vrot.slane %v3730, 1
    %v3732 = vadd.f32 %v3730, %v3731
    %v3733 = vmul.f32 %v3732, 0.125
    %v3734 = vmul.f32 %v3733, %v3733
    %3736 = vrot.lane.b32.xlu0 %v3734, 32
    %v3737 = vpop.permute.xlu0 %3736
    %v3739 = vsub.f32 %v3733, %v3737
    %v3740 = vmax.f32 %v3739, 0.0
    %v3741 = vadd.f32 %v3740, 1e-05
    %v3742 = vrsqrt.pop %v3741
    %v3744 = vrot.slane %v3742, 5
    %3745 = vrot.lane.b32.xlu0 %v3744, 96
    %v3746 = vpop.permute.xlu0 %3745
    %v3748 = vmul.f32 %v29, %v3746
    %v3749 = vmul.f32 %v3733, %v3748
    %v3751 = vrot.slane %v3749, 7
    %v3753 = vsub.f32 %v29, %v3751
    %v3754 = vlaneseq
    %v3755 = vshrl.u32 %v3754, 7
    %v3756 = vsub.s32 3, %v3755
    %v3757 = vrot.slane %v3748, %v3756
    %v3758 = vmul.f32 %v3717, %v3757
    %v3759 = vlaneseq
    %v3760 = vshrl.u32 %v3759, 7
    %v3761 = vsub.s32 4, %v3760
    %v3762 = vrot.slane %v3753, %v3761
    %v3763 = vadd.f32 %v3758, %v3762
    %v3764 = vmax.f32 %v3763, 0.0
    %v3766 = vsel %vm46, %v3764, 0
    %3768 = vmatprep.subr.mxu0 0.0
    %3769 = vmatpush1.msra.mxu0 %v88
    %3770 = vmatprep.subr.mxu0 0.0
    %3771 = vmatpush1.msra.mxu0 %v89
    %3772 = vmatprep.subr.mxu0 0.0
    %3773 = vmatpush1.msra.mxu0 %v90
    %3774 = vmatprep.subr.mxu0 0.0
    %3775 = vmatpush1.msra.mxu0 %v91
    %3776 = vmatprep.subr.mxu0 0.0
    %3777 = vmatpush1.msra.mxu0 0.0
    %3778 = vmatprep.subr.mxu0 0.0
    %3779 = vmatpush1.msra.mxu0 0.0
    %3780 = vmatprep.subr.mxu0 0.0
    %3781 = vmatpush1.msra.mxu0 0.0
    %3782 = vmatprep.subr.mxu0 0.0
    %3783 = vmatpush1.msra.mxu0 0.0
    %3784 = vmatprep.subr.mxu0 0.0
    %3785 = vmatpush1.msra.mxu0 0.0
    %3786 = vmatprep.subr.mxu0 0.0
    %3787 = vmatpush1.msra.mxu0 0.0
    %3788 = vmatprep.subr.mxu0 0.0
    %3789 = vmatpush1.msra.mxu0 0.0
    %3790 = vmatprep.subr.mxu0 0.0
    %3791 = vmatpush1.msra.mxu0 0.0
    %3792 = vmatprep.subr.mxu0 0.0
    %3793 = vmatpush1.msra.mxu0 0.0
    %3794 = vmatprep.subr.mxu0 0.0
    %3795 = vmatpush1.msra.mxu0 0.0
    %3796 = vmatprep.subr.mxu0 0.0
    %3797 = vmatpush1.msra.mxu0 0.0
    %3798 = vmatprep.subr.mxu0 0.0
    %3799 = vmatpush1.msra.mxu0 0.0
    %3800 = vmatprep.subr.mxu0 0.0
    %3801 = vmatpush1.msra.mxu0 0.0
    %3802 = vmatprep.subr.mxu0 0.0
    %3803 = vmatpush1.msra.mxu0 0.0
    %3804 = vmatprep.subr.mxu0 0.0
    %3805 = vmatpush1.msra.mxu0 0.0
    %3806 = vmatprep.subr.mxu0 0.0
    %3807 = vmatpush1.msra.mxu0 0.0
    %3808 = vmatprep.subr.mxu0 0.0
    %3809 = vmatpush1.msra.mxu0 0.0
    %3810 = vmatprep.subr.mxu0 0.0
    %3811 = vmatpush1.msra.mxu0 0.0
    %3812 = vmatprep.subr.mxu0 0.0
    %3813 = vmatpush1.msra.mxu0 0.0
    %3814 = vmatprep.subr.mxu0 0.0
    %3815 = vmatpush1.msra.mxu0 0.0
    %3816 = vmatprep.subr.mxu0 0.0
    %3817 = vmatpush1.msra.mxu0 0.0
    %3818 = vmatprep.subr.mxu0 0.0
    %3819 = vmatpush1.msra.mxu0 0.0
    %3820 = vmatprep.subr.mxu0 0.0
    %3821 = vmatpush1.msra.mxu0 0.0
    %3822 = vmatprep.subr.mxu0 0.0
    %3823 = vmatpush1.msra.mxu0 0.0
    %3824 = vmatprep.subr.mxu0 0.0
    %3825 = vmatpush1.msra.mxu0 0.0
    %3826 = vmatprep.subr.mxu0 0.0
    %3827 = vmatpush1.msra.mxu0 0.0
    %3828 = vmatprep.subr.mxu0 0.0
    %3829 = vmatpush1.msra.mxu0 0.0
    %3830 = vmatprep.subr.mxu0 0.0
    %3831 = vmatpush1.msra.mxu0 0.0
    %3832 = vmatprep.mubr.f32.mxu0 0.0
    %3833 = vmatmul.mubr.f32.gmra.mrb[0].mxu0 %v3766
    %v3834 = vpop.f32.mrb[0].mxu0
    %v3835 = vadd.f32 0.0, %v3834
    %v3836 = vpop.f32.mrb[0].mxu0
    %3837 = vdwg.mxu0
    %v3838 = vmul.f32 %v3835, %v3835
    %3840 = vrot.lane.b32.xlu0 %v3838, 32
    %v3841 = vpop.permute.xlu0 %3840
    %v3843 = vsel %vm46, %v3835, %v3841
    %v3844 = vsel %vm48, %v3843, 0.0
    %v3845 = vrot.slane %v3844, 4
    %v3846 = vadd.f32 %v3844, %v3845
    %v3847 = vrot.slane %v3846, 2
    %v3848 = vadd.f32 %v3846, %v3847
    %v3849 = vrot.slane %v3848, 1
    %v3850 = vadd.f32 %v3848, %v3849
    %v3851 = vmul.f32 %v3850, 0.125
    %v3852 = vmul.f32 %v3851, %v3851
    %3854 = vrot.lane.b32.xlu0 %v3852, 32
    %v3855 = vpop.permute.xlu0 %3854
    %v3857 = vsub.f32 %v3851, %v3855
    %v3858 = vmax.f32 %v3857, 0.0
    %v3859 = vadd.f32 %v3858, 1e-05
    %v3860 = vrsqrt.pop %v3859
    %v3862 = vrot.slane %v3860, 5
    %3863 = vrot.lane.b32.xlu0 %v3862, 96
    %v3864 = vpop.permute.xlu0 %3863
    %v3866 = vmul.f32 %v29, %v3864
    %v3867 = vmul.f32 %v3851, %v3866
    %v3869 = vrot.slane %v3867, 7
    %v3871 = vsub.f32 %v29, %v3869
    %v3872 = vlaneseq
    %v3873 = vshrl.u32 %v3872, 7
    %v3874 = vsub.s32 3, %v3873
    %v3875 = vrot.slane %v3866, %v3874
    %v3876 = vmul.f32 %v3835, %v3875
    %v3877 = vlaneseq
    %v3878 = vshrl.u32 %v3877, 7
    %v3879 = vsub.s32 4, %v3878
    %v3880 = vrot.slane %v3871, %v3879
    %v3881 = vadd.f32 %v3876, %v3880
    %v3882 = vadd.f32 %v3881, %v3646
    %v3883 = vmax.f32 %v3882, 0.0
    %v3885 = vrot.slane %v29, 5
    %v3887 = vsel %vm46, %v3883, 0
    %v3889 = vsel %vm46, %v3885, 0
    %3891 = vmatprep.subr.mxu0 0.0
    %3892 = vmatpush1.xpose.msra.mxu0 %v3889
    %3893 = vmatprep.subr.mxu0 0.0
    %3894 = vmatpush1.xpose.msra.mxu0 0.0
    %3895 = vmatprep.subr.mxu0 0.0
    %3896 = vmatpush1.xpose.msra.mxu0 0.0
    %3897 = vmatprep.subr.mxu0 0.0
    %3898 = vmatpush1.xpose.msra.mxu0 0.0
    %3899 = vmatprep.subr.mxu0 0.0
    %3900 = vmatpush1.xpose.msra.mxu0 0.0
    %3901 = vmatprep.subr.mxu0 0.0
    %3902 = vmatpush1.xpose.msra.mxu0 0.0
    %3903 = vmatprep.subr.mxu0 0.0
    %3904 = vmatpush1.xpose.msra.mxu0 0.0
    %3905 = vmatprep.subr.mxu0 0.0
    %3906 = vmatpush1.xpose.msra.mxu0 0.0
    %3907 = vmatprep.subr.mxu0 0.0
    %3908 = vmatpush1.xpose.msra.mxu0 0.0
    %3909 = vmatprep.subr.mxu0 0.0
    %3910 = vmatpush1.xpose.msra.mxu0 0.0
    %3911 = vmatprep.subr.mxu0 0.0
    %3912 = vmatpush1.xpose.msra.mxu0 0.0
    %3913 = vmatprep.subr.mxu0 0.0
    %3914 = vmatpush1.xpose.msra.mxu0 0.0
    %3915 = vmatprep.subr.mxu0 0.0
    %3916 = vmatpush1.xpose.msra.mxu0 0.0
    %3917 = vmatprep.subr.mxu0 0.0
    %3918 = vmatpush1.xpose.msra.mxu0 0.0
    %3919 = vmatprep.subr.mxu0 0.0
    %3920 = vmatpush1.xpose.msra.mxu0 0.0
    %3921 = vmatprep.subr.mxu0 0.0
    %3922 = vmatpush1.xpose.msra.mxu0 0.0
    %3923 = vmatprep.subr.mxu0 0.0
    %3924 = vmatpush1.xpose.msra.mxu0 0.0
    %3925 = vmatprep.subr.mxu0 0.0
    %3926 = vmatpush1.xpose.msra.mxu0 0.0
    %3927 = vmatprep.subr.mxu0 0.0
    %3928 = vmatpush1.xpose.msra.mxu0 0.0
    %3929 = vmatprep.subr.mxu0 0.0
    %3930 = vmatpush1.xpose.msra.mxu0 0.0
    %3931 = vmatprep.subr.mxu0 0.0
    %3932 = vmatpush1.xpose.msra.mxu0 0.0
    %3933 = vmatprep.subr.mxu0 0.0
    %3934 = vmatpush1.xpose.msra.mxu0 0.0
    %3935 = vmatprep.subr.mxu0 0.0
    %3936 = vmatpush1.xpose.msra.mxu0 0.0
    %3937 = vmatprep.subr.mxu0 0.0
    %3938 = vmatpush1.xpose.msra.mxu0 0.0
    %3939 = vmatprep.subr.mxu0 0.0
    %3940 = vmatpush1.xpose.msra.mxu0 0.0
    %3941 = vmatprep.subr.mxu0 0.0
    %3942 = vmatpush1.xpose.msra.mxu0 0.0
    %3943 = vmatprep.subr.mxu0 0.0
    %3944 = vmatpush1.xpose.msra.mxu0 0.0
    %3945 = vmatprep.subr.mxu0 0.0
    %3946 = vmatpush1.xpose.msra.mxu0 0.0
    %3947 = vmatprep.subr.mxu0 0.0
    %3948 = vmatpush1.xpose.msra.mxu0 0.0
    %3949 = vmatprep.subr.mxu0 0.0
    %3950 = vmatpush1.xpose.msra.mxu0 0.0
    %3951 = vmatprep.subr.mxu0 0.0
    %3952 = vmatpush1.xpose.msra.mxu0 0.0
    %3953 = vmatprep.subr.mxu0 0.0
    %3954 = vmatpush1.xpose.msra.mxu0 0.0
    %3955 = vmatprep.mubr.f32.mxu0 0.0
    %3956 = vmatmul.mubr.f32.gmra.mrb[0].mxu0 %v3887
    %v3957 = vpop.f32.mrb[0].mxu0
    %v3958 = vadd.f32 0.0, %v3957
    %v3959 = vpop.f32.mrb[0].mxu0
    %3960 = vdwg.mxu0
    %v3961 = vlaneseq
    %v3962 = vshrl.u32 %v3961, 7
    %v3963 = vsub.s32 0, %v3962
    %v3964 = vrot.slane %v30, %v3963
    %v3965 = vadd.f32 %v3958, %v3964
    %v3966 = vmax.f32 %v3965, 0.0
    %3968 = vset.pattern.permute.xlu0 0
    %3969 = vperm.xlu0 %3968, %v3966
    %v3970 = vpop.permute.xlu0 %3969
    %v3972 = vlaneseq
    %v3973 = vshrl.u32 %v3972, 7
    %v3974 = vsub.s32 2, %v3973
    %v3975 = vrot.slane %v30, %v3974
    %v3976 = vmul.f32 %v3970, %v3975
    %3977 = vset.pattern.permute.xlu0 1
    %3978 = vperm.xlu0 %3977, %v3966
    %v3979 = vpop.permute.xlu0 %3978
    %v3981 = vlaneseq
    %v3982 = vshrl.u32 %v3981, 7
    %v3983 = vsub.s32 3, %v3982
    %v3984 = vrot.slane %v30, %v3983
    %v3985 = vmul.f32 %v3979, %v3984
    %v3986 = vadd.f32 %v3976, %v3985
    %v3987 = vlaneseq
    %v3988 = vshrl.u32 %v3987, 7
    %v3989 = vsub.s32 1, %v3988
    %v3990 = vrot.slane %v30, %v3989
    %v3991 = vadd.f32 %v3986, %v3990
    %vm3992 = vcmask 72704
    %v3993 = vsel %vm3992, %v3991, -inf
    %3994 = vmax.xlane.f32.xlu0 %v3993
    %v3995 = vpop.xlane.xlu0 %3994
    %v3996 = vsub.f32 %v3991, %v3995
    %v3997 = vmul.f32 %v3996, 1.442695
    %v3998 = vpow.pop %v3997
    %v3999 = vsel %vm3992, %v3998, 0.0
    %4000 = vadd.xlane.f32.xlu0 %v3999
    %v4001 = vpop.xlane.xlu0 %4000
    %v4002 = vrcp.pop %v4001
    %v4003 = vmul.f32 %v3998, %v4002
    %4005 = vrot.lane.b32.xlu0 %v3964, 127
    %v4006 = vpop.permute.xlu0 %4005
    %v4008 = vmul.f32 %v3966, %v4006
    %4009 = vrot.lane.b32.xlu0 %v3964, 126
    %v4010 = vpop.permute.xlu0 %4009
    %v4012 = vadd.f32 %v4008, %v4010
    %v4013 = vtanh.pop %v4012
    %4015 = vrot.lane.b32.xlu0 %v4013, 7
    %v4016 = vpop.permute.xlu0 %4015
    %v4018 = vsel %vm3992, %v4003, %v4016
    %vm4019 = vcmask 80896
    %v4020 = vsel %vm4019, %v4018, 0.0
    %4021 = vst [vmem:[%s3] sm:$0xff] %v4020
    // Predicated region
    $region18: #{net_forward.1} parent=1 // pred_check
      _
    $region19: #{net_forward.1} parent=1 // pred_check_branch
      %4023 = sbr.rel (0) target = $region21
    $region20: #{net_forward.1} parent=1 // pred_region
      _
    $region21: #{net_forward.1} parent=1 // pred_fallthru
      _
    // Predicated region
    $region22: #{net_forward.1} parent=1 // pred_check
      _
    $region23: #{net_forward.1} parent=1 // pred_check_branch
      %4025 = sbr.rel (0) target = $region25
    $region24: #{net_forward.1} parent=1 // pred_region
      _
    $region25: #{net_forward.1} parent=1 // pred_fallthru
      _
    %4026 = vsyncpa [#allocation3], 1

</llo_original>
